<compile_context>
chip_gen: v6e
topology: v6e:2x2x1
jax: 0.10.0
libtpu: 0.0.40
codegen_flags: <defaults>
</compile_context>

<pallas_src>
import functools
import math

import jax
import jax.numpy as jnp
from jax import lax
from jax.experimental import pallas as pl
from jax.experimental.pallas import tpu as pltpu


# ----------------------------------------------------------------------------
# Fused kernel: multi-layer GRU over a time chunk + Linear + sigmoid + masking
# ----------------------------------------------------------------------------
def _gru_kernel(num_layers, hidden_size, blend_inputs, unroll, *refs):
    # flat input/mask/orig/out blocks: (Bh, tblk*C).   h0/hout: (L, Bh, H).
    # wih0: (C, 3H)  wihr: (max(L-1,1), H, 3H)  whh: (L, H, 3H)
    # b_ih/b_hh: (L, 1, 3H)  wfc: (H, C)  bfc: (1, C)
    L, H = num_layers, hidden_size
    G = 3 * H
    if blend_inputs:
        (in_ref, mask_ref, orig_ref, h0_ref, wih0_ref, wihr_ref, whh_ref,
         bih_ref, bhh_ref, wfc_ref, bfc_ref,
         out_ref, hout_ref, h_scr, gi0_scr, htop_scr) = refs
    else:
        (in_ref, mask_ref, h0_ref, wih0_ref, wihr_ref, whh_ref,
         bih_ref, bhh_ref, wfc_ref, bfc_ref,
         out_ref, hout_ref, h_scr, gi0_scr, htop_scr) = refs
        orig_ref = None

    Bh, flat_w = in_ref.shape
    Cin = wih0_ref.shape[0]
    Cout = wfc_ref.shape[1]
    tblk = flat_w // Cin
    w_dt = wih0_ref.dtype                       # bf16 weights -> bf16 MXU ops
    t_id = pl.program_id(1)

    @pl.when(t_id == 0)
    def _init_hidden():
        h_scr[...] = h0_ref[...].astype(jnp.float32)

    # ---- blend + hoisted layer-0 input projection (one matmul per chunk) ----
    i_flat = in_ref[...].astype(jnp.float32)            # (Bh, tblk*C)
    m_flat = mask_ref[...].astype(jnp.float32)
    if blend_inputs:                                     # 'original_and_intervened_inplace'
        o_flat = orig_ref[...].astype(jnp.float32)
        xb_flat = m_flat * i_flat + (1.0 - m_flat) * o_flat
    else:                                                # 'previous_output'
        xb_flat = i_flat
    # (Bh, tblk*C) -> time-major rows (tblk*Bh, C); once per chunk, off the
    # serial critical path.
    x_tm = xb_flat.reshape(Bh, tblk, Cin).transpose(1, 0, 2).reshape(tblk * Bh, Cin)
    gi0 = jnp.dot(x_tm.astype(w_dt), wih0_ref[...],
                  preferred_element_type=jnp.float32) + bih_ref[0]    # (tblk*Bh, G)
    gi0_scr[...] = gi0.reshape(tblk, Bh, G)

    # ---- hoisted per-layer weights & bias broadcasts -------------------------
    whh = [whh_ref[l] for l in range(L)]
    wih_rest = [wihr_ref[l - 1] for l in range(1, L)]
    bhh_bc = [jnp.broadcast_to(bhh_ref[l], (Bh, G)) for l in range(L)]
    bih_bc = [jnp.broadcast_to(bih_ref[l], (Bh, G)) for l in range(1, L)]

    def cell(gi, gh, h_prev):
        r = jax.nn.sigmoid(gi[:, 0:H] + gh[:, 0:H])
        z = jax.nn.sigmoid(gi[:, H:2 * H] + gh[:, H:2 * H])
        n = jnp.tanh(gi[:, 2 * H:3 * H] + r * gh[:, 2 * H:3 * H])
        return (1.0 - z) * n + z * h_prev

    # ---- serial recurrence; hidden states are loop carries (vregs) -----------
    def block_step(blk, hs):
        t0 = pl.multiple_of(blk * unroll, unroll)
        gi0_blk = gi0_scr[pl.ds(t0, unroll)]             # (unroll, Bh, G)
        tops = []
        for u in range(unroll):
            inp = None
            new_hs = []
            for l in range(L):
                h_prev = hs[l]
                if l == 0:
                    gi = gi0_blk[u]                      # precomputed projection
                else:
                    gi = jnp.dot(inp.astype(w_dt), wih_rest[l - 1],
                                 preferred_element_type=jnp.float32) + bih_bc[l - 1]
                gh = jnp.dot(h_prev.astype(w_dt), whh[l],
                             preferred_element_type=jnp.float32) + bhh_bc[l]
                h_new = cell(gi, gh, h_prev)
                new_hs.append(h_new)
                inp = h_new
            hs = tuple(new_hs)
            tops.append(inp)                             # top-layer hidden
        # one contiguous store per unrolled block instead of per timestep
        htop_scr[pl.ds(t0, unroll)] = jnp.stack(tops, axis=0)
        return hs

    hs0 = tuple(h_scr[l] for l in range(L))
    hs_fin = lax.fori_loop(0, tblk // unroll, block_step, hs0)
    for l in range(L):
        h_scr[l] = hs_fin[l]

    # hout's block index is constant over the time axis -> materialize once.
    @pl.when(t_id == pl.num_programs(1) - 1)
    def _write_hidden():
        hout_ref[...] = h_scr[...].astype(hout_ref.dtype)

    # ---- bulk FC head + sigmoid + intervention masking (one matmul) ----------
    ht = htop_scr[...].reshape(tblk * Bh, H)             # time-major rows
    y = jax.nn.sigmoid(jnp.dot(ht.astype(w_dt), wfc_ref[...],
                               preferred_element_type=jnp.float32) + bfc_ref[...])
    y = y.reshape(tblk, Bh, Cout).transpose(1, 0, 2).reshape(Bh, tblk * Cout)
    # module semantics: m * inputs + (1 - m) * sigmoid(fc(gru_out))
    i2 = in_ref[...].astype(jnp.float32)
    m2 = mask_ref[...].astype(jnp.float32)
    out_ref[...] = (m2 * i2 + (1.0 - m2) * y).astype(out_ref.dtype)


# ----------------------------------------------------------------------------
# Wrapper
# ----------------------------------------------------------------------------
def gru_concept_corrector_forward(inputs, already_intervened_concepts,
                                  original_predictions, hidden, params, *,
                                  input_format="original_and_intervened_inplace",
                                  time_block=None, batch_split=1,
                                  vmem_limit_bytes=None):
    """inputs/already_intervened_concepts/original_predictions: (B, T, C).
    hidden: (num_layers, B, H).  Returns (output (B,T,C), hidden (L,B,H)).

    batch_split > 1 adds a leading "parallel" grid axis (v7x dual-TC); requires
    B/batch_split to be a multiple of 8.  vmem_limit_bytes: raise for large
    time_block (v5e/v6e); keep time_block small enough for v7x's 64 MiB VMEM.
    """
    if input_format not in ("original_and_intervened_inplace", "previous_output"):
        raise ValueError(f"Unsupported input format: {input_format}")
    blend = input_format == "original_and_intervened_inplace"

    B, T, Cin = inputs.shape
    L, Bh_, H = hidden.shape
    G = 3 * H
    Cout = params["w_fc"].shape[1]
    assert Bh_ == B
    # output masking (m*inputs + (1-m)*output) requires output_size == input_size
    assert Cout == Cin
    assert already_intervened_concepts.shape == inputs.shape

    if time_block is None:
        time_block = T
    tblk = time_block
    assert T % tblk == 0
    # lane-dense flat layout: last block dim must be a multiple of 128 or full.
    assert tblk == T or (tblk * Cin) % 128 == 0, \
        "choose time_block so time_block*input_size is a multiple of 128"
    n_chunks = T // tblk
    assert B % batch_split == 0
    Bh = B // batch_split
    assert batch_split == 1 or Bh % 8 == 0, \
        "batch_split > 1 (v7x dual-TC) needs B/batch_split to be a multiple of 8"
    unroll = math.gcd(tblk, 8)
    Lr = max(L - 1, 1)   # TODO(synk): w_ihr is a dummy (never read) when num_layers == 1

    flat = lambda a: a.reshape(B, T * Cin)
    io_spec = pl.BlockSpec((Bh, tblk * Cin), lambda p, t: (p, t))

    args = [flat(inputs), flat(already_intervened_concepts)]
    in_specs = [io_spec, io_spec]
    if blend:
        assert original_predictions.shape == inputs.shape
        args.append(flat(original_predictions))
        in_specs.append(io_spec)
    args += [hidden, params["w_ih0"], params["w_ihr"], params["w_hh"],
             params["b_ih"], params["b_hh"], params["w_fc"], params["b_fc"]]
    in_specs += [
        pl.BlockSpec((L, Bh, H), lambda p, t: (0, p, 0)),     # h0 (resident per p)
        pl.BlockSpec((Cin, G), lambda p, t: (0, 0)),          # W_ih layer 0
        pl.BlockSpec((Lr, H, G), lambda p, t: (0, 0, 0)),     # W_ih layers 1..L-1
        pl.BlockSpec((L, H, G), lambda p, t: (0, 0, 0)),      # W_hh
        pl.BlockSpec((L, 1, G), lambda p, t: (0, 0, 0)),      # b_ih
        pl.BlockSpec((L, 1, G), lambda p, t: (0, 0, 0)),      # b_hh
        pl.BlockSpec((H, Cout), lambda p, t: (0, 0)),         # W_fc
        pl.BlockSpec((1, Cout), lambda p, t: (0, 0)),         # b_fc
    ]

    kern = functools.partial(_gru_kernel, L, H, blend, unroll)
    out_flat, hout = pl.pallas_call(
        kern,
        out_shape=(jax.ShapeDtypeStruct((B, T * Cout), inputs.dtype),
                   jax.ShapeDtypeStruct((L, B, H), hidden.dtype)),
        grid=(batch_split, n_chunks),
        in_specs=in_specs,
        out_specs=(pl.BlockSpec((Bh, tblk * Cout), lambda p, t: (p, t)),
                   pl.BlockSpec((L, Bh, H), lambda p, t: (0, p, 0))),
        scratch_shapes=[pltpu.VMEM((L, Bh, H), jnp.float32),       # hidden carry
                        pltpu.VMEM((tblk, Bh, G), jnp.float32),    # layer-0 projection
                        pltpu.VMEM((tblk, Bh, H), jnp.float32)],   # top-layer hiddens
        compiler_params=pltpu.CompilerParams(
            dimension_semantics=("parallel", "arbitrary"),
            vmem_limit_bytes=vmem_limit_bytes),
    )(*args)
    return out_flat.reshape(B, T, Cout), hout


def gru_concept_corrector_step(inputs, already_intervened_concepts,
                               original_predictions, hidden, params, **kw):
    """forward_single_timestep: (B, C) inputs."""
    out, hid = gru_concept_corrector_forward(
        inputs[:, None, :], already_intervened_concepts[:, None, :],
        original_predictions[:, None, :], hidden, params, time_block=1, **kw)
    return out[:, 0, :], hid


# ----------------------------------------------------------------------------
# Parameter / hidden-state setup (PyTorch-style init; matrices stored (in, out))
# ----------------------------------------------------------------------------
def init_params(key, input_size, hidden_size, num_layers, output_size,
                matrix_dtype=jnp.float32):
    H, G = hidden_size, 3 * hidden_size
    scale = 1.0 / (hidden_size ** 0.5)
    ks = jax.random.split(key, 7)
    u = lambda k, shape: jax.random.uniform(k, shape, jnp.float32, -scale, scale)
    n_rest = max(num_layers - 1, 1)
    p = dict(
        w_ih0=u(ks[0], (input_size, G)),
        w_ihr=u(ks[1], (n_rest, H, G)),
        w_hh=u(ks[2], (num_layers, H, G)),
        b_ih=u(ks[3], (num_layers, 1, G)),
        b_hh=u(ks[4], (num_layers, 1, G)),
        w_fc=u(ks[5], (H, output_size)),
        b_fc=u(ks[6], (1, output_size)),
    )
    # matrices in matrix_dtype (e.g. bf16 for v6e/v7x MXU); biases stay f32
    return {k: (v.astype(matrix_dtype) if k.startswith("w_") else v)
            for k, v in p.items()}


def prepare_initial_hidden(batch_size, num_layers, hidden_size,
                           dtype=jnp.float32):
    return jnp.zeros((num_layers, batch_size, hidden_size), dtype)


# ----------------------------------------------------------------------------
# Pure-JAX reference (mirrors torch.nn.GRU + fc + masking)
# ----------------------------------------------------------------------------
def _ref_forward(inputs, mask, orig, hidden, params,
                 input_format="original_and_intervened_inplace"):
    p = {k: v.astype(jnp.float32) for k, v in params.items()}
    if input_format == "original_and_intervened_inplace":
        x = mask * inputs + (1.0 - mask) * orig
    else:
        x = inputs
    B, T, _ = x.shape
    L, _, H = hidden.shape
    h = [hidden[l].astype(jnp.float32) for l in range(L)]
    outs = []
    for t in range(T):
        inp = x[:, t, :]
        for l in range(L):
            w_ih = p["w_ih0"] if l == 0 else p["w_ihr"][l - 1]
            gi = inp @ w_ih + p["b_ih"][l]
            gh = h[l] @ p["w_hh"][l] + p["b_hh"][l]
            r = jax.nn.sigmoid(gi[:, :H] + gh[:, :H])
            z = jax.nn.sigmoid(gi[:, H:2 * H] + gh[:, H:2 * H])
            n = jnp.tanh(gi[:, 2 * H:] + r * gh[:, 2 * H:])
            h[l] = (1.0 - z) * n + z * h[l]
            inp = h[l]
        y = jax.nn.sigmoid(inp @ p["w_fc"] + p["b_fc"])
        outs.append(mask[:, t] * inputs[:, t] + (1.0 - mask[:, t]) * y)
    return jnp.stack(outs, axis=1), jnp.stack(h, axis=0)


# ----------------------------------------------------------------------------
if __name__ == "__main__":
    input_size = output_size = 8
    hidden_size = 32
    num_layers = 2
    B, T = 2, 32
    time_block = 16          # 2 time chunks (hidden carry); 16*8 = 128 lanes/block

    key = jax.random.PRNGKey(0)
    k_in, k_mask, k_orig, k_par = jax.random.split(key, 4)
    inputs = jax.random.uniform(k_in, (B, T, input_size), jnp.float32)
    already = (jax.random.uniform(k_mask, (B, T, input_size)) > 0.5
               ).astype(jnp.float32)
    orig = jax.random.uniform(k_orig, (B, T, input_size), jnp.float32)

    params = init_params(k_par, input_size, hidden_size, num_layers, output_size)
    h0 = prepare_initial_hidden(B, num_layers, hidden_size)

    # default 'original_and_intervened_inplace' path
    out, hid = gru_concept_corrector_forward(
        inputs, already, orig, h0, params, time_block=time_block)
    out = jax.block_until_ready(out)
    hid = jax.block_until_ready(hid)

    ref_out, ref_hid = _ref_forward(inputs, already, orig, h0, params)
    assert jnp.allclose(out, ref_out, atol=2e-2, rtol=2e-2), (
        "output mismatch, max abs diff = "
        f"{float(jnp.max(jnp.abs(out - ref_out)))}")
    assert jnp.allclose(hid, ref_hid, atol=2e-2, rtol=2e-2), (
        "hidden mismatch, max abs diff = "
        f"{float(jnp.max(jnp.abs(hid - ref_hid)))}")

    # 'previous_output' path (original_predictions never DMA'd)
    out_p, hid_p = gru_concept_corrector_forward(
        inputs, already, orig, h0, params,
        input_format="previous_output", time_block=time_block)
    out_p = jax.block_until_ready(out_p)
    ref_out_p, ref_hid_p = _ref_forward(inputs, already, orig, h0, params,
                                        input_format="previous_output")
    assert jnp.allclose(out_p, ref_out_p, atol=2e-2, rtol=2e-2)
    assert jnp.allclose(hid_p, ref_hid_p, atol=2e-2, rtol=2e-2)

    # forward_single_timestep path
    out1, hid1 = gru_concept_corrector_step(
        inputs[:, 0], already[:, 0], orig[:, 0], h0, params)
    out1 = jax.block_until_ready(out1)
    ref_out1, ref_hid1 = _ref_forward(
        inputs[:, :1], already[:, :1], orig[:, :1], h0, params)
    assert jnp.allclose(out1, ref_out1[:, 0], atol=2e-2, rtol=2e-2)
    assert jnp.allclose(hid1, ref_hid1, atol=2e-2, rtol=2e-2)

    # bf16 MXU-operand path (recommended for v6e/v7x): bf16 weights, f32 accum
    params_bf16 = {k: (v.astype(jnp.bfloat16) if k.startswith("w_") else v)
                   for k, v in params.items()}
    out_bf, hid_bf = gru_concept_corrector_forward(
        inputs, already, orig, h0, params_bf16, time_block=time_block)
    out_bf = jax.block_until_ready(out_bf)
    assert float(jnp.max(jnp.abs(out_bf - ref_out))) < 0.1, "bf16 path diverged"

    print("KERNEL_OK")
</pallas_src>

<mosaic_0001>
module attributes {stable_mosaic.version = 11 : i64} {
  func.func @_gru_kernel(%arg0: i32, %arg1: i32, %arg2: memref<2x128xf32, #tpu.memory_space<vmem>>, %arg3: memref<2x128xf32, #tpu.memory_space<vmem>>, %arg4: memref<2x128xf32, #tpu.memory_space<vmem>>, %arg5: memref<2x2x32xf32, #tpu.memory_space<vmem>>, %arg6: memref<8x96xf32, #tpu.memory_space<vmem>>, %arg7: memref<1x32x96xf32, #tpu.memory_space<vmem>>, %arg8: memref<2x32x96xf32, #tpu.memory_space<vmem>>, %arg9: memref<2x1x96xf32, #tpu.memory_space<vmem>>, %arg10: memref<2x1x96xf32, #tpu.memory_space<vmem>>, %arg11: memref<32x8xf32, #tpu.memory_space<vmem>>, %arg12: memref<1x8xf32, #tpu.memory_space<vmem>>, %arg13: memref<2x128xf32, #tpu.memory_space<vmem>>, %arg14: memref<2x2x32xf32, #tpu.memory_space<vmem>>, %arg15: memref<2x2x32xf32, #tpu.memory_space<vmem>>, %arg16: memref<16x2x96xf32, #tpu.memory_space<vmem>>, %arg17: memref<16x2x32xf32, #tpu.memory_space<vmem>>) attributes {dimension_semantics = [#tpu.dimension_semantics<parallel>, #tpu.dimension_semantics<arbitrary>], iteration_bounds = array<i64: 1, 2>, scalar_prefetch = 0 : i64, scratch_operands = 3 : i64, tpu.core_type = #tpu.core_type<tc>, window_params = [{transform_indices = @transform_0, window_bounds = array<i64: 2, 128>}, {transform_indices = @transform_1, window_bounds = array<i64: 2, 128>}, {transform_indices = @transform_2, window_bounds = array<i64: 2, 128>}, {transform_indices = @transform_3, window_bounds = array<i64: 2, 2, 32>}, {pipeline_mode = #tpu.pipeline_mode<synchronous>, transform_indices = @transform_4, window_bounds = array<i64: 8, 96>}, {pipeline_mode = #tpu.pipeline_mode<synchronous>, transform_indices = @transform_5, window_bounds = array<i64: 1, 32, 96>}, {pipeline_mode = #tpu.pipeline_mode<synchronous>, transform_indices = @transform_6, window_bounds = array<i64: 2, 32, 96>}, {pipeline_mode = #tpu.pipeline_mode<synchronous>, transform_indices = @transform_7, window_bounds = array<i64: 2, 1, 96>}, {pipeline_mode = #tpu.pipeline_mode<synchronous>, transform_indices = @transform_8, window_bounds = array<i64: 2, 1, 96>}, {pipeline_mode = #tpu.pipeline_mode<synchronous>, transform_indices = @transform_9, window_bounds = array<i64: 32, 8>}, {pipeline_mode = #tpu.pipeline_mode<synchronous>, transform_indices = @transform_10, window_bounds = array<i64: 1, 8>}, {transform_indices = @transform_11, window_bounds = array<i64: 2, 128>}, {transform_indices = @transform_12, window_bounds = array<i64: 2, 2, 32>}]} {
    %c0_i32 = arith.constant 0 : i32
    %0 = arith.cmpi eq, %arg1, %c0_i32 : i32
    %1 = arith.extui %0 : i1 to i32
    %c0_i32_0 = arith.constant 0 : i32
    %2 = arith.cmpi ne, %1, %c0_i32_0 : i32
    scf.if %2 {
      %c0_64 = arith.constant 0 : index
      %c0_65 = arith.constant 0 : index
      %c0_66 = arith.constant 0 : index
      %78 = vector.load %arg5[%c0_64, %c0_65, %c0_66] : memref<2x2x32xf32, #tpu.memory_space<vmem>>, vector<2x2x32xf32>
      %c0_67 = arith.constant 0 : index
      %c0_68 = arith.constant 0 : index
      %c0_69 = arith.constant 0 : index
      %79 = vector.load %arg15[%c0_67, %c0_68, %c0_69] : memref<2x2x32xf32, #tpu.memory_space<vmem>>, vector<2x2x32xf32>
      tpu.vector_store %arg15[%c0_67, %c0_68, %c0_69], %78 {strides = array<i32>} : memref<2x2x32xf32, #tpu.memory_space<vmem>>, vector<2x2x32xf32>,
    } else {
    }
    %c0 = arith.constant 0 : index
    %c0_1 = arith.constant 0 : index
    %3 = vector.load %arg2[%c0, %c0_1] : memref<2x128xf32, #tpu.memory_space<vmem>>, vector<2x128xf32>
    %c0_2 = arith.constant 0 : index
    %c0_3 = arith.constant 0 : index
    %4 = vector.load %arg3[%c0_2, %c0_3] : memref<2x128xf32, #tpu.memory_space<vmem>>, vector<2x128xf32>
    %c0_4 = arith.constant 0 : index
    %c0_5 = arith.constant 0 : index
    %5 = vector.load %arg4[%c0_4, %c0_5] : memref<2x128xf32, #tpu.memory_space<vmem>>, vector<2x128xf32>
    %6 = arith.mulf %4, %3 : vector<2x128xf32>
    %cst = arith.constant 1.000000e+00 : f32
    %7 = vector.broadcast %cst : f32 to vector<2x128xf32>
    %8 = arith.subf %7, %4 : vector<2x128xf32>
    %9 = arith.mulf %8, %5 : vector<2x128xf32>
    %10 = arith.addf %6, %9 : vector<2x128xf32>
    %11 = vector.shape_cast %10 : vector<2x128xf32> to vector<2x16x8xf32>
    %12 = tpu.transpose %11, [1, 0, 2] : vector<2x16x8xf32> -> vector<16x2x8xf32>
    %13 = vector.shape_cast %12 : vector<16x2x8xf32> to vector<32x8xf32>
    %c0_6 = arith.constant 0 : index
    %c0_7 = arith.constant 0 : index
    %14 = vector.load %arg6[%c0_6, %c0_7] : memref<8x96xf32, #tpu.memory_space<vmem>>, vector<8x96xf32>
    %cst_8 = arith.constant dense<0.000000e+00> : vector<32x96xf32>
    %15 = tpu.matmul %13, %14, %cst_8 {dimension_numbers = #tpu.dot_dimension_numbers<[1], [0], [0], [1], [0, 0, 1, 1], [], []>} : vector<32x8xf32>, vector<8x96xf32>, vector<32x96xf32> -> vector<32x96xf32>
    %c0_9 = arith.constant 0 : index
    %c0_10 = arith.constant 0 : index
    %c0_11 = arith.constant 0 : index
    %16 = vector.load %arg9[%c0_9, %c0_10, %c0_11] : memref<2x1x96xf32, #tpu.memory_space<vmem>>, vector<1x1x96xf32>
    %17 = vector.shape_cast %16 : vector<1x1x96xf32> to vector<1x96xf32>
    %18 = vector.broadcast %17 : vector<1x96xf32> to vector<32x96xf32>
    %19 = arith.addf %15, %18 : vector<32x96xf32>
    %20 = vector.shape_cast %19 : vector<32x96xf32> to vector<16x2x96xf32>
    %c0_12 = arith.constant 0 : index
    %c0_13 = arith.constant 0 : index
    %c0_14 = arith.constant 0 : index
    %21 = vector.load %arg16[%c0_12, %c0_13, %c0_14] : memref<16x2x96xf32, #tpu.memory_space<vmem>>, vector<16x2x96xf32>
    tpu.vector_store %arg16[%c0_12, %c0_13, %c0_14], %20 {strides = array<i32>} : memref<16x2x96xf32, #tpu.memory_space<vmem>>, vector<16x2x96xf32>,
    %c0_15 = arith.constant 0 : index
    %c0_16 = arith.constant 0 : index
    %c0_17 = arith.constant 0 : index
    %22 = vector.load %arg8[%c0_15, %c0_16, %c0_17] : memref<2x32x96xf32, #tpu.memory_space<vmem>>, vector<1x32x96xf32>
    %23 = vector.shape_cast %22 : vector<1x32x96xf32> to vector<32x96xf32>
    %c1 = arith.constant 1 : index
    %c0_18 = arith.constant 0 : index
    %c0_19 = arith.constant 0 : index
    %24 = vector.load %arg8[%c1, %c0_18, %c0_19] : memref<2x32x96xf32, #tpu.memory_space<vmem>>, vector<1x32x96xf32>
    %25 = vector.shape_cast %24 : vector<1x32x96xf32> to vector<32x96xf32>
    %c0_20 = arith.constant 0 : index
    %c0_21 = arith.constant 0 : index
    %c0_22 = arith.constant 0 : index
    %26 = vector.load %arg7[%c0_20, %c0_21, %c0_22] : memref<1x32x96xf32, #tpu.memory_space<vmem>>, vector<1x32x96xf32>
    %27 = vector.shape_cast %26 : vector<1x32x96xf32> to vector<32x96xf32>
    %c0_23 = arith.constant 0 : index
    %c0_24 = arith.constant 0 : index
    %c0_25 = arith.constant 0 : index
    %28 = vector.load %arg10[%c0_23, %c0_24, %c0_25] : memref<2x1x96xf32, #tpu.memory_space<vmem>>, vector<1x1x96xf32>
    %29 = vector.shape_cast %28 : vector<1x1x96xf32> to vector<1x96xf32>
    %30 = vector.shape_cast %29 : vector<1x96xf32> to vector<1x96xf32>
    %31 = vector.broadcast %30 : vector<1x96xf32> to vector<2x96xf32>
    %c1_26 = arith.constant 1 : index
    %c0_27 = arith.constant 0 : index
    %c0_28 = arith.constant 0 : index
    %32 = vector.load %arg10[%c1_26, %c0_27, %c0_28] : memref<2x1x96xf32, #tpu.memory_space<vmem>>, vector<1x1x96xf32>
    %33 = vector.shape_cast %32 : vector<1x1x96xf32> to vector<1x96xf32>
    %34 = vector.shape_cast %33 : vector<1x96xf32> to vector<1x96xf32>
    %35 = vector.broadcast %34 : vector<1x96xf32> to vector<2x96xf32>
    %c1_29 = arith.constant 1 : index
    %c0_30 = arith.constant 0 : index
    %c0_31 = arith.constant 0 : index
    %36 = vector.load %arg9[%c1_29, %c0_30, %c0_31] : memref<2x1x96xf32, #tpu.memory_space<vmem>>, vector<1x1x96xf32>
    %37 = vector.shape_cast %36 : vector<1x1x96xf32> to vector<1x96xf32>
    %38 = vector.shape_cast %37 : vector<1x96xf32> to vector<1x96xf32>
    %39 = vector.broadcast %38 : vector<1x96xf32> to vector<2x96xf32>
    %c0_32 = arith.constant 0 : index
    %c0_33 = arith.constant 0 : index
    %c0_34 = arith.constant 0 : index
    %40 = vector.load %arg15[%c0_32, %c0_33, %c0_34] : memref<2x2x32xf32, #tpu.memory_space<vmem>>, vector<1x2x32xf32>
    %41 = vector.shape_cast %40 : vector<1x2x32xf32> to vector<2x32xf32>
    %c1_35 = arith.constant 1 : index
    %c0_36 = arith.constant 0 : index
    %c0_37 = arith.constant 0 : index
    %42 = vector.load %arg15[%c1_35, %c0_36, %c0_37] : memref<2x2x32xf32, #tpu.memory_space<vmem>>, vector<1x2x32xf32>
    %43 = vector.shape_cast %42 : vector<1x2x32xf32> to vector<2x32xf32>
    %c0_i32_38 = arith.constant 0 : i32
    %c2_i32 = arith.constant 2 : i32
    %44 = arith.addi %c0_i32_38, %c2_i32 : i32
    %c1_i32 = arith.constant 1 : i32
    %45:2 = scf.for %arg18 = %c0_i32_38 to %44 step %c1_i32 iter_args(%arg19 = %41, %arg20 = %43) -> (vector<2x32xf32>, vector<2x32xf32>)  : i32 {
      %c8_i32 = arith.constant 8 : i32
      %78 = arith.muli %arg18, %c8_i32 : i32
      %79 = tpu.assume_multiple %78, 8 : i32
      %80 = arith.index_cast %79 : i32 to index
      %c0_64 = arith.constant 0 : index
      %c0_65 = arith.constant 0 : index
      %81 = vector.load %arg16[%80, %c0_64, %c0_65] : memref<16x2x96xf32, #tpu.memory_space<vmem>>, vector<8x2x96xf32>
      %82 = vector.extract_strided_slice %81 {offsets = [0, 0, 0], sizes = [1, 2, 96], strides = [1, 1, 1]} : vector<8x2x96xf32> to vector<1x2x96xf32>
      %83 = vector.shape_cast %82 : vector<1x2x96xf32> to vector<2x96xf32>
      %cst_66 = arith.constant dense<0.000000e+00> : vector<2x96xf32>
      %84 = tpu.matmul %arg19, %23, %cst_66 {dimension_numbers = #tpu.dot_dimension_numbers<[1], [0], [0], [1], [0, 0, 1, 1], [], []>} : vector<2x32xf32>, vector<32x96xf32>, vector<2x96xf32> -> vector<2x96xf32>
      %85 = arith.addf %84, %31 : vector<2x96xf32>
      %86 = vector.extract_strided_slice %83 {offsets = [0, 0], sizes = [2, 32], strides = [1, 1]} : vector<2x96xf32> to vector<2x32xf32>
      %87 = vector.extract_strided_slice %85 {offsets = [0, 0], sizes = [2, 32], strides = [1, 1]} : vector<2x96xf32> to vector<2x32xf32>
      %88 = arith.addf %86, %87 : vector<2x32xf32>
      %89 = arith.negf %88 : vector<2x32xf32>
      %90 = math.exp %89 : vector<2x32xf32>
      %cst_67 = arith.constant 1.000000e+00 : f32
      %91 = vector.broadcast %cst_67 : f32 to vector<2x32xf32>
      %92 = arith.addf %91, %90 : vector<2x32xf32>
      %93 = arith.divf %91, %92 : vector<2x32xf32>
      %94 = vector.extract_strided_slice %83 {offsets = [0, 32], sizes = [2, 32], strides = [1, 1]} : vector<2x96xf32> to vector<2x32xf32>
      %95 = vector.extract_strided_slice %85 {offsets = [0, 32], sizes = [2, 32], strides = [1, 1]} : vector<2x96xf32> to vector<2x32xf32>
      %96 = arith.addf %94, %95 : vector<2x32xf32>
      %97 = arith.negf %96 : vector<2x32xf32>
      %98 = math.exp %97 : vector<2x32xf32>
      %cst_68 = arith.constant 1.000000e+00 : f32
      %99 = vector.broadcast %cst_68 : f32 to vector<2x32xf32>
      %100 = arith.addf %99, %98 : vector<2x32xf32>
      %101 = arith.divf %99, %100 : vector<2x32xf32>
      %102 = vector.extract_strided_slice %83 {offsets = [0, 64], sizes = [2, 32], strides = [1, 1]} : vector<2x96xf32> to vector<2x32xf32>
      %103 = vector.extract_strided_slice %85 {offsets = [0, 64], sizes = [2, 32], strides = [1, 1]} : vector<2x96xf32> to vector<2x32xf32>
      %104 = arith.mulf %93, %103 : vector<2x32xf32>
      %105 = arith.addf %102, %104 : vector<2x32xf32>
      %106 = math.tanh %105 : vector<2x32xf32>
      %cst_69 = arith.constant 1.000000e+00 : f32
      %107 = vector.broadcast %cst_69 : f32 to vector<2x32xf32>
      %108 = arith.subf %107, %101 : vector<2x32xf32>
      %109 = arith.mulf %108, %106 : vector<2x32xf32>
      %110 = arith.mulf %101, %arg19 : vector<2x32xf32>
      %111 = arith.addf %109, %110 : vector<2x32xf32>
      %cst_70 = arith.constant dense<0.000000e+00> : vector<2x96xf32>
      %112 = tpu.matmul %111, %27, %cst_70 {dimension_numbers = #tpu.dot_dimension_numbers<[1], [0], [0], [1], [0, 0, 1, 1], [], []>} : vector<2x32xf32>, vector<32x96xf32>, vector<2x96xf32> -> vector<2x96xf32>
      %113 = arith.addf %112, %39 : vector<2x96xf32>
      %cst_71 = arith.constant dense<0.000000e+00> : vector<2x96xf32>
      %114 = tpu.matmul %arg20, %25, %cst_71 {dimension_numbers = #tpu.dot_dimension_numbers<[1], [0], [0], [1], [0, 0, 1, 1], [], []>} : vector<2x32xf32>, vector<32x96xf32>, vector<2x96xf32> -> vector<2x96xf32>
      %115 = arith.addf %114, %35 : vector<2x96xf32>
      %116 = vector.extract_strided_slice %113 {offsets = [0, 0], sizes = [2, 32], strides = [1, 1]} : vector<2x96xf32> to vector<2x32xf32>
      %117 = vector.extract_strided_slice %115 {offsets = [0, 0], sizes = [2, 32], strides = [1, 1]} : vector<2x96xf32> to vector<2x32xf32>
      %118 = arith.addf %116, %117 : vector<2x32xf32>
      %119 = arith.negf %118 : vector<2x32xf32>
      %120 = math.exp %119 : vector<2x32xf32>
      %cst_72 = arith.constant 1.000000e+00 : f32
      %121 = vector.broadcast %cst_72 : f32 to vector<2x32xf32>
      %122 = arith.addf %121, %120 : vector<2x32xf32>
      %123 = arith.divf %121, %122 : vector<2x32xf32>
      %124 = vector.extract_strided_slice %113 {offsets = [0, 32], sizes = [2, 32], strides = [1, 1]} : vector<2x96xf32> to vector<2x32xf32>
      %125 = vector.extract_strided_slice %115 {offsets = [0, 32], sizes = [2, 32], strides = [1, 1]} : vector<2x96xf32> to vector<2x32xf32>
      %126 = arith.addf %124, %125 : vector<2x32xf32>
      %127 = arith.negf %126 : vector<2x32xf32>
      %128 = math.exp %127 : vector<2x32xf32>
      %cst_73 = arith.constant 1.000000e+00 : f32
      %129 = vector.broadcast %cst_73 : f32 to vector<2x32xf32>
      %130 = arith.addf %129, %128 : vector<2x32xf32>
      %131 = arith.divf %129, %130 : vector<2x32xf32>
      %132 = vector.extract_strided_slice %113 {offsets = [0, 64], sizes = [2, 32], strides = [1, 1]} : vector<2x96xf32> to vector<2x32xf32>
      %133 = vector.extract_strided_slice %115 {offsets = [0, 64], sizes = [2, 32], strides = [1, 1]} : vector<2x96xf32> to vector<2x32xf32>
      %134 = arith.mulf %123, %133 : vector<2x32xf32>
      %135 = arith.addf %132, %134 : vector<2x32xf32>
      %136 = math.tanh %135 : vector<2x32xf32>
      %cst_74 = arith.constant 1.000000e+00 : f32
      %137 = vector.broadcast %cst_74 : f32 to vector<2x32xf32>
      %138 = arith.subf %137, %131 : vector<2x32xf32>
      %139 = arith.mulf %138, %136 : vector<2x32xf32>
      %140 = arith.mulf %131, %arg20 : vector<2x32xf32>
      %141 = arith.addf %139, %140 : vector<2x32xf32>
      %142 = vector.extract_strided_slice %81 {offsets = [1, 0, 0], sizes = [1, 2, 96], strides = [1, 1, 1]} : vector<8x2x96xf32> to vector<1x2x96xf32>
      %143 = vector.shape_cast %142 : vector<1x2x96xf32> to vector<2x96xf32>
      %cst_75 = arith.constant dense<0.000000e+00> : vector<2x96xf32>
      %144 = tpu.matmul %111, %23, %cst_75 {dimension_numbers = #tpu.dot_dimension_numbers<[1], [0], [0], [1], [0, 0, 1, 1], [], []>} : vector<2x32xf32>, vector<32x96xf32>, vector<2x96xf32> -> vector<2x96xf32>
      %145 = arith.addf %144, %31 : vector<2x96xf32>
      %146 = vector.extract_strided_slice %143 {offsets = [0, 0], sizes = [2, 32], strides = [1, 1]} : vector<2x96xf32> to vector<2x32xf32>
      %147 = vector.extract_strided_slice %145 {offsets = [0, 0], sizes = [2, 32], strides = [1, 1]} : vector<2x96xf32> to vector<2x32xf32>
      %148 = arith.addf %146, %147 : vector<2x32xf32>
      %149 = arith.negf %148 : vector<2x32xf32>
      %150 = math.exp %149 : vector<2x32xf32>
      %cst_76 = arith.constant 1.000000e+00 : f32
      %151 = vector.broadcast %cst_76 : f32 to vector<2x32xf32>
      %152 = arith.addf %151, %150 : vector<2x32xf32>
      %153 = arith.divf %151, %152 : vector<2x32xf32>
      %154 = vector.extract_strided_slice %143 {offsets = [0, 32], sizes = [2, 32], strides = [1, 1]} : vector<2x96xf32> to vector<2x32xf32>
      %155 = vector.extract_strided_slice %145 {offsets = [0, 32], sizes = [2, 32], strides = [1, 1]} : vector<2x96xf32> to vector<2x32xf32>
      %156 = arith.addf %154, %155 : vector<2x32xf32>
      %157 = arith.negf %156 : vector<2x32xf32>
      %158 = math.exp %157 : vector<2x32xf32>
      %cst_77 = arith.constant 1.000000e+00 : f32
      %159 = vector.broadcast %cst_77 : f32 to vector<2x32xf32>
      %160 = arith.addf %159, %158 : vector<2x32xf32>
      %161 = arith.divf %159, %160 : vector<2x32xf32>
      %162 = vector.extract_strided_slice %143 {offsets = [0, 64], sizes = [2, 32], strides = [1, 1]} : vector<2x96xf32> to vector<2x32xf32>
      %163 = vector.extract_strided_slice %145 {offsets = [0, 64], sizes = [2, 32], strides = [1, 1]} : vector<2x96xf32> to vector<2x32xf32>
      %164 = arith.mulf %153, %163 : vector<2x32xf32>
      %165 = arith.addf %162, %164 : vector<2x32xf32>
      %166 = math.tanh %165 : vector<2x32xf32>
      %cst_78 = arith.constant 1.000000e+00 : f32
      %167 = vector.broadcast %cst_78 : f32 to vector<2x32xf32>
      %168 = arith.subf %167, %161 : vector<2x32xf32>
      %169 = arith.mulf %168, %166 : vector<2x32xf32>
      %170 = arith.mulf %161, %111 : vector<2x32xf32>
      %171 = arith.addf %169, %170 : vector<2x32xf32>
      %cst_79 = arith.constant dense<0.000000e+00> : vector<2x96xf32>
      %172 = tpu.matmul %171, %27, %cst_79 {dimension_numbers = #tpu.dot_dimension_numbers<[1], [0], [0], [1], [0, 0, 1, 1], [], []>} : vector<2x32xf32>, vector<32x96xf32>, vector<2x96xf32> -> vector<2x96xf32>
      %173 = arith.addf %172, %39 : vector<2x96xf32>
      %cst_80 = arith.constant dense<0.000000e+00> : vector<2x96xf32>
      %174 = tpu.matmul %141, %25, %cst_80 {dimension_numbers = #tpu.dot_dimension_numbers<[1], [0], [0], [1], [0, 0, 1, 1], [], []>} : vector<2x32xf32>, vector<32x96xf32>, vector<2x96xf32> -> vector<2x96xf32>
      %175 = arith.addf %174, %35 : vector<2x96xf32>
      %176 = vector.extract_strided_slice %173 {offsets = [0, 0], sizes = [2, 32], strides = [1, 1]} : vector<2x96xf32> to vector<2x32xf32>
      %177 = vector.extract_strided_slice %175 {offsets = [0, 0], sizes = [2, 32], strides = [1, 1]} : vector<2x96xf32> to vector<2x32xf32>
      %178 = arith.addf %176, %177 : vector<2x32xf32>
      %179 = arith.negf %178 : vector<2x32xf32>
      %180 = math.exp %179 : vector<2x32xf32>
      %cst_81 = arith.constant 1.000000e+00 : f32
      %181 = vector.broadcast %cst_81 : f32 to vector<2x32xf32>
      %182 = arith.addf %181, %180 : vector<2x32xf32>
      %183 = arith.divf %181, %182 : vector<2x32xf32>
      %184 = vector.extract_strided_slice %173 {offsets = [0, 32], sizes = [2, 32], strides = [1, 1]} : vector<2x96xf32> to vector<2x32xf32>
      %185 = vector.extract_strided_slice %175 {offsets = [0, 32], sizes = [2, 32], strides = [1, 1]} : vector<2x96xf32> to vector<2x32xf32>
      %186 = arith.addf %184, %185 : vector<2x32xf32>
      %187 = arith.negf %186 : vector<2x32xf32>
      %188 = math.exp %187 : vector<2x32xf32>
      %cst_82 = arith.constant 1.000000e+00 : f32
      %189 = vector.broadcast %cst_82 : f32 to vector<2x32xf32>
      %190 = arith.addf %189, %188 : vector<2x32xf32>
      %191 = arith.divf %189, %190 : vector<2x32xf32>
      %192 = vector.extract_strided_slice %173 {offsets = [0, 64], sizes = [2, 32], strides = [1, 1]} : vector<2x96xf32> to vector<2x32xf32>
      %193 = vector.extract_strided_slice %175 {offsets = [0, 64], sizes = [2, 32], strides = [1, 1]} : vector<2x96xf32> to vector<2x32xf32>
      %194 = arith.mulf %183, %193 : vector<2x32xf32>
      %195 = arith.addf %192, %194 : vector<2x32xf32>
      %196 = math.tanh %195 : vector<2x32xf32>
      %cst_83 = arith.constant 1.000000e+00 : f32
      %197 = vector.broadcast %cst_83 : f32 to vector<2x32xf32>
      %198 = arith.subf %197, %191 : vector<2x32xf32>
      %199 = arith.mulf %198, %196 : vector<2x32xf32>
      %200 = arith.mulf %191, %141 : vector<2x32xf32>
      %201 = arith.addf %199, %200 : vector<2x32xf32>
      %202 = vector.extract_strided_slice %81 {offsets = [2, 0, 0], sizes = [1, 2, 96], strides = [1, 1, 1]} : vector<8x2x96xf32> to vector<1x2x96xf32>
      %203 = vector.shape_cast %202 : vector<1x2x96xf32> to vector<2x96xf32>
      %cst_84 = arith.constant dense<0.000000e+00> : vector<2x96xf32>
      %204 = tpu.matmul %171, %23, %cst_84 {dimension_numbers = #tpu.dot_dimension_numbers<[1], [0], [0], [1], [0, 0, 1, 1], [], []>} : vector<2x32xf32>, vector<32x96xf32>, vector<2x96xf32> -> vector<2x96xf32>
      %205 = arith.addf %204, %31 : vector<2x96xf32>
      %206 = vector.extract_strided_slice %203 {offsets = [0, 0], sizes = [2, 32], strides = [1, 1]} : vector<2x96xf32> to vector<2x32xf32>
      %207 = vector.extract_strided_slice %205 {offsets = [0, 0], sizes = [2, 32], strides = [1, 1]} : vector<2x96xf32> to vector<2x32xf32>
      %208 = arith.addf %206, %207 : vector<2x32xf32>
      %209 = arith.negf %208 : vector<2x32xf32>
      %210 = math.exp %209 : vector<2x32xf32>
      %cst_85 = arith.constant 1.000000e+00 : f32
      %211 = vector.broadcast %cst_85 : f32 to vector<2x32xf32>
      %212 = arith.addf %211, %210 : vector<2x32xf32>
      %213 = arith.divf %211, %212 : vector<2x32xf32>
      %214 = vector.extract_strided_slice %203 {offsets = [0, 32], sizes = [2, 32], strides = [1, 1]} : vector<2x96xf32> to vector<2x32xf32>
      %215 = vector.extract_strided_slice %205 {offsets = [0, 32], sizes = [2, 32], strides = [1, 1]} : vector<2x96xf32> to vector<2x32xf32>
      %216 = arith.addf %214, %215 : vector<2x32xf32>
      %217 = arith.negf %216 : vector<2x32xf32>
      %218 = math.exp %217 : vector<2x32xf32>
      %cst_86 = arith.constant 1.000000e+00 : f32
      %219 = vector.broadcast %cst_86 : f32 to vector<2x32xf32>
      %220 = arith.addf %219, %218 : vector<2x32xf32>
      %221 = arith.divf %219, %220 : vector<2x32xf32>
      %222 = vector.extract_strided_slice %203 {offsets = [0, 64], sizes = [2, 32], strides = [1, 1]} : vector<2x96xf32> to vector<2x32xf32>
      %223 = vector.extract_strided_slice %205 {offsets = [0, 64], sizes = [2, 32], strides = [1, 1]} : vector<2x96xf32> to vector<2x32xf32>
      %224 = arith.mulf %213, %223 : vector<2x32xf32>
      %225 = arith.addf %222, %224 : vector<2x32xf32>
      %226 = math.tanh %225 : vector<2x32xf32>
      %cst_87 = arith.constant 1.000000e+00 : f32
      %227 = vector.broadcast %cst_87 : f32 to vector<2x32xf32>
      %228 = arith.subf %227, %221 : vector<2x32xf32>
      %229 = arith.mulf %228, %226 : vector<2x32xf32>
      %230 = arith.mulf %221, %171 : vector<2x32xf32>
      %231 = arith.addf %229, %230 : vector<2x32xf32>
      %cst_88 = arith.constant dense<0.000000e+00> : vector<2x96xf32>
      %232 = tpu.matmul %231, %27, %cst_88 {dimension_numbers = #tpu.dot_dimension_numbers<[1], [0], [0], [1], [0, 0, 1, 1], [], []>} : vector<2x32xf32>, vector<32x96xf32>, vector<2x96xf32> -> vector<2x96xf32>
      %233 = arith.addf %232, %39 : vector<2x96xf32>
      %cst_89 = arith.constant dense<0.000000e+00> : vector<2x96xf32>
      %234 = tpu.matmul %201, %25, %cst_89 {dimension_numbers = #tpu.dot_dimension_numbers<[1], [0], [0], [1], [0, 0, 1, 1], [], []>} : vector<2x32xf32>, vector<32x96xf32>, vector<2x96xf32> -> vector<2x96xf32>
      %235 = arith.addf %234, %35 : vector<2x96xf32>
      %236 = vector.extract_strided_slice %233 {offsets = [0, 0], sizes = [2, 32], strides = [1, 1]} : vector<2x96xf32> to vector<2x32xf32>
      %237 = vector.extract_strided_slice %235 {offsets = [0, 0], sizes = [2, 32], strides = [1, 1]} : vector<2x96xf32> to vector<2x32xf32>
      %238 = arith.addf %236, %237 : vector<2x32xf32>
      %239 = arith.negf %238 : vector<2x32xf32>
      %240 = math.exp %239 : vector<2x32xf32>
      %cst_90 = arith.constant 1.000000e+00 : f32
      %241 = vector.broadcast %cst_90 : f32 to vector<2x32xf32>
      %242 = arith.addf %241, %240 : vector<2x32xf32>
      %243 = arith.divf %241, %242 : vector<2x32xf32>
      %244 = vector.extract_strided_slice %233 {offsets = [0, 32], sizes = [2, 32], strides = [1, 1]} : vector<2x96xf32> to vector<2x32xf32>
      %245 = vector.extract_strided_slice %235 {offsets = [0, 32], sizes = [2, 32], strides = [1, 1]} : vector<2x96xf32> to vector<2x32xf32>
      %246 = arith.addf %244, %245 : vector<2x32xf32>
      %247 = arith.negf %246 : vector<2x32xf32>
      %248 = math.exp %247 : vector<2x32xf32>
      %cst_91 = arith.constant 1.000000e+00 : f32
      %249 = vector.broadcast %cst_91 : f32 to vector<2x32xf32>
      %250 = arith.addf %249, %248 : vector<2x32xf32>
      %251 = arith.divf %249, %250 : vector<2x32xf32>
      %252 = vector.extract_strided_slice %233 {offsets = [0, 64], sizes = [2, 32], strides = [1, 1]} : vector<2x96xf32> to vector<2x32xf32>
      %253 = vector.extract_strided_slice %235 {offsets = [0, 64], sizes = [2, 32], strides = [1, 1]} : vector<2x96xf32> to vector<2x32xf32>
      %254 = arith.mulf %243, %253 : vector<2x32xf32>
      %255 = arith.addf %252, %254 : vector<2x32xf32>
      %256 = math.tanh %255 : vector<2x32xf32>
      %cst_92 = arith.constant 1.000000e+00 : f32
      %257 = vector.broadcast %cst_92 : f32 to vector<2x32xf32>
      %258 = arith.subf %257, %251 : vector<2x32xf32>
      %259 = arith.mulf %258, %256 : vector<2x32xf32>
      %260 = arith.mulf %251, %201 : vector<2x32xf32>
      %261 = arith.addf %259, %260 : vector<2x32xf32>
      %262 = vector.extract_strided_slice %81 {offsets = [3, 0, 0], sizes = [1, 2, 96], strides = [1, 1, 1]} : vector<8x2x96xf32> to vector<1x2x96xf32>
      %263 = vector.shape_cast %262 : vector<1x2x96xf32> to vector<2x96xf32>
      %cst_93 = arith.constant dense<0.000000e+00> : vector<2x96xf32>
      %264 = tpu.matmul %231, %23, %cst_93 {dimension_numbers = #tpu.dot_dimension_numbers<[1], [0], [0], [1], [0, 0, 1, 1], [], []>} : vector<2x32xf32>, vector<32x96xf32>, vector<2x96xf32> -> vector<2x96xf32>
      %265 = arith.addf %264, %31 : vector<2x96xf32>
      %266 = vector.extract_strided_slice %263 {offsets = [0, 0], sizes = [2, 32], strides = [1, 1]} : vector<2x96xf32> to vector<2x32xf32>
      %267 = vector.extract_strided_slice %265 {offsets = [0, 0], sizes = [2, 32], strides = [1, 1]} : vector<2x96xf32> to vector<2x32xf32>
      %268 = arith.addf %266, %267 : vector<2x32xf32>
      %269 = arith.negf %268 : vector<2x32xf32>
      %270 = math.exp %269 : vector<2x32xf32>
      %cst_94 = arith.constant 1.000000e+00 : f32
      %271 = vector.broadcast %cst_94 : f32 to vector<2x32xf32>
      %272 = arith.addf %271, %270 : vector<2x32xf32>
      %273 = arith.divf %271, %272 : vector<2x32xf32>
      %274 = vector.extract_strided_slice %263 {offsets = [0, 32], sizes = [2, 32], strides = [1, 1]} : vector<2x96xf32> to vector<2x32xf32>
      %275 = vector.extract_strided_slice %265 {offsets = [0, 32], sizes = [2, 32], strides = [1, 1]} : vector<2x96xf32> to vector<2x32xf32>
      %276 = arith.addf %274, %275 : vector<2x32xf32>
      %277 = arith.negf %276 : vector<2x32xf32>
      %278 = math.exp %277 : vector<2x32xf32>
      %cst_95 = arith.constant 1.000000e+00 : f32
      %279 = vector.broadcast %cst_95 : f32 to vector<2x32xf32>
      %280 = arith.addf %279, %278 : vector<2x32xf32>
      %281 = arith.divf %279, %280 : vector<2x32xf32>
      %282 = vector.extract_strided_slice %263 {offsets = [0, 64], sizes = [2, 32], strides = [1, 1]} : vector<2x96xf32> to vector<2x32xf32>
      %283 = vector.extract_strided_slice %265 {offsets = [0, 64], sizes = [2, 32], strides = [1, 1]} : vector<2x96xf32> to vector<2x32xf32>
      %284 = arith.mulf %273, %283 : vector<2x32xf32>
      %285 = arith.addf %282, %284 : vector<2x32xf32>
      %286 = math.tanh %285 : vector<2x32xf32>
      %cst_96 = arith.constant 1.000000e+00 : f32
      %287 = vector.broadcast %cst_96 : f32 to vector<2x32xf32>
      %288 = arith.subf %287, %281 : vector<2x32xf32>
      %289 = arith.mulf %288, %286 : vector<2x32xf32>
      %290 = arith.mulf %281, %231 : vector<2x32xf32>
      %291 = arith.addf %289, %290 : vector<2x32xf32>
      %cst_97 = arith.constant dense<0.000000e+00> : vector<2x96xf32>
      %292 = tpu.matmul %291, %27, %cst_97 {dimension_numbers = #tpu.dot_dimension_numbers<[1], [0], [0], [1], [0, 0, 1, 1], [], []>} : vector<2x32xf32>, vector<32x96xf32>, vector<2x96xf32> -> vector<2x96xf32>
      %293 = arith.addf %292, %39 : vector<2x96xf32>
      %cst_98 = arith.constant dense<0.000000e+00> : vector<2x96xf32>
      %294 = tpu.matmul %261, %25, %cst_98 {dimension_numbers = #tpu.dot_dimension_numbers<[1], [0], [0], [1], [0, 0, 1, 1], [], []>} : vector<2x32xf32>, vector<32x96xf32>, vector<2x96xf32> -> vector<2x96xf32>
      %295 = arith.addf %294, %35 : vector<2x96xf32>
      %296 = vector.extract_strided_slice %293 {offsets = [0, 0], sizes = [2, 32], strides = [1, 1]} : vector<2x96xf32> to vector<2x32xf32>
      %297 = vector.extract_strided_slice %295 {offsets = [0, 0], sizes = [2, 32], strides = [1, 1]} : vector<2x96xf32> to vector<2x32xf32>
      %298 = arith.addf %296, %297 : vector<2x32xf32>
      %299 = arith.negf %298 : vector<2x32xf32>
      %300 = math.exp %299 : vector<2x32xf32>
      %cst_99 = arith.constant 1.000000e+00 : f32
      %301 = vector.broadcast %cst_99 : f32 to vector<2x32xf32>
      %302 = arith.addf %301, %300 : vector<2x32xf32>
      %303 = arith.divf %301, %302 : vector<2x32xf32>
      %304 = vector.extract_strided_slice %293 {offsets = [0, 32], sizes = [2, 32], strides = [1, 1]} : vector<2x96xf32> to vector<2x32xf32>
      %305 = vector.extract_strided_slice %295 {offsets = [0, 32], sizes = [2, 32], strides = [1, 1]} : vector<2x96xf32> to vector<2x32xf32>
      %306 = arith.addf %304, %305 : vector<2x32xf32>
      %307 = arith.negf %306 : vector<2x32xf32>
      %308 = math.exp %307 : vector<2x32xf32>
      %cst_100 = arith.constant 1.000000e+00 : f32
      %309 = vector.broadcast %cst_100 : f32 to vector<2x32xf32>
      %310 = arith.addf %309, %308 : vector<2x32xf32>
      %311 = arith.divf %309, %310 : vector<2x32xf32>
      %312 = vector.extract_strided_slice %293 {offsets = [0, 64], sizes = [2, 32], strides = [1, 1]} : vector<2x96xf32> to vector<2x32xf32>
      %313 = vector.extract_strided_slice %295 {offsets = [0, 64], sizes = [2, 32], strides = [1, 1]} : vector<2x96xf32> to vector<2x32xf32>
      %314 = arith.mulf %303, %313 : vector<2x32xf32>
      %315 = arith.addf %312, %314 : vector<2x32xf32>
      %316 = math.tanh %315 : vector<2x32xf32>
      %cst_101 = arith.constant 1.000000e+00 : f32
      %317 = vector.broadcast %cst_101 : f32 to vector<2x32xf32>
      %318 = arith.subf %317, %311 : vector<2x32xf32>
      %319 = arith.mulf %318, %316 : vector<2x32xf32>
      %320 = arith.mulf %311, %261 : vector<2x32xf32>
      %321 = arith.addf %319, %320 : vector<2x32xf32>
      %322 = vector.extract_strided_slice %81 {offsets = [4, 0, 0], sizes = [1, 2, 96], strides = [1, 1, 1]} : vector<8x2x96xf32> to vector<1x2x96xf32>
      %323 = vector.shape_cast %322 : vector<1x2x96xf32> to vector<2x96xf32>
      %cst_102 = arith.constant dense<0.000000e+00> : vector<2x96xf32>
      %324 = tpu.matmul %291, %23, %cst_102 {dimension_numbers = #tpu.dot_dimension_numbers<[1], [0], [0], [1], [0, 0, 1, 1], [], []>} : vector<2x32xf32>, vector<32x96xf32>, vector<2x96xf32> -> vector<2x96xf32>
      %325 = arith.addf %324, %31 : vector<2x96xf32>
      %326 = vector.extract_strided_slice %323 {offsets = [0, 0], sizes = [2, 32], strides = [1, 1]} : vector<2x96xf32> to vector<2x32xf32>
      %327 = vector.extract_strided_slice %325 {offsets = [0, 0], sizes = [2, 32], strides = [1, 1]} : vector<2x96xf32> to vector<2x32xf32>
      %328 = arith.addf %326, %327 : vector<2x32xf32>
      %329 = arith.negf %328 : vector<2x32xf32>
      %330 = math.exp %329 : vector<2x32xf32>
      %cst_103 = arith.constant 1.000000e+00 : f32
      %331 = vector.broadcast %cst_103 : f32 to vector<2x32xf32>
      %332 = arith.addf %331, %330 : vector<2x32xf32>
      %333 = arith.divf %331, %332 : vector<2x32xf32>
      %334 = vector.extract_strided_slice %323 {offsets = [0, 32], sizes = [2, 32], strides = [1, 1]} : vector<2x96xf32> to vector<2x32xf32>
      %335 = vector.extract_strided_slice %325 {offsets = [0, 32], sizes = [2, 32], strides = [1, 1]} : vector<2x96xf32> to vector<2x32xf32>
      %336 = arith.addf %334, %335 : vector<2x32xf32>
      %337 = arith.negf %336 : vector<2x32xf32>
      %338 = math.exp %337 : vector<2x32xf32>
      %cst_104 = arith.constant 1.000000e+00 : f32
      %339 = vector.broadcast %cst_104 : f32 to vector<2x32xf32>
      %340 = arith.addf %339, %338 : vector<2x32xf32>
      %341 = arith.divf %339, %340 : vector<2x32xf32>
      %342 = vector.extract_strided_slice %323 {offsets = [0, 64], sizes = [2, 32], strides = [1, 1]} : vector<2x96xf32> to vector<2x32xf32>
      %343 = vector.extract_strided_slice %325 {offsets = [0, 64], sizes = [2, 32], strides = [1, 1]} : vector<2x96xf32> to vector<2x32xf32>
      %344 = arith.mulf %333, %343 : vector<2x32xf32>
      %345 = arith.addf %342, %344 : vector<2x32xf32>
      %346 = math.tanh %345 : vector<2x32xf32>
      %cst_105 = arith.constant 1.000000e+00 : f32
      %347 = vector.broadcast %cst_105 : f32 to vector<2x32xf32>
      %348 = arith.subf %347, %341 : vector<2x32xf32>
      %349 = arith.mulf %348, %346 : vector<2x32xf32>
      %350 = arith.mulf %341, %291 : vector<2x32xf32>
      %351 = arith.addf %349, %350 : vector<2x32xf32>
      %cst_106 = arith.constant dense<0.000000e+00> : vector<2x96xf32>
      %352 = tpu.matmul %351, %27, %cst_106 {dimension_numbers = #tpu.dot_dimension_numbers<[1], [0], [0], [1], [0, 0, 1, 1], [], []>} : vector<2x32xf32>, vector<32x96xf32>, vector<2x96xf32> -> vector<2x96xf32>
      %353 = arith.addf %352, %39 : vector<2x96xf32>
      %cst_107 = arith.constant dense<0.000000e+00> : vector<2x96xf32>
      %354 = tpu.matmul %321, %25, %cst_107 {dimension_numbers = #tpu.dot_dimension_numbers<[1], [0], [0], [1], [0, 0, 1, 1], [], []>} : vector<2x32xf32>, vector<32x96xf32>, vector<2x96xf32> -> vector<2x96xf32>
      %355 = arith.addf %354, %35 : vector<2x96xf32>
      %356 = vector.extract_strided_slice %353 {offsets = [0, 0], sizes = [2, 32], strides = [1, 1]} : vector<2x96xf32> to vector<2x32xf32>
      %357 = vector.extract_strided_slice %355 {offsets = [0, 0], sizes = [2, 32], strides = [1, 1]} : vector<2x96xf32> to vector<2x32xf32>
      %358 = arith.addf %356, %357 : vector<2x32xf32>
      %359 = arith.negf %358 : vector<2x32xf32>
      %360 = math.exp %359 : vector<2x32xf32>
      %cst_108 = arith.constant 1.000000e+00 : f32
      %361 = vector.broadcast %cst_108 : f32 to vector<2x32xf32>
      %362 = arith.addf %361, %360 : vector<2x32xf32>
      %363 = arith.divf %361, %362 : vector<2x32xf32>
      %364 = vector.extract_strided_slice %353 {offsets = [0, 32], sizes = [2, 32], strides = [1, 1]} : vector<2x96xf32> to vector<2x32xf32>
      %365 = vector.extract_strided_slice %355 {offsets = [0, 32], sizes = [2, 32], strides = [1, 1]} : vector<2x96xf32> to vector<2x32xf32>
      %366 = arith.addf %364, %365 : vector<2x32xf32>
      %367 = arith.negf %366 : vector<2x32xf32>
      %368 = math.exp %367 : vector<2x32xf32>
      %cst_109 = arith.constant 1.000000e+00 : f32
      %369 = vector.broadcast %cst_109 : f32 to vector<2x32xf32>
      %370 = arith.addf %369, %368 : vector<2x32xf32>
      %371 = arith.divf %369, %370 : vector<2x32xf32>
      %372 = vector.extract_strided_slice %353 {offsets = [0, 64], sizes = [2, 32], strides = [1, 1]} : vector<2x96xf32> to vector<2x32xf32>
      %373 = vector.extract_strided_slice %355 {offsets = [0, 64], sizes = [2, 32], strides = [1, 1]} : vector<2x96xf32> to vector<2x32xf32>
      %374 = arith.mulf %363, %373 : vector<2x32xf32>
      %375 = arith.addf %372, %374 : vector<2x32xf32>
      %376 = math.tanh %375 : vector<2x32xf32>
      %cst_110 = arith.constant 1.000000e+00 : f32
      %377 = vector.broadcast %cst_110 : f32 to vector<2x32xf32>
      %378 = arith.subf %377, %371 : vector<2x32xf32>
      %379 = arith.mulf %378, %376 : vector<2x32xf32>
      %380 = arith.mulf %371, %321 : vector<2x32xf32>
      %381 = arith.addf %379, %380 : vector<2x32xf32>
      %382 = vector.extract_strided_slice %81 {offsets = [5, 0, 0], sizes = [1, 2, 96], strides = [1, 1, 1]} : vector<8x2x96xf32> to vector<1x2x96xf32>
      %383 = vector.shape_cast %382 : vector<1x2x96xf32> to vector<2x96xf32>
      %cst_111 = arith.constant dense<0.000000e+00> : vector<2x96xf32>
      %384 = tpu.matmul %351, %23, %cst_111 {dimension_numbers = #tpu.dot_dimension_numbers<[1], [0], [0], [1], [0, 0, 1, 1], [], []>} : vector<2x32xf32>, vector<32x96xf32>, vector<2x96xf32> -> vector<2x96xf32>
      %385 = arith.addf %384, %31 : vector<2x96xf32>
      %386 = vector.extract_strided_slice %383 {offsets = [0, 0], sizes = [2, 32], strides = [1, 1]} : vector<2x96xf32> to vector<2x32xf32>
      %387 = vector.extract_strided_slice %385 {offsets = [0, 0], sizes = [2, 32], strides = [1, 1]} : vector<2x96xf32> to vector<2x32xf32>
      %388 = arith.addf %386, %387 : vector<2x32xf32>
      %389 = arith.negf %388 : vector<2x32xf32>
      %390 = math.exp %389 : vector<2x32xf32>
      %cst_112 = arith.constant 1.000000e+00 : f32
      %391 = vector.broadcast %cst_112 : f32 to vector<2x32xf32>
      %392 = arith.addf %391, %390 : vector<2x32xf32>
      %393 = arith.divf %391, %392 : vector<2x32xf32>
      %394 = vector.extract_strided_slice %383 {offsets = [0, 32], sizes = [2, 32], strides = [1, 1]} : vector<2x96xf32> to vector<2x32xf32>
      %395 = vector.extract_strided_slice %385 {offsets = [0, 32], sizes = [2, 32], strides = [1, 1]} : vector<2x96xf32> to vector<2x32xf32>
      %396 = arith.addf %394, %395 : vector<2x32xf32>
      %397 = arith.negf %396 : vector<2x32xf32>
      %398 = math.exp %397 : vector<2x32xf32>
      %cst_113 = arith.constant 1.000000e+00 : f32
      %399 = vector.broadcast %cst_113 : f32 to vector<2x32xf32>
      %400 = arith.addf %399, %398 : vector<2x32xf32>
      %401 = arith.divf %399, %400 : vector<2x32xf32>
      %402 = vector.extract_strided_slice %383 {offsets = [0, 64], sizes = [2, 32], strides = [1, 1]} : vector<2x96xf32> to vector<2x32xf32>
      %403 = vector.extract_strided_slice %385 {offsets = [0, 64], sizes = [2, 32], strides = [1, 1]} : vector<2x96xf32> to vector<2x32xf32>
      %404 = arith.mulf %393, %403 : vector<2x32xf32>
      %405 = arith.addf %402, %404 : vector<2x32xf32>
      %406 = math.tanh %405 : vector<2x32xf32>
      %cst_114 = arith.constant 1.000000e+00 : f32
      %407 = vector.broadcast %cst_114 : f32 to vector<2x32xf32>
      %408 = arith.subf %407, %401 : vector<2x32xf32>
      %409 = arith.mulf %408, %406 : vector<2x32xf32>
      %410 = arith.mulf %401, %351 : vector<2x32xf32>
      %411 = arith.addf %409, %410 : vector<2x32xf32>
      %cst_115 = arith.constant dense<0.000000e+00> : vector<2x96xf32>
      %412 = tpu.matmul %411, %27, %cst_115 {dimension_numbers = #tpu.dot_dimension_numbers<[1], [0], [0], [1], [0, 0, 1, 1], [], []>} : vector<2x32xf32>, vector<32x96xf32>, vector<2x96xf32> -> vector<2x96xf32>
      %413 = arith.addf %412, %39 : vector<2x96xf32>
      %cst_116 = arith.constant dense<0.000000e+00> : vector<2x96xf32>
      %414 = tpu.matmul %381, %25, %cst_116 {dimension_numbers = #tpu.dot_dimension_numbers<[1], [0], [0], [1], [0, 0, 1, 1], [], []>} : vector<2x32xf32>, vector<32x96xf32>, vector<2x96xf32> -> vector<2x96xf32>
      %415 = arith.addf %414, %35 : vector<2x96xf32>
      %416 = vector.extract_strided_slice %413 {offsets = [0, 0], sizes = [2, 32], strides = [1, 1]} : vector<2x96xf32> to vector<2x32xf32>
      %417 = vector.extract_strided_slice %415 {offsets = [0, 0], sizes = [2, 32], strides = [1, 1]} : vector<2x96xf32> to vector<2x32xf32>
      %418 = arith.addf %416, %417 : vector<2x32xf32>
      %419 = arith.negf %418 : vector<2x32xf32>
      %420 = math.exp %419 : vector<2x32xf32>
      %cst_117 = arith.constant 1.000000e+00 : f32
      %421 = vector.broadcast %cst_117 : f32 to vector<2x32xf32>
      %422 = arith.addf %421, %420 : vector<2x32xf32>
      %423 = arith.divf %421, %422 : vector<2x32xf32>
      %424 = vector.extract_strided_slice %413 {offsets = [0, 32], sizes = [2, 32], strides = [1, 1]} : vector<2x96xf32> to vector<2x32xf32>
      %425 = vector.extract_strided_slice %415 {offsets = [0, 32], sizes = [2, 32], strides = [1, 1]} : vector<2x96xf32> to vector<2x32xf32>
      %426 = arith.addf %424, %425 : vector<2x32xf32>
      %427 = arith.negf %426 : vector<2x32xf32>
      %428 = math.exp %427 : vector<2x32xf32>
      %cst_118 = arith.constant 1.000000e+00 : f32
      %429 = vector.broadcast %cst_118 : f32 to vector<2x32xf32>
      %430 = arith.addf %429, %428 : vector<2x32xf32>
      %431 = arith.divf %429, %430 : vector<2x32xf32>
      %432 = vector.extract_strided_slice %413 {offsets = [0, 64], sizes = [2, 32], strides = [1, 1]} : vector<2x96xf32> to vector<2x32xf32>
      %433 = vector.extract_strided_slice %415 {offsets = [0, 64], sizes = [2, 32], strides = [1, 1]} : vector<2x96xf32> to vector<2x32xf32>
      %434 = arith.mulf %423, %433 : vector<2x32xf32>
      %435 = arith.addf %432, %434 : vector<2x32xf32>
      %436 = math.tanh %435 : vector<2x32xf32>
      %cst_119 = arith.constant 1.000000e+00 : f32
      %437 = vector.broadcast %cst_119 : f32 to vector<2x32xf32>
      %438 = arith.subf %437, %431 : vector<2x32xf32>
      %439 = arith.mulf %438, %436 : vector<2x32xf32>
      %440 = arith.mulf %431, %381 : vector<2x32xf32>
      %441 = arith.addf %439, %440 : vector<2x32xf32>
      %442 = vector.extract_strided_slice %81 {offsets = [6, 0, 0], sizes = [1, 2, 96], strides = [1, 1, 1]} : vector<8x2x96xf32> to vector<1x2x96xf32>
      %443 = vector.shape_cast %442 : vector<1x2x96xf32> to vector<2x96xf32>
      %cst_120 = arith.constant dense<0.000000e+00> : vector<2x96xf32>
      %444 = tpu.matmul %411, %23, %cst_120 {dimension_numbers = #tpu.dot_dimension_numbers<[1], [0], [0], [1], [0, 0, 1, 1], [], []>} : vector<2x32xf32>, vector<32x96xf32>, vector<2x96xf32> -> vector<2x96xf32>
      %445 = arith.addf %444, %31 : vector<2x96xf32>
      %446 = vector.extract_strided_slice %443 {offsets = [0, 0], sizes = [2, 32], strides = [1, 1]} : vector<2x96xf32> to vector<2x32xf32>
      %447 = vector.extract_strided_slice %445 {offsets = [0, 0], sizes = [2, 32], strides = [1, 1]} : vector<2x96xf32> to vector<2x32xf32>
      %448 = arith.addf %446, %447 : vector<2x32xf32>
      %449 = arith.negf %448 : vector<2x32xf32>
      %450 = math.exp %449 : vector<2x32xf32>
      %cst_121 = arith.constant 1.000000e+00 : f32
      %451 = vector.broadcast %cst_121 : f32 to vector<2x32xf32>
      %452 = arith.addf %451, %450 : vector<2x32xf32>
      %453 = arith.divf %451, %452 : vector<2x32xf32>
      %454 = vector.extract_strided_slice %443 {offsets = [0, 32], sizes = [2, 32], strides = [1, 1]} : vector<2x96xf32> to vector<2x32xf32>
      %455 = vector.extract_strided_slice %445 {offsets = [0, 32], sizes = [2, 32], strides = [1, 1]} : vector<2x96xf32> to vector<2x32xf32>
      %456 = arith.addf %454, %455 : vector<2x32xf32>
      %457 = arith.negf %456 : vector<2x32xf32>
      %458 = math.exp %457 : vector<2x32xf32>
      %cst_122 = arith.constant 1.000000e+00 : f32
      %459 = vector.broadcast %cst_122 : f32 to vector<2x32xf32>
      %460 = arith.addf %459, %458 : vector<2x32xf32>
      %461 = arith.divf %459, %460 : vector<2x32xf32>
      %462 = vector.extract_strided_slice %443 {offsets = [0, 64], sizes = [2, 32], strides = [1, 1]} : vector<2x96xf32> to vector<2x32xf32>
      %463 = vector.extract_strided_slice %445 {offsets = [0, 64], sizes = [2, 32], strides = [1, 1]} : vector<2x96xf32> to vector<2x32xf32>
      %464 = arith.mulf %453, %463 : vector<2x32xf32>
      %465 = arith.addf %462, %464 : vector<2x32xf32>
      %466 = math.tanh %465 : vector<2x32xf32>
      %cst_123 = arith.constant 1.000000e+00 : f32
      %467 = vector.broadcast %cst_123 : f32 to vector<2x32xf32>
      %468 = arith.subf %467, %461 : vector<2x32xf32>
      %469 = arith.mulf %468, %466 : vector<2x32xf32>
      %470 = arith.mulf %461, %411 : vector<2x32xf32>
      %471 = arith.addf %469, %470 : vector<2x32xf32>
      %cst_124 = arith.constant dense<0.000000e+00> : vector<2x96xf32>
      %472 = tpu.matmul %471, %27, %cst_124 {dimension_numbers = #tpu.dot_dimension_numbers<[1], [0], [0], [1], [0, 0, 1, 1], [], []>} : vector<2x32xf32>, vector<32x96xf32>, vector<2x96xf32> -> vector<2x96xf32>
      %473 = arith.addf %472, %39 : vector<2x96xf32>
      %cst_125 = arith.constant dense<0.000000e+00> : vector<2x96xf32>
      %474 = tpu.matmul %441, %25, %cst_125 {dimension_numbers = #tpu.dot_dimension_numbers<[1], [0], [0], [1], [0, 0, 1, 1], [], []>} : vector<2x32xf32>, vector<32x96xf32>, vector<2x96xf32> -> vector<2x96xf32>
      %475 = arith.addf %474, %35 : vector<2x96xf32>
      %476 = vector.extract_strided_slice %473 {offsets = [0, 0], sizes = [2, 32], strides = [1, 1]} : vector<2x96xf32> to vector<2x32xf32>
      %477 = vector.extract_strided_slice %475 {offsets = [0, 0], sizes = [2, 32], strides = [1, 1]} : vector<2x96xf32> to vector<2x32xf32>
      %478 = arith.addf %476, %477 : vector<2x32xf32>
      %479 = arith.negf %478 : vector<2x32xf32>
      %480 = math.exp %479 : vector<2x32xf32>
      %cst_126 = arith.constant 1.000000e+00 : f32
      %481 = vector.broadcast %cst_126 : f32 to vector<2x32xf32>
      %482 = arith.addf %481, %480 : vector<2x32xf32>
      %483 = arith.divf %481, %482 : vector<2x32xf32>
      %484 = vector.extract_strided_slice %473 {offsets = [0, 32], sizes = [2, 32], strides = [1, 1]} : vector<2x96xf32> to vector<2x32xf32>
      %485 = vector.extract_strided_slice %475 {offsets = [0, 32], sizes = [2, 32], strides = [1, 1]} : vector<2x96xf32> to vector<2x32xf32>
      %486 = arith.addf %484, %485 : vector<2x32xf32>
      %487 = arith.negf %486 : vector<2x32xf32>
      %488 = math.exp %487 : vector<2x32xf32>
      %cst_127 = arith.constant 1.000000e+00 : f32
      %489 = vector.broadcast %cst_127 : f32 to vector<2x32xf32>
      %490 = arith.addf %489, %488 : vector<2x32xf32>
      %491 = arith.divf %489, %490 : vector<2x32xf32>
      %492 = vector.extract_strided_slice %473 {offsets = [0, 64], sizes = [2, 32], strides = [1, 1]} : vector<2x96xf32> to vector<2x32xf32>
      %493 = vector.extract_strided_slice %475 {offsets = [0, 64], sizes = [2, 32], strides = [1, 1]} : vector<2x96xf32> to vector<2x32xf32>
      %494 = arith.mulf %483, %493 : vector<2x32xf32>
      %495 = arith.addf %492, %494 : vector<2x32xf32>
      %496 = math.tanh %495 : vector<2x32xf32>
      %cst_128 = arith.constant 1.000000e+00 : f32
      %497 = vector.broadcast %cst_128 : f32 to vector<2x32xf32>
      %498 = arith.subf %497, %491 : vector<2x32xf32>
      %499 = arith.mulf %498, %496 : vector<2x32xf32>
      %500 = arith.mulf %491, %441 : vector<2x32xf32>
      %501 = arith.addf %499, %500 : vector<2x32xf32>
      %502 = vector.extract_strided_slice %81 {offsets = [7, 0, 0], sizes = [1, 2, 96], strides = [1, 1, 1]} : vector<8x2x96xf32> to vector<1x2x96xf32>
      %503 = vector.shape_cast %502 : vector<1x2x96xf32> to vector<2x96xf32>
      %cst_129 = arith.constant dense<0.000000e+00> : vector<2x96xf32>
      %504 = tpu.matmul %471, %23, %cst_129 {dimension_numbers = #tpu.dot_dimension_numbers<[1], [0], [0], [1], [0, 0, 1, 1], [], []>} : vector<2x32xf32>, vector<32x96xf32>, vector<2x96xf32> -> vector<2x96xf32>
      %505 = arith.addf %504, %31 : vector<2x96xf32>
      %506 = vector.extract_strided_slice %503 {offsets = [0, 0], sizes = [2, 32], strides = [1, 1]} : vector<2x96xf32> to vector<2x32xf32>
      %507 = vector.extract_strided_slice %505 {offsets = [0, 0], sizes = [2, 32], strides = [1, 1]} : vector<2x96xf32> to vector<2x32xf32>
      %508 = arith.addf %506, %507 : vector<2x32xf32>
      %509 = arith.negf %508 : vector<2x32xf32>
      %510 = math.exp %509 : vector<2x32xf32>
      %cst_130 = arith.constant 1.000000e+00 : f32
      %511 = vector.broadcast %cst_130 : f32 to vector<2x32xf32>
      %512 = arith.addf %511, %510 : vector<2x32xf32>
      %513 = arith.divf %511, %512 : vector<2x32xf32>
      %514 = vector.extract_strided_slice %503 {offsets = [0, 32], sizes = [2, 32], strides = [1, 1]} : vector<2x96xf32> to vector<2x32xf32>
      %515 = vector.extract_strided_slice %505 {offsets = [0, 32], sizes = [2, 32], strides = [1, 1]} : vector<2x96xf32> to vector<2x32xf32>
      %516 = arith.addf %514, %515 : vector<2x32xf32>
      %517 = arith.negf %516 : vector<2x32xf32>
      %518 = math.exp %517 : vector<2x32xf32>
      %cst_131 = arith.constant 1.000000e+00 : f32
      %519 = vector.broadcast %cst_131 : f32 to vector<2x32xf32>
      %520 = arith.addf %519, %518 : vector<2x32xf32>
      %521 = arith.divf %519, %520 : vector<2x32xf32>
      %522 = vector.extract_strided_slice %503 {offsets = [0, 64], sizes = [2, 32], strides = [1, 1]} : vector<2x96xf32> to vector<2x32xf32>
      %523 = vector.extract_strided_slice %505 {offsets = [0, 64], sizes = [2, 32], strides = [1, 1]} : vector<2x96xf32> to vector<2x32xf32>
      %524 = arith.mulf %513, %523 : vector<2x32xf32>
      %525 = arith.addf %522, %524 : vector<2x32xf32>
      %526 = math.tanh %525 : vector<2x32xf32>
      %cst_132 = arith.constant 1.000000e+00 : f32
      %527 = vector.broadcast %cst_132 : f32 to vector<2x32xf32>
      %528 = arith.subf %527, %521 : vector<2x32xf32>
      %529 = arith.mulf %528, %526 : vector<2x32xf32>
      %530 = arith.mulf %521, %471 : vector<2x32xf32>
      %531 = arith.addf %529, %530 : vector<2x32xf32>
      %cst_133 = arith.constant dense<0.000000e+00> : vector<2x96xf32>
      %532 = tpu.matmul %531, %27, %cst_133 {dimension_numbers = #tpu.dot_dimension_numbers<[1], [0], [0], [1], [0, 0, 1, 1], [], []>} : vector<2x32xf32>, vector<32x96xf32>, vector<2x96xf32> -> vector<2x96xf32>
      %533 = arith.addf %532, %39 : vector<2x96xf32>
      %cst_134 = arith.constant dense<0.000000e+00> : vector<2x96xf32>
      %534 = tpu.matmul %501, %25, %cst_134 {dimension_numbers = #tpu.dot_dimension_numbers<[1], [0], [0], [1], [0, 0, 1, 1], [], []>} : vector<2x32xf32>, vector<32x96xf32>, vector<2x96xf32> -> vector<2x96xf32>
      %535 = arith.addf %534, %35 : vector<2x96xf32>
      %536 = vector.extract_strided_slice %533 {offsets = [0, 0], sizes = [2, 32], strides = [1, 1]} : vector<2x96xf32> to vector<2x32xf32>
      %537 = vector.extract_strided_slice %535 {offsets = [0, 0], sizes = [2, 32], strides = [1, 1]} : vector<2x96xf32> to vector<2x32xf32>
      %538 = arith.addf %536, %537 : vector<2x32xf32>
      %539 = arith.negf %538 : vector<2x32xf32>
      %540 = math.exp %539 : vector<2x32xf32>
      %cst_135 = arith.constant 1.000000e+00 : f32
      %541 = vector.broadcast %cst_135 : f32 to vector<2x32xf32>
      %542 = arith.addf %541, %540 : vector<2x32xf32>
      %543 = arith.divf %541, %542 : vector<2x32xf32>
      %544 = vector.extract_strided_slice %533 {offsets = [0, 32], sizes = [2, 32], strides = [1, 1]} : vector<2x96xf32> to vector<2x32xf32>
      %545 = vector.extract_strided_slice %535 {offsets = [0, 32], sizes = [2, 32], strides = [1, 1]} : vector<2x96xf32> to vector<2x32xf32>
      %546 = arith.addf %544, %545 : vector<2x32xf32>
      %547 = arith.negf %546 : vector<2x32xf32>
      %548 = math.exp %547 : vector<2x32xf32>
      %cst_136 = arith.constant 1.000000e+00 : f32
      %549 = vector.broadcast %cst_136 : f32 to vector<2x32xf32>
      %550 = arith.addf %549, %548 : vector<2x32xf32>
      %551 = arith.divf %549, %550 : vector<2x32xf32>
      %552 = vector.extract_strided_slice %533 {offsets = [0, 64], sizes = [2, 32], strides = [1, 1]} : vector<2x96xf32> to vector<2x32xf32>
      %553 = vector.extract_strided_slice %535 {offsets = [0, 64], sizes = [2, 32], strides = [1, 1]} : vector<2x96xf32> to vector<2x32xf32>
      %554 = arith.mulf %543, %553 : vector<2x32xf32>
      %555 = arith.addf %552, %554 : vector<2x32xf32>
      %556 = math.tanh %555 : vector<2x32xf32>
      %cst_137 = arith.constant 1.000000e+00 : f32
      %557 = vector.broadcast %cst_137 : f32 to vector<2x32xf32>
      %558 = arith.subf %557, %551 : vector<2x32xf32>
      %559 = arith.mulf %558, %556 : vector<2x32xf32>
      %560 = arith.mulf %551, %501 : vector<2x32xf32>
      %561 = arith.addf %559, %560 : vector<2x32xf32>
      %562 = vector.shape_cast %141 : vector<2x32xf32> to vector<1x2x32xf32>
      %563 = vector.shape_cast %201 : vector<2x32xf32> to vector<1x2x32xf32>
      %564 = vector.shape_cast %261 : vector<2x32xf32> to vector<1x2x32xf32>
      %565 = vector.shape_cast %321 : vector<2x32xf32> to vector<1x2x32xf32>
      %566 = vector.shape_cast %381 : vector<2x32xf32> to vector<1x2x32xf32>
      %567 = vector.shape_cast %441 : vector<2x32xf32> to vector<1x2x32xf32>
      %568 = vector.shape_cast %501 : vector<2x32xf32> to vector<1x2x32xf32>
      %569 = vector.shape_cast %561 : vector<2x32xf32> to vector<1x2x32xf32>
      %570 = tpu.concatenate %562, %563, %564, %565, %566, %567, %568, %569 in 0 : vector<1x2x32xf32>, vector<1x2x32xf32>, vector<1x2x32xf32>, vector<1x2x32xf32>, vector<1x2x32xf32>, vector<1x2x32xf32>, vector<1x2x32xf32>, vector<1x2x32xf32> -> vector<8x2x32xf32>
      %571 = arith.index_cast %79 : i32 to index
      %c0_138 = arith.constant 0 : index
      %c0_139 = arith.constant 0 : index
      %572 = vector.load %arg17[%571, %c0_138, %c0_139] : memref<16x2x32xf32, #tpu.memory_space<vmem>>, vector<8x2x32xf32>
      tpu.vector_store %arg17[%571, %c0_138, %c0_139], %570 {strides = array<i32>} : memref<16x2x32xf32, #tpu.memory_space<vmem>>, vector<8x2x32xf32>,
      scf.yield %531, %561 : vector<2x32xf32>, vector<2x32xf32>
    }
    %c2_i32_39 = arith.constant 2 : i32
    %c0_40 = arith.constant 0 : index
    %c0_41 = arith.constant 0 : index
    %c0_42 = arith.constant 0 : index
    %46 = vector.load %arg15[%c0_40, %c0_41, %c0_42] : memref<2x2x32xf32, #tpu.memory_space<vmem>>, vector<1x2x32xf32>
    %47 = vector.shape_cast %46 : vector<1x2x32xf32> to vector<2x32xf32>
    %48 = vector.shape_cast %45#0 : vector<2x32xf32> to vector<1x2x32xf32>
    tpu.vector_store %arg15[%c0_40, %c0_41, %c0_42], %48 {strides = array<i32>} : memref<2x2x32xf32, #tpu.memory_space<vmem>>, vector<1x2x32xf32>,
    %c1_43 = arith.constant 1 : index
    %c0_44 = arith.constant 0 : index
    %c0_45 = arith.constant 0 : index
    %49 = vector.load %arg15[%c1_43, %c0_44, %c0_45] : memref<2x2x32xf32, #tpu.memory_space<vmem>>, vector<1x2x32xf32>
    %50 = vector.shape_cast %49 : vector<1x2x32xf32> to vector<2x32xf32>
    %51 = vector.shape_cast %45#1 : vector<2x32xf32> to vector<1x2x32xf32>
    tpu.vector_store %arg15[%c1_43, %c0_44, %c0_45], %51 {strides = array<i32>} : memref<2x2x32xf32, #tpu.memory_space<vmem>>, vector<1x2x32xf32>,
    %c1_i32_46 = arith.constant 1 : i32
    %52 = arith.cmpi eq, %arg1, %c1_i32_46 : i32
    %53 = arith.extui %52 : i1 to i32
    %c0_i32_47 = arith.constant 0 : i32
    %54 = arith.cmpi ne, %53, %c0_i32_47 : i32
    scf.if %54 {
      %c0_64 = arith.constant 0 : index
      %c0_65 = arith.constant 0 : index
      %c0_66 = arith.constant 0 : index
      %78 = vector.load %arg15[%c0_64, %c0_65, %c0_66] : memref<2x2x32xf32, #tpu.memory_space<vmem>>, vector<2x2x32xf32>
      %c0_67 = arith.constant 0 : index
      %c0_68 = arith.constant 0 : index
      %c0_69 = arith.constant 0 : index
      %79 = vector.load %arg14[%c0_67, %c0_68, %c0_69] : memref<2x2x32xf32, #tpu.memory_space<vmem>>, vector<2x2x32xf32>
      tpu.vector_store %arg14[%c0_67, %c0_68, %c0_69], %78 {strides = array<i32>} : memref<2x2x32xf32, #tpu.memory_space<vmem>>, vector<2x2x32xf32>,
    } else {
    }
    %c0_48 = arith.constant 0 : index
    %c0_49 = arith.constant 0 : index
    %c0_50 = arith.constant 0 : index
    %55 = vector.load %arg17[%c0_48, %c0_49, %c0_50] : memref<16x2x32xf32, #tpu.memory_space<vmem>>, vector<16x2x32xf32>
    %56 = vector.shape_cast %55 : vector<16x2x32xf32> to vector<32x32xf32>
    %c0_51 = arith.constant 0 : index
    %c0_52 = arith.constant 0 : index
    %57 = vector.load %arg11[%c0_51, %c0_52] : memref<32x8xf32, #tpu.memory_space<vmem>>, vector<32x8xf32>
    %cst_53 = arith.constant dense<0.000000e+00> : vector<32x8xf32>
    %58 = tpu.matmul %56, %57, %cst_53 {dimension_numbers = #tpu.dot_dimension_numbers<[1], [0], [0], [1], [0, 0, 1, 1], [], []>} : vector<32x32xf32>, vector<32x8xf32>, vector<32x8xf32> -> vector<32x8xf32>
    %c0_54 = arith.constant 0 : index
    %c0_55 = arith.constant 0 : index
    %59 = vector.load %arg12[%c0_54, %c0_55] : memref<1x8xf32, #tpu.memory_space<vmem>>, vector<1x8xf32>
    %60 = vector.broadcast %59 : vector<1x8xf32> to vector<32x8xf32>
    %61 = arith.addf %58, %60 : vector<32x8xf32>
    %62 = arith.negf %61 : vector<32x8xf32>
    %63 = math.exp %62 : vector<32x8xf32>
    %cst_56 = arith.constant 1.000000e+00 : f32
    %64 = vector.broadcast %cst_56 : f32 to vector<32x8xf32>
    %65 = arith.addf %64, %63 : vector<32x8xf32>
    %66 = arith.divf %64, %65 : vector<32x8xf32>
    %67 = vector.shape_cast %66 : vector<32x8xf32> to vector<16x2x8xf32>
    %68 = tpu.transpose %67, [1, 0, 2] : vector<16x2x8xf32> -> vector<2x16x8xf32>
    %69 = vector.shape_cast %68 : vector<2x16x8xf32> to vector<2x128xf32>
    %c0_57 = arith.constant 0 : index
    %c0_58 = arith.constant 0 : index
    %70 = vector.load %arg2[%c0_57, %c0_58] : memref<2x128xf32, #tpu.memory_space<vmem>>, vector<2x128xf32>
    %c0_59 = arith.constant 0 : index
    %c0_60 = arith.constant 0 : index
    %71 = vector.load %arg3[%c0_59, %c0_60] : memref<2x128xf32, #tpu.memory_space<vmem>>, vector<2x128xf32>
    %72 = arith.mulf %71, %70 : vector<2x128xf32>
    %cst_61 = arith.constant 1.000000e+00 : f32
    %73 = vector.broadcast %cst_61 : f32 to vector<2x128xf32>
    %74 = arith.subf %73, %71 : vector<2x128xf32>
    %75 = arith.mulf %74, %69 : vector<2x128xf32>
    %76 = arith.addf %72, %75 : vector<2x128xf32>
    %c0_62 = arith.constant 0 : index
    %c0_63 = arith.constant 0 : index
    %77 = vector.load %arg13[%c0_62, %c0_63] : memref<2x128xf32, #tpu.memory_space<vmem>>, vector<2x128xf32>
    tpu.vector_store %arg13[%c0_62, %c0_63], %76 {strides = array<i32>} : memref<2x128xf32, #tpu.memory_space<vmem>>, vector<2x128xf32>,
    return
  }
  func.func @transform_0(%arg0: i32, %arg1: i32) -> (i32, i32) {
    %c0_i32 = arith.constant 0 : i32
    return %arg0, %arg1 : i32, i32
  }
  func.func @transform_1(%arg0: i32, %arg1: i32) -> (i32, i32) {
    %c0_i32 = arith.constant 0 : i32
    return %arg0, %arg1 : i32, i32
  }
  func.func @transform_2(%arg0: i32, %arg1: i32) -> (i32, i32) {
    %c0_i32 = arith.constant 0 : i32
    return %arg0, %arg1 : i32, i32
  }
  func.func @transform_3(%arg0: i32, %arg1: i32) -> (i32, i32, i32) {
    %c0_i32 = arith.constant 0 : i32
    %c0_i32_0 = arith.constant 0 : i32
    %c0_i32_1 = arith.constant 0 : i32
    return %c0_i32, %arg0, %c0_i32_0 : i32, i32, i32
  }
  func.func @transform_4(%arg0: i32, %arg1: i32) -> (i32, i32) {
    %c0_i32 = arith.constant 0 : i32
    %c0_i32_0 = arith.constant 0 : i32
    %c0_i32_1 = arith.constant 0 : i32
    return %c0_i32, %c0_i32_0 : i32, i32
  }
  func.func @transform_5(%arg0: i32, %arg1: i32) -> (i32, i32, i32) {
    %c0_i32 = arith.constant 0 : i32
    %c0_i32_0 = arith.constant 0 : i32
    %c0_i32_1 = arith.constant 0 : i32
    %c0_i32_2 = arith.constant 0 : i32
    return %c0_i32, %c0_i32_0, %c0_i32_1 : i32, i32, i32
  }
  func.func @transform_6(%arg0: i32, %arg1: i32) -> (i32, i32, i32) {
    %c0_i32 = arith.constant 0 : i32
    %c0_i32_0 = arith.constant 0 : i32
    %c0_i32_1 = arith.constant 0 : i32
    %c0_i32_2 = arith.constant 0 : i32
    return %c0_i32, %c0_i32_0, %c0_i32_1 : i32, i32, i32
  }
  func.func @transform_7(%arg0: i32, %arg1: i32) -> (i32, i32, i32) {
    %c0_i32 = arith.constant 0 : i32
    %c0_i32_0 = arith.constant 0 : i32
    %c0_i32_1 = arith.constant 0 : i32
    %c0_i32_2 = arith.constant 0 : i32
    return %c0_i32, %c0_i32_0, %c0_i32_1 : i32, i32, i32
  }
  func.func @transform_8(%arg0: i32, %arg1: i32) -> (i32, i32, i32) {
    %c0_i32 = arith.constant 0 : i32
    %c0_i32_0 = arith.constant 0 : i32
    %c0_i32_1 = arith.constant 0 : i32
    %c0_i32_2 = arith.constant 0 : i32
    return %c0_i32, %c0_i32_0, %c0_i32_1 : i32, i32, i32
  }
  func.func @transform_9(%arg0: i32, %arg1: i32) -> (i32, i32) {
    %c0_i32 = arith.constant 0 : i32
    %c0_i32_0 = arith.constant 0 : i32
    %c0_i32_1 = arith.constant 0 : i32
    return %c0_i32, %c0_i32_0 : i32, i32
  }
  func.func @transform_10(%arg0: i32, %arg1: i32) -> (i32, i32) {
    %c0_i32 = arith.constant 0 : i32
    %c0_i32_0 = arith.constant 0 : i32
    %c0_i32_1 = arith.constant 0 : i32
    return %c0_i32, %c0_i32_0 : i32, i32
  }
  func.func @transform_11(%arg0: i32, %arg1: i32) -> (i32, i32) {
    %c0_i32 = arith.constant 0 : i32
    return %arg0, %arg1 : i32, i32
  }
  func.func @transform_12(%arg0: i32, %arg1: i32) -> (i32, i32, i32) {
    %c0_i32 = arith.constant 0 : i32
    %c0_i32_0 = arith.constant 0 : i32
    %c0_i32_1 = arith.constant 0 : i32
    return %c0_i32, %arg0, %c0_i32_0 : i32, i32, i32
  }
}

</mosaic_0001>

<llo_original>
// kernel: tpu_custom_call.1
$region0: #{tpu_custom_call.1}
  #allocation0 [shape = 'u32[]', space=smem, size = 0x4, offset = 0x4, fixed_abs, tag = 'smem constant byte address 0x4 - core index']
  #allocation1 [shape = 'u32[144,128]{1,0:T(1,128)}', space=vmem, size = 0x12000, scoped, tag = 'internal scratch']
  #allocation2 [shape = 'f32[2,2,32]{2,1,0:T(2,128)}', space=vmem, size = 0x800, scoped, tag = 'scratch operand']
  #allocation3 [shape = 'f32[16,2,96]{2,1,0:T(2,128)}', space=vmem, size = 0x4000, scoped, tag = 'scratch operand']
  #allocation4 [shape = 'f32[16,2,32]{2,1,0:T(2,128)}', space=vmem, size = 0x4000, scoped, tag = 'scratch operand']
  %s0 = inlined_call_operand.vmem [shape: f32[2,256], index: 0, kind: input, shape index: {}]
  %s1 = inlined_call_operand.vmem [shape: f32[2,256], index: 1, kind: input, shape index: {}]
  %s2 = inlined_call_operand.hbm [shape: f32[2,256], index: 2, kind: input, shape index: {}]
  %s3 = inlined_call_operand.hbm [shape: f32[2,2,32], index: 3, kind: input, shape index: {}]
  %s4 = inlined_call_operand.vmem [shape: f32[8,96], index: 4, kind: input, shape index: {}]
  %s5 = inlined_call_operand.vmem [shape: f32[1,32,96], index: 5, kind: input, shape index: {}]
  %s6 = inlined_call_operand.hbm [shape: f32[2,32,96], index: 6, kind: input, shape index: {}]
  %s7 = inlined_call_operand.hbm [shape: f32[2,1,96], index: 7, kind: input, shape index: {}]
  %s8 = inlined_call_operand.hbm [shape: f32[2,1,96], index: 8, kind: input, shape index: {}]
  %s9 = inlined_call_operand.vmem [shape: f32[32,8], index: 9, kind: input, shape index: {}]
  %s10 = inlined_call_operand.vmem [shape: f32[1,8], index: 10, kind: input, shape index: {}]
  %s11 = inlined_call_operand.hbm [shape: f32[2,256], index: 11, kind: output, shape index: {0}]
  %s12 = inlined_call_operand.hbm [shape: f32[2,2,32], index: 12, kind: output, shape index: {1}]
  %13 = xla_tuple %s11, %s12
  %s14 = sld [smem:[#allocation0]]
  $region120: #{tpu_custom_call.1} parent=0
    _
  %s16 = ssub.s32 1, %s14
  %s17 = scalar_select 0, %s16, %s14
  $region1: #{tpu_custom_call.1} parent=0
    #allocation5 [shape = 'u8[2048]{0}', space=vmem, size = 0x800, scoped, tag = 'input window, operand 2']
    #allocation6 [shape = 's32[2]{0}', space=sflag, size = 0x8, scoped, tag = 'scoped memory for tpu_custom_call.1']
    #allocation7 [shape = 's32[2]{0}', space=sflag, size = 0x8, scoped, tag = 'scoped memory for tpu_custom_call.1']
    #allocation8 [shape = 'u8[2048]{0}', space=vmem, size = 0x800, scoped, tag = 'input window, operand 3, single buffered']
    #allocation9 [shape = 's32[1]{0}', space=sflag, size = 0x4, scoped, tag = 'scoped memory for tpu_custom_call.1']
    #allocation10 [shape = 'u8[32768]{0}', space=vmem, size = 0x8000, scoped, tag = 'input window, operand 6, single buffered']
    #allocation11 [shape = 'u8[1024]{0}', space=vmem, size = 0x400, scoped, tag = 'input window, operand 7, single buffered']
    #allocation12 [shape = 's32[1]{0}', space=sflag, size = 0x4, scoped, tag = 'scoped memory for tpu_custom_call.1']
    #allocation13 [shape = 'u8[1024]{0}', space=vmem, size = 0x400, scoped, tag = 'input window, operand 8, single buffered']
    #allocation14 [shape = 'u8[2048]{0}', space=vmem, size = 0x800, scoped, tag = 'output window, operand 0']
    #allocation15 [shape = 'u8[2048]{0}', space=vmem, size = 0x800, scoped, tag = 'output window, operand 1, single buffered']
    #allocation16 [shape = 's32[1]{0}', space=sflag, size = 0x4, scoped, tag = 'scoped memory for tpu_custom_call.1']
    %18 = vsyncpa [#allocation6], 0
    %s19 = scalar_lea.sflag [#allocation6], 1
    %20 = vsyncpa %s19, 0
    %21 = vsyncpa [#allocation9], 0
    %22 = vsyncpa [#allocation12], 0
    %23 = vsyncpa [#allocation7], 0
    %s24 = scalar_lea.sflag [#allocation7], 1
    %25 = vsyncpa %s24, 0
    %26 = vsyncpa [#allocation16], 0
    loop: start=0, step=1, limit=4
    $region2: #{tpu_custom_call.1} parent=1 // loop_pre_header
      _
    $region3: #{tpu_custom_call.1} parent=1 // loop_header
      %s28 = sphi 0, %s32
      %p29 = scmp.ge.s32.totalorder %s28, 4
      %s35 = sphi 0, %s47
      %s36 = sphi 0, %s43
      %s37 = sphi 0, %s35
      %s38 = sphi 0, %s36
      %s39 = sphi 0, %s37
      %s40 = sphi 0, %s38
      %s52 = sphi 0, %s54
      %s55 = sphi 0, %s52
      %s56 = sphi 0, %s55
      %s72 = sphi 0, %s56
      %s80 = sphi 0, %s82
      %s83 = sphi 0, %s80
      %s84 = sphi 0, %s83
      %s100 = sphi 0, %s84
      %s108 = sphi 0, %s110
      %s111 = sphi 0, %s108
      %s112 = sphi 0, %s111
      %s128 = sphi 0, %s112
      %s134 = sphi 0, %s136
      %s137 = sphi 0, %s134
      %s138 = sphi 0, %s137
      %s154 = sphi 0, %s138
      %s158 = sphi 0, %s158
      %s160 = sphi 0, %s158
      %s161 = sphi 0, %s160
      %s175 = sphi 0, %s161
      %s179 = sphi 0, %s179
      %s181 = sphi 0, %s179
      %s182 = sphi 0, %s181
      %s196 = sphi 0, %s182
      %s200 = sphi 0, %s200
      %s202 = sphi 0, %s200
      %s203 = sphi 0, %s202
      %s217 = sphi 0, %s203
      %s221 = sphi 0, %s221
      %s223 = sphi 0, %s221
      %s224 = sphi 0, %s223
      %s238 = sphi 0, %s224
      %s242 = sphi 0, %s242
      %s244 = sphi 0, %s242
      %s245 = sphi 0, %s244
      %s259 = sphi 0, %s245
      %s263 = sphi 0, %s263
      %s265 = sphi 0, %s263
      %s266 = sphi 0, %s265
      %s280 = sphi 0, %s266
      %s284 = sphi 0, %s284
      %s286 = sphi 0, %s284
      %s287 = sphi 0, %s286
      %s301 = sphi 0, %s287
      %s309 = sphi 0, %s311
      %s312 = sphi 0, %s309
      %s313 = sphi 0, %s312
      %s329 = sphi 0, %s313
      %s335 = sphi 0, %s337
      %s338 = sphi 0, %s335
      %s339 = sphi 0, %s338
      %s355 = sphi 0, %s339
    $region4: #{tpu_custom_call.1} parent=1 // loop_header_branch
      %31 = sbr.rel (%p29) target = $region8
    $region5: #{tpu_custom_call.1} parent=1 // loop_body
      %s33 = ssub.s32 %s28, 1
      %s34 = ssub.s32 %s28, 2
      %s41 = sadd.s32 1, %s36
      %p42 = scmp.ge.s32.totalorder %s41, 2
      %s43 = scalar_select %p42, 0, %s41
      %s44 = sadd.s32 1, %s35
      %s45 = scalar_select %p42, %s44, %s35
      %p46 = scmp.ge.s32.totalorder %s45, 1
      %s47 = scalar_select %p46, 0, %s45
      %s48 = ssub.s32 %s35, %s47
      %s49 = ssub.s32 %s36, %s43
      %s50 = sor.u32 %s48, %s49
      %p51 = scmp.eq.s32.totalorder %s50, 0
      %s53 = sadd.s32 %s52, 1
      %s54 = scalar_select %p51, %s52, %s53
      %p57 = pneg %p51
      %p58 = scmp.eq.s32.totalorder %s28, 1
      %p59 = por %p57, %p58
      %p60 = scmp.ne.s32.totalorder %s52, %s55
      %p61 = scmp.eq.s32.totalorder %s28, 0
      %p62 = por %p60, %p61
      %p63 = scmp.ne.s32.totalorder %s52, %s55
      %p64 = scmp.eq.s32.totalorder %s33, 1
      %p65 = por %p63, %p64
      %p66 = scmp.ne.s32.totalorder %s55, %s56
      %p67 = scmp.eq.s32.totalorder %s33, 0
      %p68 = por %p66, %p67
      %p69 = scmp.ne.s32.totalorder %s55, %s56
      %p70 = scmp.eq.s32.totalorder %s34, 1
      %p71 = por %p69, %p70
      %p73 = scmp.ne.s32.totalorder %s56, %s72
      %p74 = scmp.eq.s32.totalorder %s34, 0
      %p75 = por %p73, %p74
      %s76 = ssub.s32 %s35, %s47
      %s77 = ssub.s32 %s36, %s43
      %s78 = sor.u32 %s76, %s77
      %p79 = scmp.eq.s32.totalorder %s78, 0
      %s81 = sadd.s32 %s80, 1
      %s82 = scalar_select %p79, %s80, %s81
      %p85 = pneg %p79
      %p86 = scmp.eq.s32.totalorder %s28, 1
      %p87 = por %p85, %p86
      %p88 = scmp.ne.s32.totalorder %s80, %s83
      %p89 = scmp.eq.s32.totalorder %s28, 0
      %p90 = por %p88, %p89
      %p91 = scmp.ne.s32.totalorder %s80, %s83
      %p92 = scmp.eq.s32.totalorder %s33, 1
      %p93 = por %p91, %p92
      %p94 = scmp.ne.s32.totalorder %s83, %s84
      %p95 = scmp.eq.s32.totalorder %s33, 0
      %p96 = por %p94, %p95
      %p97 = scmp.ne.s32.totalorder %s83, %s84
      %p98 = scmp.eq.s32.totalorder %s34, 1
      %p99 = por %p97, %p98
      %p101 = scmp.ne.s32.totalorder %s84, %s100
      %p102 = scmp.eq.s32.totalorder %s34, 0
      %p103 = por %p101, %p102
      %s104 = ssub.s32 %s35, %s47
      %s105 = ssub.s32 %s36, %s43
      %s106 = sor.u32 %s104, %s105
      %p107 = scmp.eq.s32.totalorder %s106, 0
      %s109 = sadd.s32 %s108, 1
      %s110 = scalar_select %p107, %s108, %s109
      %p113 = pneg %p107
      %p114 = scmp.eq.s32.totalorder %s28, 1
      %p115 = por %p113, %p114
      %p116 = scmp.ne.s32.totalorder %s108, %s111
      %p117 = scmp.eq.s32.totalorder %s28, 0
      %p118 = por %p116, %p117
      %p119 = scmp.ne.s32.totalorder %s108, %s111
      %p120 = scmp.eq.s32.totalorder %s33, 1
      %p121 = por %p119, %p120
      %p122 = scmp.ne.s32.totalorder %s111, %s112
      %p123 = scmp.eq.s32.totalorder %s33, 0
      %p124 = por %p122, %p123
      %p125 = scmp.ne.s32.totalorder %s111, %s112
      %p126 = scmp.eq.s32.totalorder %s34, 1
      %p127 = por %p125, %p126
      %p129 = scmp.ne.s32.totalorder %s112, %s128
      %p130 = scmp.eq.s32.totalorder %s34, 0
      %p131 = por %p129, %p130
      %s132 = ssub.s32 %s35, %s47
      %p133 = scmp.eq.s32.totalorder %s132, 0
      %s135 = sadd.s32 %s134, 1
      %s136 = scalar_select %p133, %s134, %s135
      %p139 = pneg %p133
      %p140 = scmp.eq.s32.totalorder %s28, 1
      %p141 = por %p139, %p140
      %p142 = scmp.ne.s32.totalorder %s134, %s137
      %p143 = scmp.eq.s32.totalorder %s28, 0
      %p144 = por %p142, %p143
      %p145 = scmp.ne.s32.totalorder %s134, %s137
      %p146 = scmp.eq.s32.totalorder %s33, 1
      %p147 = por %p145, %p146
      %p148 = scmp.ne.s32.totalorder %s137, %s138
      %p149 = scmp.eq.s32.totalorder %s33, 0
      %p150 = por %p148, %p149
      %p151 = scmp.ne.s32.totalorder %s137, %s138
      %p152 = scmp.eq.s32.totalorder %s34, 1
      %p153 = por %p151, %p152
      %p155 = scmp.ne.s32.totalorder %s138, %s154
      %p156 = scmp.eq.s32.totalorder %s34, 0
      %p157 = por %p155, %p156
      %s159 = sadd.s32 %s158, 1
      %p162 = scmp.eq.s32.totalorder %s28, 1
      %p163 = scmp.ne.s32.totalorder %s158, %s160
      %p164 = scmp.eq.s32.totalorder %s28, 0
      %p165 = por %p163, %p164
      %p166 = scmp.ne.s32.totalorder %s158, %s160
      %p167 = scmp.eq.s32.totalorder %s33, 1
      %p168 = por %p166, %p167
      %p169 = scmp.ne.s32.totalorder %s160, %s161
      %p170 = scmp.eq.s32.totalorder %s33, 0
      %p171 = por %p169, %p170
      %p172 = scmp.ne.s32.totalorder %s160, %s161
      %p173 = scmp.eq.s32.totalorder %s34, 1
      %p174 = por %p172, %p173
      %p176 = scmp.ne.s32.totalorder %s161, %s175
      %p177 = scmp.eq.s32.totalorder %s34, 0
      %p178 = por %p176, %p177
      %s180 = sadd.s32 %s179, 1
      %p183 = scmp.eq.s32.totalorder %s28, 1
      %p184 = scmp.ne.s32.totalorder %s179, %s181
      %p185 = scmp.eq.s32.totalorder %s28, 0
      %p186 = por %p184, %p185
      %p187 = scmp.ne.s32.totalorder %s179, %s181
      %p188 = scmp.eq.s32.totalorder %s33, 1
      %p189 = por %p187, %p188
      %p190 = scmp.ne.s32.totalorder %s181, %s182
      %p191 = scmp.eq.s32.totalorder %s33, 0
      %p192 = por %p190, %p191
      %p193 = scmp.ne.s32.totalorder %s181, %s182
      %p194 = scmp.eq.s32.totalorder %s34, 1
      %p195 = por %p193, %p194
      %p197 = scmp.ne.s32.totalorder %s182, %s196
      %p198 = scmp.eq.s32.totalorder %s34, 0
      %p199 = por %p197, %p198
      %s201 = sadd.s32 %s200, 1
      %p204 = scmp.eq.s32.totalorder %s28, 1
      %p205 = scmp.ne.s32.totalorder %s200, %s202
      %p206 = scmp.eq.s32.totalorder %s28, 0
      %p207 = por %p205, %p206
      %p208 = scmp.ne.s32.totalorder %s200, %s202
      %p209 = scmp.eq.s32.totalorder %s33, 1
      %p210 = por %p208, %p209
      %p211 = scmp.ne.s32.totalorder %s202, %s203
      %p212 = scmp.eq.s32.totalorder %s33, 0
      %p213 = por %p211, %p212
      %p214 = scmp.ne.s32.totalorder %s202, %s203
      %p215 = scmp.eq.s32.totalorder %s34, 1
      %p216 = por %p214, %p215
      %p218 = scmp.ne.s32.totalorder %s203, %s217
      %p219 = scmp.eq.s32.totalorder %s34, 0
      %p220 = por %p218, %p219
      %s222 = sadd.s32 %s221, 1
      %p225 = scmp.eq.s32.totalorder %s28, 1
      %p226 = scmp.ne.s32.totalorder %s221, %s223
      %p227 = scmp.eq.s32.totalorder %s28, 0
      %p228 = por %p226, %p227
      %p229 = scmp.ne.s32.totalorder %s221, %s223
      %p230 = scmp.eq.s32.totalorder %s33, 1
      %p231 = por %p229, %p230
      %p232 = scmp.ne.s32.totalorder %s223, %s224
      %p233 = scmp.eq.s32.totalorder %s33, 0
      %p234 = por %p232, %p233
      %p235 = scmp.ne.s32.totalorder %s223, %s224
      %p236 = scmp.eq.s32.totalorder %s34, 1
      %p237 = por %p235, %p236
      %p239 = scmp.ne.s32.totalorder %s224, %s238
      %p240 = scmp.eq.s32.totalorder %s34, 0
      %p241 = por %p239, %p240
      %s243 = sadd.s32 %s242, 1
      %p246 = scmp.eq.s32.totalorder %s28, 1
      %p247 = scmp.ne.s32.totalorder %s242, %s244
      %p248 = scmp.eq.s32.totalorder %s28, 0
      %p249 = por %p247, %p248
      %p250 = scmp.ne.s32.totalorder %s242, %s244
      %p251 = scmp.eq.s32.totalorder %s33, 1
      %p252 = por %p250, %p251
      %p253 = scmp.ne.s32.totalorder %s244, %s245
      %p254 = scmp.eq.s32.totalorder %s33, 0
      %p255 = por %p253, %p254
      %p256 = scmp.ne.s32.totalorder %s244, %s245
      %p257 = scmp.eq.s32.totalorder %s34, 1
      %p258 = por %p256, %p257
      %p260 = scmp.ne.s32.totalorder %s245, %s259
      %p261 = scmp.eq.s32.totalorder %s34, 0
      %p262 = por %p260, %p261
      %s264 = sadd.s32 %s263, 1
      %p267 = scmp.eq.s32.totalorder %s28, 1
      %p268 = scmp.ne.s32.totalorder %s263, %s265
      %p269 = scmp.eq.s32.totalorder %s28, 0
      %p270 = por %p268, %p269
      %p271 = scmp.ne.s32.totalorder %s263, %s265
      %p272 = scmp.eq.s32.totalorder %s33, 1
      %p273 = por %p271, %p272
      %p274 = scmp.ne.s32.totalorder %s265, %s266
      %p275 = scmp.eq.s32.totalorder %s33, 0
      %p276 = por %p274, %p275
      %p277 = scmp.ne.s32.totalorder %s265, %s266
      %p278 = scmp.eq.s32.totalorder %s34, 1
      %p279 = por %p277, %p278
      %p281 = scmp.ne.s32.totalorder %s266, %s280
      %p282 = scmp.eq.s32.totalorder %s34, 0
      %p283 = por %p281, %p282
      %s285 = sadd.s32 %s284, 1
      %p288 = scmp.eq.s32.totalorder %s28, 1
      %p289 = scmp.ne.s32.totalorder %s284, %s286
      %p290 = scmp.eq.s32.totalorder %s28, 0
      %p291 = por %p289, %p290
      %p292 = scmp.ne.s32.totalorder %s284, %s286
      %p293 = scmp.eq.s32.totalorder %s33, 1
      %p294 = por %p292, %p293
      %p295 = scmp.ne.s32.totalorder %s286, %s287
      %p296 = scmp.eq.s32.totalorder %s33, 0
      %p297 = por %p295, %p296
      %p298 = scmp.ne.s32.totalorder %s286, %s287
      %p299 = scmp.eq.s32.totalorder %s34, 1
      %p300 = por %p298, %p299
      %p302 = scmp.ne.s32.totalorder %s287, %s301
      %p303 = scmp.eq.s32.totalorder %s34, 0
      %p304 = por %p302, %p303
      %s305 = ssub.s32 %s35, %s47
      %s306 = ssub.s32 %s36, %s43
      %s307 = sor.u32 %s305, %s306
      %p308 = scmp.eq.s32.totalorder %s307, 0
      %s310 = sadd.s32 %s309, 1
      %s311 = scalar_select %p308, %s309, %s310
      %p314 = pneg %p308
      %p315 = scmp.eq.s32.totalorder %s28, 1
      %p316 = por %p314, %p315
      %p317 = scmp.ne.s32.totalorder %s309, %s312
      %p318 = scmp.eq.s32.totalorder %s28, 0
      %p319 = por %p317, %p318
      %p320 = scmp.ne.s32.totalorder %s309, %s312
      %p321 = scmp.eq.s32.totalorder %s33, 1
      %p322 = por %p320, %p321
      %p323 = scmp.ne.s32.totalorder %s312, %s313
      %p324 = scmp.eq.s32.totalorder %s33, 0
      %p325 = por %p323, %p324
      %p326 = scmp.ne.s32.totalorder %s312, %s313
      %p327 = scmp.eq.s32.totalorder %s34, 1
      %p328 = por %p326, %p327
      %p330 = scmp.ne.s32.totalorder %s313, %s329
      %p331 = scmp.eq.s32.totalorder %s34, 0
      %p332 = por %p330, %p331
      %s333 = ssub.s32 %s35, %s47
      %p334 = scmp.eq.s32.totalorder %s333, 0
      %s336 = sadd.s32 %s335, 1
      %s337 = scalar_select %p334, %s335, %s336
      %p340 = pneg %p334
      %p341 = scmp.eq.s32.totalorder %s28, 1
      %p342 = por %p340, %p341
      %p343 = scmp.ne.s32.totalorder %s335, %s338
      %p344 = scmp.eq.s32.totalorder %s28, 0
      %p345 = por %p343, %p344
      %p346 = scmp.ne.s32.totalorder %s335, %s338
      %p347 = scmp.eq.s32.totalorder %s33, 1
      %p348 = por %p346, %p347
      %p349 = scmp.ne.s32.totalorder %s338, %s339
      %p350 = scmp.eq.s32.totalorder %s33, 0
      %p351 = por %p349, %p350
      %p352 = scmp.ne.s32.totalorder %s338, %s339
      %p353 = scmp.eq.s32.totalorder %s34, 1
      %p354 = por %p352, %p353
      %p356 = scmp.ne.s32.totalorder %s339, %s355
      %p357 = scmp.eq.s32.totalorder %s34, 0
      %p358 = por %p356, %p357
      %p359 = scmp.le.s32.totalorder 1, %s28
      %p360 = scmp.lt.s32.totalorder %s28, 3
      %p361 = pnand %p359, %p360
      %p362 = pneg %p361
      // Predicated region
      $region9: #{tpu_custom_call.1} parent=5 // pred_check
        _
      $region10: #{tpu_custom_call.1} parent=5 // pred_check_branch
        %364 = sbr.rel (%p361) target = $region12
      $region11: #{tpu_custom_call.1} parent=5 // pred_region
        %s365 = ssub.s32 %s28, 1
        // Predicated region
        $region13: #{tpu_custom_call.1} parent=11 // pred_check
          %p366 = pneg %p150
        $region14: #{tpu_custom_call.1} parent=11 // pred_check_branch
          %368 = sbr.rel (%p366) target = $region16
        $region15: #{tpu_custom_call.1} parent=11 // pred_region
          %s370 = ssub.s32 64, 64
          %371 = vsyncadd [#allocation9], %s370
          %s372 = smul.addr %s37, 32
          %s373 = scalar_lea.hbm %s3, %s372
          %s374 = sshll.u32 [#allocation8], 4
          %s375 = int_to_ptr.vmem [resolvable:$true] %s374
          %380 = dma.hbm_to_vmem [thread:$0]  %s373, 64, %s375, [#allocation9], 32, 32, 2
        $region16: #{tpu_custom_call.1} parent=11 // pred_fallthru
          _
        // Predicated region
        $region17: #{tpu_custom_call.1} parent=11 // pred_check
          %p381 = pneg %p171
        $region18: #{tpu_custom_call.1} parent=11 // pred_check_branch
          %383 = sbr.rel (%p381) target = $region20
        $region19: #{tpu_custom_call.1} parent=11 // pred_region
          _
        $region20: #{tpu_custom_call.1} parent=11 // pred_fallthru
          _
        // Predicated region
        $region21: #{tpu_custom_call.1} parent=11 // pred_check
          %p384 = pneg %p192
        $region22: #{tpu_custom_call.1} parent=11 // pred_check_branch
          %386 = sbr.rel (%p384) target = $region24
        $region23: #{tpu_custom_call.1} parent=11 // pred_region
          _
        $region24: #{tpu_custom_call.1} parent=11 // pred_fallthru
          _
        // Predicated region
        $region25: #{tpu_custom_call.1} parent=11 // pred_check
          %p387 = pneg %p213
        $region26: #{tpu_custom_call.1} parent=11 // pred_check_branch
          %389 = sbr.rel (%p387) target = $region28
        $region27: #{tpu_custom_call.1} parent=11 // pred_region
          %s391 = ssub.s32 1024, 1024
          %392 = vsyncadd [#allocation9], %s391
          %s393 = sshll.u32 [#allocation10], 4
          %s394 = int_to_ptr.vmem [resolvable:$true] %s393
          %399 = dma.hbm_to_vmem [thread:$0]  %s6, 1024, %s394, [#allocation9], 128, 128, 8
        $region28: #{tpu_custom_call.1} parent=11 // pred_fallthru
          _
        // Predicated region
        $region29: #{tpu_custom_call.1} parent=11 // pred_check
          %p400 = pneg %p234
        $region30: #{tpu_custom_call.1} parent=11 // pred_check_branch
          %402 = sbr.rel (%p400) target = $region32
        $region31: #{tpu_custom_call.1} parent=11 // pred_region
          %s404 = ssub.s32 32, 32
          %405 = vsyncadd [#allocation12], %s404
          %s406 = sshll.u32 [#allocation11], 4
          %s407 = int_to_ptr.vmem [resolvable:$true] %s406
          %412 = dma.hbm_to_vmem [thread:$0]  %s7, 32, %s407, [#allocation12], 16, 16, 1
        $region32: #{tpu_custom_call.1} parent=11 // pred_fallthru
          _
        // Predicated region
        $region33: #{tpu_custom_call.1} parent=11 // pred_check
          %p413 = pneg %p255
        $region34: #{tpu_custom_call.1} parent=11 // pred_check_branch
          %415 = sbr.rel (%p413) target = $region36
        $region35: #{tpu_custom_call.1} parent=11 // pred_region
          %s417 = ssub.s32 32, 32
          %418 = vsyncadd [#allocation12], %s417
          %s419 = sshll.u32 [#allocation13], 4
          %s420 = int_to_ptr.vmem [resolvable:$true] %s419
          %425 = dma.hbm_to_vmem [thread:$0]  %s8, 32, %s420, [#allocation12], 16, 16, 1
        $region36: #{tpu_custom_call.1} parent=11 // pred_fallthru
          _
        // Predicated region
        $region37: #{tpu_custom_call.1} parent=11 // pred_check
          %p426 = pneg %p276
        $region38: #{tpu_custom_call.1} parent=11 // pred_check_branch
          %428 = sbr.rel (%p426) target = $region40
        $region39: #{tpu_custom_call.1} parent=11 // pred_region
          _
        $region40: #{tpu_custom_call.1} parent=11 // pred_fallthru
          _
        // Predicated region
        $region41: #{tpu_custom_call.1} parent=11 // pred_check
          %p429 = pneg %p297
        $region42: #{tpu_custom_call.1} parent=11 // pred_check_branch
          %431 = sbr.rel (%p429) target = $region44
        $region43: #{tpu_custom_call.1} parent=11 // pred_region
          _
        $region44: #{tpu_custom_call.1} parent=11 // pred_fallthru
          _
      $region12: #{tpu_custom_call.1} parent=5 // pred_fallthru
        _
      %p432 = scmp.lt.s32.totalorder %s28, 2
      // Predicated region
      $region45: #{tpu_custom_call.1} parent=5 // pred_check
        %p433 = pneg %p432
      $region46: #{tpu_custom_call.1} parent=5 // pred_check_branch
        %435 = sbr.rel (%p433) target = $region48
      $region47: #{tpu_custom_call.1} parent=5 // pred_region
        // Predicated region
        $region49: #{tpu_custom_call.1} parent=47 // pred_check
          %p436 = pneg %p62
        $region50: #{tpu_custom_call.1} parent=47 // pred_check_branch
          %438 = sbr.rel (%p436) target = $region52
        $region51: #{tpu_custom_call.1} parent=47 // pred_region
          %p439 = scmp.lt.s32.totalorder %s35, 0
          %s440 = scalar_select %p439, %s35, 0
          %p441 = scmp.lt.s32.totalorder %s36, 1
          %s442 = scalar_select %p441, %s36, 1
          %s443 = smul.addr %s440, 2
          %s444 = sadd.s32 %s442, %s443
          %s445 = smul.addr %s444, 2
          %s446 = scalar_lea.vmem %s0, %s445
        $region52: #{tpu_custom_call.1} parent=47 // pred_fallthru
          _
        // Predicated region
        $region53: #{tpu_custom_call.1} parent=47 // pred_check
          %p447 = pneg %p90
        $region54: #{tpu_custom_call.1} parent=47 // pred_check_branch
          %449 = sbr.rel (%p447) target = $region56
        $region55: #{tpu_custom_call.1} parent=47 // pred_region
          %p450 = scmp.lt.s32.totalorder %s35, 0
          %s451 = scalar_select %p450, %s35, 0
          %p452 = scmp.lt.s32.totalorder %s36, 1
          %s453 = scalar_select %p452, %s36, 1
          %s454 = smul.addr %s451, 2
          %s455 = sadd.s32 %s453, %s454
          %s456 = smul.addr %s455, 2
          %s457 = scalar_lea.vmem %s1, %s456
        $region56: #{tpu_custom_call.1} parent=47 // pred_fallthru
          _
        // Predicated region
        $region57: #{tpu_custom_call.1} parent=47 // pred_check
          %p458 = pneg %p118
        $region58: #{tpu_custom_call.1} parent=47 // pred_check_branch
          %460 = sbr.rel (%p458) target = $region60
        $region59: #{tpu_custom_call.1} parent=47 // pred_region
          %s461 = sand.u32 %s108, 1
          %s462 = scalar_lea.sflag [#allocation6], %s461
          %s463 = sand.u32 %s108, 1
          %s464 = smul.addr %s463, 2
          %s465 = scalar_lea.vmem [#allocation5], %s464
          %s467 = ssub.s32 32, 32
          %468 = vsyncadd %s462, %s467
          %s469 = smul.addr %s35, 2
          %s470 = sadd.s32 %s36, %s469
          %s471 = smul.addr %s470, 32
          %s472 = scalar_lea.hbm %s2, %s471
          %s474 = sshll.u32 %s465, 4
          %s475 = int_to_ptr.vmem [resolvable:$true] %s474
          %477 = dma.hbm_to_vmem [thread:$0]  %s472, 32, %s475, %s462
        $region60: #{tpu_custom_call.1} parent=47 // pred_fallthru
          _
      $region48: #{tpu_custom_call.1} parent=5 // pred_fallthru
        _
      %p478 = scmp.le.s32.totalorder 1, %s28
      %p479 = scmp.lt.s32.totalorder %s28, 3
      %p480 = pnand %p478, %p479
      %p481 = pneg %p480
      // Predicated region
      $region61: #{tpu_custom_call.1} parent=5 // pred_check
        _
      $region62: #{tpu_custom_call.1} parent=5 // pred_check_branch
        %483 = sbr.rel (%p480) target = $region64
      $region63: #{tpu_custom_call.1} parent=5 // pred_region
        %s484 = ssub.s32 %s28, 1
        %s485 = sand.u32 %s111, 1
        %s486 = scalar_lea.sflag [#allocation6], %s485
        %s487 = sand.u32 %s111, 1
        %s488 = smul.addr %s487, 2
        %s489 = scalar_lea.vmem [#allocation5], %s488
        // Predicated region
        $region65: #{tpu_custom_call.1} parent=63 // pred_check
          %p490 = pneg %p124
        $region66: #{tpu_custom_call.1} parent=63 // pred_check_branch
          %492 = sbr.rel (%p490) target = $region68
        $region67: #{tpu_custom_call.1} parent=63 // pred_region
          %493 = dma.done %s486, 32
        $region68: #{tpu_custom_call.1} parent=63 // pred_fallthru
          _
        // Predicated region
        $region69: #{tpu_custom_call.1} parent=63 // pred_check
          %p494 = pneg %p150
        $region70: #{tpu_custom_call.1} parent=63 // pred_check_branch
          %496 = sbr.rel (%p494) target = $region72
        $region71: #{tpu_custom_call.1} parent=63 // pred_region
          %497 = dma.done [#allocation9], 64
        $region72: #{tpu_custom_call.1} parent=63 // pred_fallthru
          _
        // Predicated region
        $region73: #{tpu_custom_call.1} parent=63 // pred_check
          %p498 = pneg %p213
        $region74: #{tpu_custom_call.1} parent=63 // pred_check_branch
          %500 = sbr.rel (%p498) target = $region76
        $region75: #{tpu_custom_call.1} parent=63 // pred_region
          %501 = dma.done [#allocation9], 1024
        $region76: #{tpu_custom_call.1} parent=63 // pred_fallthru
          _
        // Predicated region
        $region77: #{tpu_custom_call.1} parent=63 // pred_check
          %p502 = pneg %p234
        $region78: #{tpu_custom_call.1} parent=63 // pred_check_branch
          %504 = sbr.rel (%p502) target = $region80
        $region79: #{tpu_custom_call.1} parent=63 // pred_region
          %505 = dma.done [#allocation12], 32
        $region80: #{tpu_custom_call.1} parent=63 // pred_fallthru
          _
        // Predicated region
        $region81: #{tpu_custom_call.1} parent=63 // pred_check
          %p506 = pneg %p255
        $region82: #{tpu_custom_call.1} parent=63 // pred_check_branch
          %508 = sbr.rel (%p506) target = $region84
        $region83: #{tpu_custom_call.1} parent=63 // pred_region
          %509 = dma.done [#allocation12], 32
        $region84: #{tpu_custom_call.1} parent=63 // pred_fallthru
          _
        %p510 = scmp.lt.s32.totalorder %s37, 0
        %s511 = scalar_select %p510, %s37, 0
        %p512 = scmp.lt.s32.totalorder %s38, 1
        %s513 = scalar_select %p512, %s38, 1
        %s514 = smul.addr %s511, 2
        %s515 = sadd.s32 %s513, %s514
        %s516 = smul.addr %s515, 2
        %s517 = scalar_lea.vmem %s0, %s516
        %p518 = pneg %p68
        %p519 = pneg %p65
        %p520 = scmp.lt.s32.totalorder %s37, 0
        %s521 = scalar_select %p520, %s37, 0
        %p522 = scmp.lt.s32.totalorder %s38, 1
        %s523 = scalar_select %p522, %s38, 1
        %s524 = smul.addr %s521, 2
        %s525 = sadd.s32 %s523, %s524
        %s526 = smul.addr %s525, 2
        %s527 = scalar_lea.vmem %s1, %s526
        %p528 = pneg %p96
        %p529 = pneg %p93
        %s530 = sand.u32 %s111, 1
        %s531 = scalar_lea.sflag [#allocation6], %s530
        %s532 = sand.u32 %s111, 1
        %s533 = smul.addr %s532, 2
        %s534 = scalar_lea.vmem [#allocation5], %s533
        %p535 = pneg %p124
        %p536 = pneg %p121
        %p537 = pneg %p150
        %p538 = pneg %p147
        %p539 = pneg %p171
        %p540 = pneg %p168
        %p541 = pneg %p192
        %p542 = pneg %p189
        %p543 = pneg %p213
        %p544 = pneg %p210
        %p545 = pneg %p234
        %p546 = pneg %p231
        %p547 = pneg %p255
        %p548 = pneg %p252
        %p549 = pneg %p276
        %p550 = pneg %p273
        %p551 = pneg %p297
        %p552 = pneg %p294
        %p553 = pneg %p325
        %p554 = pneg %p322
        %s555 = sand.u32 %s312, 1
        %s556 = scalar_lea.sflag [#allocation7], %s555
        %s557 = sand.u32 %s312, 1
        %s558 = smul.addr %s557, 2
        %s559 = scalar_lea.vmem [#allocation14], %s558
        %p560 = pneg %p351
        %p561 = pneg %p348
        %p562 = scmp.lt.s32.totalorder %s37, 0
        %s563 = scalar_select %p562, %s37, 0
        %p564 = scmp.lt.s32.totalorder %s38, 1
        %s565 = scalar_select %p564, %s38, 1
        %s566 = smul.addr %s563, 2
        %s567 = sadd.s32 %s565, %s566
        %s568 = smul.addr %s567, 2
        %s569 = scalar_lea.vmem %s0, %s568
        %p570 = scmp.lt.s32.totalorder %s37, 0
        %s571 = scalar_select %p570, %s37, 0
        %p572 = scmp.lt.s32.totalorder %s38, 1
        %s573 = scalar_select %p572, %s38, 1
        %s574 = smul.addr %s571, 2
        %s575 = sadd.s32 %s573, %s574
        %s576 = smul.addr %s575, 2
        %s577 = scalar_lea.vmem %s1, %s576
        %p578 = scmp.eq.s32.totalorder %s38, 0
        // Predicated region
        $region85: #{tpu_custom_call.1} parent=63 // pred_check
          %p579 = pneg %p578
        $region86: #{tpu_custom_call.1} parent=63 // pred_check_branch
          %581 = sbr.rel (%p579) target = $region88
        $region87: #{tpu_custom_call.1} parent=63 // pred_region
          %v582 = vld [vmem:[#allocation8] sm:$0x3]
          %v583 = vld [vmem:[#allocation8 + $0x2] sm:$0x3]
          %vm584 = vcmask 254976
          %585 = vst.msk [vmem:[#allocation2] sm:$0x3] %vm584, %v582
          %586 = vst.msk [vmem:[#allocation2 + $0x2] sm:$0x3] %vm584, %v583
        $region88: #{tpu_custom_call.1} parent=63 // pred_fallthru
          _
        %v587 = vld [vmem:[%s569] sm:$0x3]
        %v588 = vld [vmem:[%s577] sm:$0x3]
        %v589 = vld [vmem:[%s489] sm:$0x3]
        %v590 = vmul.f32 %v588, %v587
        %v591 = vsub.f32 1.0, %v588
        %v592 = vmul.f32 %v591, %v589
        %v593 = vadd.f32 %v590, %v592
        %595 = vrot.lane.b32.xlu0 %v593, 120
        %v596 = vpop.permute.xlu0 %595
        %598 = vrot.lane.b32.xlu0 %v593, 112
        %v599 = vpop.permute.xlu0 %598
        %601 = vrot.lane.b32.xlu0 %v593, 104
        %v602 = vpop.permute.xlu0 %601
        %604 = vrot.lane.b32.xlu0 %v593, 96
        %v605 = vpop.permute.xlu0 %604
        %607 = vrot.lane.b32.xlu0 %v593, 88
        %v608 = vpop.permute.xlu0 %607
        %610 = vrot.lane.b32.xlu0 %v593, 80
        %v611 = vpop.permute.xlu0 %610
        %613 = vrot.lane.b32.xlu0 %v593, 72
        %v614 = vpop.permute.xlu0 %613
        %616 = vrot.lane.b32.xlu0 %v593, 64
        %v617 = vpop.permute.xlu0 %616
        %619 = vrot.lane.b32.xlu0 %v593, 56
        %v620 = vpop.permute.xlu0 %619
        %622 = vrot.lane.b32.xlu0 %v593, 48
        %v623 = vpop.permute.xlu0 %622
        %625 = vrot.lane.b32.xlu0 %v593, 40
        %v626 = vpop.permute.xlu0 %625
        %628 = vrot.lane.b32.xlu0 %v593, 32
        %v629 = vpop.permute.xlu0 %628
        %631 = vrot.lane.b32.xlu0 %v593, 24
        %v632 = vpop.permute.xlu0 %631
        %634 = vrot.lane.b32.xlu0 %v593, 16
        %v635 = vpop.permute.xlu0 %634
        %637 = vrot.lane.b32.xlu0 %v593, 8
        %v638 = vpop.permute.xlu0 %637
        %v640 = vcombine.low %v593, %v599
        %v642 = vunpack.c.l.s4 1983009808
        %v643 = vunpack.c.0.s8 %v642
        %v644 = vlaneseq
        %v645 = vshrl.u32 %v644, 7
        %v646 = vsub.s32 %v643, %v645
        %v647 = vrot.slane %v640, %v646
        %v648 = vcombine.low %v596, %v602
        %v650 = vunpack.c.l.s4 1983009808
        %v651 = vunpack.c.0.s8 %v650
        %v652 = vlaneseq
        %v653 = vshrl.u32 %v652, 7
        %v654 = vsub.s32 %v651, %v653
        %v655 = vrot.slane %v648, %v654
        %v656 = vcombine.low %v605, %v611
        %v658 = vunpack.c.l.s4 1983009808
        %v659 = vunpack.c.0.s8 %v658
        %v660 = vlaneseq
        %v661 = vshrl.u32 %v660, 7
        %v662 = vsub.s32 %v659, %v661
        %v663 = vrot.slane %v656, %v662
        %v664 = vcombine.low %v608, %v614
        %v666 = vunpack.c.l.s4 1983009808
        %v667 = vunpack.c.0.s8 %v666
        %v668 = vlaneseq
        %v669 = vshrl.u32 %v668, 7
        %v670 = vsub.s32 %v667, %v669
        %v671 = vrot.slane %v664, %v670
        %v672 = vcombine.low %v647, %v655
        %v674 = vunpack.c.l.s4 1934713408
        %v675 = vunpack.c.0.s8 %v674
        %v676 = vlaneseq
        %v677 = vshrl.u32 %v676, 7
        %v678 = vsub.s32 %v675, %v677
        %v679 = vrot.slane %v672, %v678
        %v680 = vcombine.low %v663, %v671
        %v682 = vunpack.c.l.s4 1934713408
        %v683 = vunpack.c.0.s8 %v682
        %v684 = vlaneseq
        %v685 = vshrl.u32 %v684, 7
        %v686 = vsub.s32 %v683, %v685
        %v687 = vrot.slane %v680, %v686
        %v688 = vcombine.low %v679, %v687
        %v689 = vcombine.high %v679, %v687
        %v690 = vcombine.low %v617, %v623
        %v692 = vunpack.c.l.s4 1983009808
        %v693 = vunpack.c.0.s8 %v692
        %v694 = vlaneseq
        %v695 = vshrl.u32 %v694, 7
        %v696 = vsub.s32 %v693, %v695
        %v697 = vrot.slane %v690, %v696
        %v698 = vcombine.low %v620, %v626
        %v700 = vunpack.c.l.s4 1983009808
        %v701 = vunpack.c.0.s8 %v700
        %v702 = vlaneseq
        %v703 = vshrl.u32 %v702, 7
        %v704 = vsub.s32 %v701, %v703
        %v705 = vrot.slane %v698, %v704
        %v706 = vcombine.low %v629, %v635
        %v708 = vunpack.c.l.s4 1983009808
        %v709 = vunpack.c.0.s8 %v708
        %v710 = vlaneseq
        %v711 = vshrl.u32 %v710, 7
        %v712 = vsub.s32 %v709, %v711
        %v713 = vrot.slane %v706, %v712
        %v714 = vcombine.low %v632, %v638
        %v716 = vunpack.c.l.s4 1983009808
        %v717 = vunpack.c.0.s8 %v716
        %v718 = vlaneseq
        %v719 = vshrl.u32 %v718, 7
        %v720 = vsub.s32 %v717, %v719
        %v721 = vrot.slane %v714, %v720
        %v722 = vcombine.low %v697, %v705
        %v724 = vunpack.c.l.s4 1934713408
        %v725 = vunpack.c.0.s8 %v724
        %v726 = vlaneseq
        %v727 = vshrl.u32 %v726, 7
        %v728 = vsub.s32 %v725, %v727
        %v729 = vrot.slane %v722, %v728
        %v730 = vcombine.low %v713, %v721
        %v732 = vunpack.c.l.s4 1934713408
        %v733 = vunpack.c.0.s8 %v732
        %v734 = vlaneseq
        %v735 = vshrl.u32 %v734, 7
        %v736 = vsub.s32 %v733, %v735
        %v737 = vrot.slane %v730, %v736
        %v738 = vcombine.low %v729, %v737
        %v739 = vcombine.high %v729, %v737
        %v740 = vcombine.high %v688, 0.0
        %v742 = vunpack.c.l.s4 1983009808
        %v743 = vunpack.c.0.s8 %v742
        %v744 = vlaneseq
        %v745 = vshrl.u32 %v744, 7
        %v746 = vsub.s32 %v743, %v745
        %v747 = vrot.slane %v688, %v746
        %v749 = vunpack.c.l.s4 1983009808
        %v750 = vunpack.c.0.s8 %v749
        %v751 = vlaneseq
        %v752 = vshrl.u32 %v751, 7
        %v753 = vsub.s32 %v750, %v752
        %v754 = vrot.slane %v740, %v753
        %v755 = vcombine.high %v689, 0.0
        %v757 = vunpack.c.l.s4 1983009808
        %v758 = vunpack.c.0.s8 %v757
        %v759 = vlaneseq
        %v760 = vshrl.u32 %v759, 7
        %v761 = vsub.s32 %v758, %v760
        %v762 = vrot.slane %v689, %v761
        %v764 = vunpack.c.l.s4 1983009808
        %v765 = vunpack.c.0.s8 %v764
        %v766 = vlaneseq
        %v767 = vshrl.u32 %v766, 7
        %v768 = vsub.s32 %v765, %v767
        %v769 = vrot.slane %v755, %v768
        %v770 = vcombine.low %v747, %v762
        %v771 = vcombine.high %v747, %v762
        %v773 = vunpack.c.l.s4 1934713408
        %v774 = vunpack.c.0.s8 %v773
        %v775 = vlaneseq
        %v776 = vshrl.u32 %v775, 7
        %v777 = vsub.s32 %v774, %v776
        %v778 = vrot.slane %v770, %v777
        %v780 = vunpack.c.l.s4 1934713408
        %v781 = vunpack.c.0.s8 %v780
        %v782 = vlaneseq
        %v783 = vshrl.u32 %v782, 7
        %v784 = vsub.s32 %v781, %v783
        %v785 = vrot.slane %v771, %v784
        %v786 = vcombine.low %v754, %v769
        %v787 = vcombine.high %v754, %v769
        %v789 = vunpack.c.l.s4 1934713408
        %v790 = vunpack.c.0.s8 %v789
        %v791 = vlaneseq
        %v792 = vshrl.u32 %v791, 7
        %v793 = vsub.s32 %v790, %v792
        %v794 = vrot.slane %v786, %v793
        %v796 = vunpack.c.l.s4 1934713408
        %v797 = vunpack.c.0.s8 %v796
        %v798 = vlaneseq
        %v799 = vshrl.u32 %v798, 7
        %v800 = vsub.s32 %v797, %v799
        %v801 = vrot.slane %v787, %v800
        %v802 = vcombine.high %v778, 0.0
        %v803 = vcombine.high %v785, 0.0
        %v804 = vcombine.high %v794, 0.0
        %v805 = vcombine.high %v801, 0.0
        %v806 = vcombine.high %v738, 0.0
        %v808 = vunpack.c.l.s4 1983009808
        %v809 = vunpack.c.0.s8 %v808
        %v810 = vlaneseq
        %v811 = vshrl.u32 %v810, 7
        %v812 = vsub.s32 %v809, %v811
        %v813 = vrot.slane %v738, %v812
        %v815 = vunpack.c.l.s4 1983009808
        %v816 = vunpack.c.0.s8 %v815
        %v817 = vlaneseq
        %v818 = vshrl.u32 %v817, 7
        %v819 = vsub.s32 %v816, %v818
        %v820 = vrot.slane %v806, %v819
        %v821 = vcombine.high %v739, 0.0
        %v823 = vunpack.c.l.s4 1983009808
        %v824 = vunpack.c.0.s8 %v823
        %v825 = vlaneseq
        %v826 = vshrl.u32 %v825, 7
        %v827 = vsub.s32 %v824, %v826
        %v828 = vrot.slane %v739, %v827
        %v830 = vunpack.c.l.s4 1983009808
        %v831 = vunpack.c.0.s8 %v830
        %v832 = vlaneseq
        %v833 = vshrl.u32 %v832, 7
        %v834 = vsub.s32 %v831, %v833
        %v835 = vrot.slane %v821, %v834
        %v836 = vcombine.low %v813, %v828
        %v837 = vcombine.high %v813, %v828
        %v839 = vunpack.c.l.s4 1934713408
        %v840 = vunpack.c.0.s8 %v839
        %v841 = vlaneseq
        %v842 = vshrl.u32 %v841, 7
        %v843 = vsub.s32 %v840, %v842
        %v844 = vrot.slane %v836, %v843
        %v846 = vunpack.c.l.s4 1934713408
        %v847 = vunpack.c.0.s8 %v846
        %v848 = vlaneseq
        %v849 = vshrl.u32 %v848, 7
        %v850 = vsub.s32 %v847, %v849
        %v851 = vrot.slane %v837, %v850
        %v852 = vcombine.low %v820, %v835
        %v853 = vcombine.high %v820, %v835
        %v855 = vunpack.c.l.s4 1934713408
        %v856 = vunpack.c.0.s8 %v855
        %v857 = vlaneseq
        %v858 = vshrl.u32 %v857, 7
        %v859 = vsub.s32 %v856, %v858
        %v860 = vrot.slane %v852, %v859
        %v862 = vunpack.c.l.s4 1934713408
        %v863 = vunpack.c.0.s8 %v862
        %v864 = vlaneseq
        %v865 = vshrl.u32 %v864, 7
        %v866 = vsub.s32 %v863, %v865
        %v867 = vrot.slane %v853, %v866
        %v868 = vcombine.high %v844, 0.0
        %v869 = vcombine.high %v851, 0.0
        %v870 = vcombine.high %v860, 0.0
        %v871 = vcombine.high %v867, 0.0
        %v872 = vld [vmem:[%s4] sm:$0xff]
        %v873 = vld [vmem:[#allocation11] sm:$0x1]
        %v875 = vlaneseq
        %v876 = vshrl.u32 %v875, 7
        %v877 = vsub.s32 0, %v876
        %v878 = vrot.slane %v873, %v877
        %v896 = vcombine.low %v778, %v802
        %v897 = vcombine.low %v785, %v803
        %v899 = vunpack.c.l.s4 1983009808
        %v900 = vunpack.c.0.s8 %v899
        %v901 = vlaneseq
        %v902 = vshrl.u32 %v901, 7
        %v903 = vsub.s32 %v900, %v902
        %v904 = vrot.slane %v896, %v903
        %v906 = vunpack.c.l.s4 1983009808
        %v907 = vunpack.c.0.s8 %v906
        %v908 = vlaneseq
        %v909 = vshrl.u32 %v908, 7
        %v910 = vsub.s32 %v907, %v909
        %v911 = vrot.slane %v897, %v910
        %v912 = vcombine.low %v904, %v911
        %v913 = vcombine.low %v794, %v804
        %v914 = vcombine.low %v801, %v805
        %v916 = vunpack.c.l.s4 1983009808
        %v917 = vunpack.c.0.s8 %v916
        %v918 = vlaneseq
        %v919 = vshrl.u32 %v918, 7
        %v920 = vsub.s32 %v917, %v919
        %v921 = vrot.slane %v913, %v920
        %v923 = vunpack.c.l.s4 1983009808
        %v924 = vunpack.c.0.s8 %v923
        %v925 = vlaneseq
        %v926 = vshrl.u32 %v925, 7
        %v927 = vsub.s32 %v924, %v926
        %v928 = vrot.slane %v914, %v927
        %v929 = vcombine.low %v921, %v928
        %v930 = vcombine.low %v844, %v868
        %v931 = vcombine.low %v851, %v869
        %v933 = vunpack.c.l.s4 1983009808
        %v934 = vunpack.c.0.s8 %v933
        %v935 = vlaneseq
        %v936 = vshrl.u32 %v935, 7
        %v937 = vsub.s32 %v934, %v936
        %v938 = vrot.slane %v930, %v937
        %v940 = vunpack.c.l.s4 1983009808
        %v941 = vunpack.c.0.s8 %v940
        %v942 = vlaneseq
        %v943 = vshrl.u32 %v942, 7
        %v944 = vsub.s32 %v941, %v943
        %v945 = vrot.slane %v931, %v944
        %v946 = vcombine.low %v938, %v945
        %v947 = vcombine.low %v860, %v870
        %v948 = vcombine.low %v867, %v871
        %v950 = vunpack.c.l.s4 1983009808
        %v951 = vunpack.c.0.s8 %v950
        %v952 = vlaneseq
        %v953 = vshrl.u32 %v952, 7
        %v954 = vsub.s32 %v951, %v953
        %v955 = vrot.slane %v947, %v954
        %v957 = vunpack.c.l.s4 1983009808
        %v958 = vunpack.c.0.s8 %v957
        %v959 = vlaneseq
        %v960 = vshrl.u32 %v959, 7
        %v961 = vsub.s32 %v958, %v960
        %v962 = vrot.slane %v948, %v961
        %v963 = vcombine.low %v955, %v962
        %vm964 = vcmask 64512
        %v965 = vsel %vm964, %v912, 0
        %v967 = vsel %vm964, %v929, 0
        %v969 = vsel %vm964, %v946, 0
        %v971 = vsel %vm964, %v963, 0
        %973 = vmatprep.subr.mxu0 0.0
        %974 = vmatpush1.msra.mxu0 0.0
        %975 = vmatprep.subr.mxu0 0.0
        %976 = vmatpush1.msra.mxu0 0.0
        %977 = vmatprep.subr.mxu0 0.0
        %978 = vmatpush1.msra.mxu0 0.0
        %979 = vmatprep.subr.mxu0 0.0
        %980 = vmatpush1.msra.mxu0 0.0
        %981 = vmatprep.subr.mxu0 0.0
        %982 = vmatpush1.msra.mxu0 0.0
        %983 = vmatprep.subr.mxu0 0.0
        %984 = vmatpush1.msra.mxu0 0.0
        %985 = vmatprep.subr.mxu0 0.0
        %986 = vmatpush1.msra.mxu0 0.0
        %987 = vmatprep.subr.mxu0 0.0
        %988 = vmatpush1.msra.mxu0 0.0
        %989 = vmatprep.subr.mxu0 0.0
        %990 = vmatpush1.msra.mxu0 0.0
        %991 = vmatprep.subr.mxu0 0.0
        %992 = vmatpush1.msra.mxu0 0.0
        %993 = vmatprep.subr.mxu0 0.0
        %994 = vmatpush1.msra.mxu0 0.0
        %995 = vmatprep.subr.mxu0 0.0
        %996 = vmatpush1.msra.mxu0 0.0
        %997 = vmatprep.subr.mxu0 0.0
        %998 = vmatpush1.msra.mxu0 0.0
        %999 = vmatprep.subr.mxu0 0.0
        %1000 = vmatpush1.msra.mxu0 0.0
        %1001 = vmatprep.subr.mxu0 0.0
        %1002 = vmatpush1.msra.mxu0 0.0
        %1003 = vmatprep.subr.mxu0 0.0
        %1004 = vmatpush1.msra.mxu0 %v872
        %1005 = vmatprep.subr.mxu0 0.0
        %1006 = vmatpush2.msra.mxu0 0.0
        %1007 = vmatprep.subr.mxu0 0.0
        %1008 = vmatpush2.msra.mxu0 0.0
        %1009 = vmatprep.subr.mxu0 0.0
        %1010 = vmatpush2.msra.mxu0 0.0
        %1011 = vmatprep.subr.mxu0 0.0
        %1012 = vmatpush2.msra.mxu0 0.0
        %1013 = vmatprep.subr.mxu0 0.0
        %1014 = vmatpush2.msra.mxu0 0.0
        %1015 = vmatprep.subr.mxu0 0.0
        %1016 = vmatpush2.msra.mxu0 0.0
        %1017 = vmatprep.subr.mxu0 0.0
        %1018 = vmatpush2.msra.mxu0 0.0
        %1019 = vmatprep.subr.mxu0 0.0
        %1020 = vmatpush2.msra.mxu0 0.0
        %1021 = vmatprep.subr.mxu0 0.0
        %1022 = vmatpush2.msra.mxu0 0.0
        %1023 = vmatprep.subr.mxu0 0.0
        %1024 = vmatpush2.msra.mxu0 0.0
        %1025 = vmatprep.subr.mxu0 0.0
        %1026 = vmatpush2.msra.mxu0 0.0
        %1027 = vmatprep.subr.mxu0 0.0
        %1028 = vmatpush2.msra.mxu0 0.0
        %1029 = vmatprep.subr.mxu0 0.0
        %1030 = vmatpush2.msra.mxu0 0.0
        %1031 = vmatprep.subr.mxu0 0.0
        %1032 = vmatpush2.msra.mxu0 0.0
        %1033 = vmatprep.subr.mxu0 0.0
        %1034 = vmatpush2.msra.mxu0 0.0
        %1035 = vmatprep.subr.mxu0 0.0
        %1036 = vmatpush2.msra.mxu0 0.0
        %1037 = vmatprep.mubr.f32.mxu0 0.0
        %1038 = vmatmul.mubr.f32.gmra.mxu0 %v965
        %v1039 = vpop.f32.mrf.mxu0
        %v1040 = vadd.f32 %v878, %v1039
        %v1041 = vpop.f32.mrf.mxu0
        %1042 = vmatprep.mubr.f32.mxu0 0.0
        %1043 = vmatmul.mubr.f32.gmra.mxu0 %v967
        %v1044 = vpop.f32.mrf.mxu0
        %v1045 = vadd.f32 %v878, %v1044
        %v1046 = vpop.f32.mrf.mxu0
        %1047 = vmatprep.mubr.f32.mxu0 0.0
        %1048 = vmatmul.mubr.f32.gmra.mxu0 %v969
        %v1049 = vpop.f32.mrf.mxu0
        %v1050 = vadd.f32 %v878, %v1049
        %v1051 = vpop.f32.mrf.mxu0
        %1052 = vmatprep.mubr.f32.mxu0 0.0
        %1053 = vmatmul.mubr.f32.gmra.mxu0 %v971
        %v1054 = vpop.f32.mrf.mxu0
        %v1055 = vadd.f32 %v878, %v1054
        %v1056 = vpop.f32.mrf.mxu0
        %1057 = vdwg.mxu0
        %v1062 = vcombine.high %v1040, %v1040
        %v1064 = vunpack.c.l.s4 1983009808
        %v1065 = vunpack.c.0.s8 %v1064
        %v1066 = vlaneseq
        %v1067 = vshrl.u32 %v1066, 7
        %v1068 = vsub.s32 %v1065, %v1067
        %v1069 = vrot.slane %v1040, %v1068
        %v1071 = vunpack.c.l.s4 1983009808
        %v1072 = vunpack.c.0.s8 %v1071
        %v1073 = vlaneseq
        %v1074 = vshrl.u32 %v1073, 7
        %v1075 = vsub.s32 %v1072, %v1074
        %v1076 = vrot.slane %v1062, %v1075
        %v1077 = vcombine.high %v1069, %v1069
        %v1078 = vcombine.high %v1076, %v1076
        %v1079 = vcombine.high %v1045, %v1045
        %v1081 = vunpack.c.l.s4 1983009808
        %v1082 = vunpack.c.0.s8 %v1081
        %v1083 = vlaneseq
        %v1084 = vshrl.u32 %v1083, 7
        %v1085 = vsub.s32 %v1082, %v1084
        %v1086 = vrot.slane %v1045, %v1085
        %v1088 = vunpack.c.l.s4 1983009808
        %v1089 = vunpack.c.0.s8 %v1088
        %v1090 = vlaneseq
        %v1091 = vshrl.u32 %v1090, 7
        %v1092 = vsub.s32 %v1089, %v1091
        %v1093 = vrot.slane %v1079, %v1092
        %v1094 = vcombine.high %v1086, %v1086
        %v1095 = vcombine.high %v1093, %v1093
        %v1096 = vcombine.high %v1050, %v1050
        %v1098 = vunpack.c.l.s4 1983009808
        %v1099 = vunpack.c.0.s8 %v1098
        %v1100 = vlaneseq
        %v1101 = vshrl.u32 %v1100, 7
        %v1102 = vsub.s32 %v1099, %v1101
        %v1103 = vrot.slane %v1050, %v1102
        %v1105 = vunpack.c.l.s4 1983009808
        %v1106 = vunpack.c.0.s8 %v1105
        %v1107 = vlaneseq
        %v1108 = vshrl.u32 %v1107, 7
        %v1109 = vsub.s32 %v1106, %v1108
        %v1110 = vrot.slane %v1096, %v1109
        %v1111 = vcombine.high %v1103, %v1103
        %v1112 = vcombine.high %v1110, %v1110
        %v1113 = vcombine.high %v1055, %v1055
        %v1115 = vunpack.c.l.s4 1983009808
        %v1116 = vunpack.c.0.s8 %v1115
        %v1117 = vlaneseq
        %v1118 = vshrl.u32 %v1117, 7
        %v1119 = vsub.s32 %v1116, %v1118
        %v1120 = vrot.slane %v1055, %v1119
        %v1122 = vunpack.c.l.s4 1983009808
        %v1123 = vunpack.c.0.s8 %v1122
        %v1124 = vlaneseq
        %v1125 = vshrl.u32 %v1124, 7
        %v1126 = vsub.s32 %v1123, %v1125
        %v1127 = vrot.slane %v1113, %v1126
        %v1128 = vcombine.high %v1120, %v1120
        %v1129 = vcombine.high %v1127, %v1127
        %vm1146 = vcmask 779264
        %1147 = vst.msk [vmem:[#allocation3] sm:$0x3] %vm1146, %v1069
        %1148 = vst.msk [vmem:[#allocation3 + $0x2] sm:$0x3] %vm1146, %v1077
        %1149 = vst.msk [vmem:[#allocation3 + $0x4] sm:$0x3] %vm1146, %v1076
        %1150 = vst.msk [vmem:[#allocation3 + $0x6] sm:$0x3] %vm1146, %v1078
        %1151 = vst.msk [vmem:[#allocation3 + $0x8] sm:$0x3] %vm1146, %v1086
        %1152 = vst.msk [vmem:[#allocation3 + $0xa] sm:$0x3] %vm1146, %v1094
        %1153 = vst.msk [vmem:[#allocation3 + $0xc] sm:$0x3] %vm1146, %v1093
        %1154 = vst.msk [vmem:[#allocation3 + $0xe] sm:$0x3] %vm1146, %v1095
        %1155 = vst.msk [vmem:[#allocation3 + $0x10] sm:$0x3] %vm1146, %v1103
        %1156 = vst.msk [vmem:[#allocation3 + $0x12] sm:$0x3] %vm1146, %v1111
        %1157 = vst.msk [vmem:[#allocation3 + $0x14] sm:$0x3] %vm1146, %v1110
        %1158 = vst.msk [vmem:[#allocation3 + $0x16] sm:$0x3] %vm1146, %v1112
        %1159 = vst.msk [vmem:[#allocation3 + $0x18] sm:$0x3] %vm1146, %v1120
        %1160 = vst.msk [vmem:[#allocation3 + $0x1a] sm:$0x3] %vm1146, %v1128
        %1161 = vst.msk [vmem:[#allocation3 + $0x1c] sm:$0x3] %vm1146, %v1127
        %1162 = vst.msk [vmem:[#allocation3 + $0x1e] sm:$0x3] %vm1146, %v1129
        %v1163 = vld [vmem:[#allocation10] sm:$0xff]
        %v1164 = vld [vmem:[#allocation10 + $0x8] sm:$0xff]
        %v1165 = vld [vmem:[#allocation10 + $0x10] sm:$0xff]
        %v1166 = vld [vmem:[#allocation10 + $0x18] sm:$0xff]
        %s1167 = scalar_lea.vmem [#allocation10], 32
        %v1168 = vld [vmem:[%s1167] sm:$0xff]
        %v1169 = vld [vmem:[%s1167 + $0x8] sm:$0xff]
        %v1170 = vld [vmem:[%s1167 + $0x10] sm:$0xff]
        %v1171 = vld [vmem:[%s1167 + $0x18] sm:$0xff]
        %v1172 = vld [vmem:[%s5] sm:$0xff]
        %v1173 = vld [vmem:[%s5 + $0x8] sm:$0xff]
        %v1174 = vld [vmem:[%s5 + $0x10] sm:$0xff]
        %v1175 = vld [vmem:[%s5 + $0x18] sm:$0xff]
        %v1176 = vld [vmem:[#allocation13] sm:$0x1]
        %v1178 = vlaneseq
        %v1179 = vshrl.u32 %v1178, 7
        %v1180 = vsub.s32 0, %v1179
        %v1181 = vrot.slane %v1176, %v1180
        %s1183 = scalar_lea.vmem [#allocation13], 1
        %v1184 = vld [vmem:[%s1183] sm:$0x1]
        %v1186 = vlaneseq
        %v1187 = vshrl.u32 %v1186, 7
        %v1188 = vsub.s32 0, %v1187
        %v1189 = vrot.slane %v1184, %v1188
        %s1191 = scalar_lea.vmem [#allocation11], 1
        %v1192 = vld [vmem:[%s1191] sm:$0x1]
        %v1194 = vlaneseq
        %v1195 = vshrl.u32 %v1194, 7
        %v1196 = vsub.s32 0, %v1195
        %v1197 = vrot.slane %v1192, %v1196
        %v1199 = vld [vmem:[#allocation2] sm:$0x3]
        %s1200 = scalar_lea.vmem [#allocation2], 2
        %v1201 = vld [vmem:[%s1200] sm:$0x3]
        loop: start=0, step=1, limit=2
        $region89: #{tpu_custom_call.1} parent=63 // loop_pre_header
          _
        $region90: #{tpu_custom_call.1} parent=63 // loop_header
          %s1203 = sphi 0, %s1207
          %p1204 = scmp.ge.s32.totalorder %s1203, 2
          %v1208 = vphi %v1199, %v3231
          %v1209 = vphi %v1201, %v3407
        $region91: #{tpu_custom_call.1} parent=63 // loop_header_branch
          %1206 = sbr.rel (%p1204) target = $region95
        $region92: #{tpu_custom_call.1} parent=63 // loop_body
          %s1210 = smul.u32 %s1203, 8
          %s1211 = smul.u32 %s1210, 2
          %s1212 = scalar_lea.vmem [#allocation3], %s1211
          %v1213 = vld [vmem:[%s1212] sm:$0x3]
          %v1214 = vld [vmem:[%s1212 + $0x2] sm:$0x3]
          %v1215 = vld [vmem:[%s1212 + $0x4] sm:$0x3]
          %v1216 = vld [vmem:[%s1212 + $0x6] sm:$0x3]
          %v1217 = vld [vmem:[%s1212 + $0x8] sm:$0x3]
          %v1218 = vld [vmem:[%s1212 + $0xa] sm:$0x3]
          %v1219 = vld [vmem:[%s1212 + $0xc] sm:$0x3]
          %v1220 = vld [vmem:[%s1212 + $0xe] sm:$0x3]
          %vm1221 = vcmask 261120
          %v1223 = vsel %vm1221, %v1208, 0
          %1225 = vmatprep.subr.mxu0 0.0
          %1226 = vmatpush1.msra.mxu0 0.0
          %1227 = vmatprep.subr.mxu0 0.0
          %1228 = vmatpush1.msra.mxu0 0.0
          %1229 = vmatprep.subr.mxu0 0.0
          %1230 = vmatpush1.msra.mxu0 0.0
          %1231 = vmatprep.subr.mxu0 0.0
          %1232 = vmatpush1.msra.mxu0 0.0
          %1233 = vmatprep.subr.mxu0 0.0
          %1234 = vmatpush1.msra.mxu0 0.0
          %1235 = vmatprep.subr.mxu0 0.0
          %1236 = vmatpush1.msra.mxu0 0.0
          %1237 = vmatprep.subr.mxu0 0.0
          %1238 = vmatpush1.msra.mxu0 0.0
          %1239 = vmatprep.subr.mxu0 0.0
          %1240 = vmatpush1.msra.mxu0 0.0
          %1241 = vmatprep.subr.mxu0 0.0
          %1242 = vmatpush1.msra.mxu0 0.0
          %1243 = vmatprep.subr.mxu0 0.0
          %1244 = vmatpush1.msra.mxu0 0.0
          %1245 = vmatprep.subr.mxu0 0.0
          %1246 = vmatpush1.msra.mxu0 0.0
          %1247 = vmatprep.subr.mxu0 0.0
          %1248 = vmatpush1.msra.mxu0 0.0
          %1249 = vmatprep.subr.mxu0 0.0
          %1250 = vmatpush1.msra.mxu0 %v1166
          %1251 = vmatprep.subr.mxu0 0.0
          %1252 = vmatpush1.msra.mxu0 %v1165
          %1253 = vmatprep.subr.mxu0 0.0
          %1254 = vmatpush1.msra.mxu0 %v1164
          %1255 = vmatprep.subr.mxu0 0.0
          %1256 = vmatpush1.msra.mxu0 %v1163
          %1257 = vmatprep.subr.mxu0 0.0
          %1258 = vmatpush2.msra.mxu0 0.0
          %1259 = vmatprep.subr.mxu0 0.0
          %1260 = vmatpush2.msra.mxu0 0.0
          %1261 = vmatprep.subr.mxu0 0.0
          %1262 = vmatpush2.msra.mxu0 0.0
          %1263 = vmatprep.subr.mxu0 0.0
          %1264 = vmatpush2.msra.mxu0 0.0
          %1265 = vmatprep.subr.mxu0 0.0
          %1266 = vmatpush2.msra.mxu0 0.0
          %1267 = vmatprep.subr.mxu0 0.0
          %1268 = vmatpush2.msra.mxu0 0.0
          %1269 = vmatprep.subr.mxu0 0.0
          %1270 = vmatpush2.msra.mxu0 0.0
          %1271 = vmatprep.subr.mxu0 0.0
          %1272 = vmatpush2.msra.mxu0 0.0
          %1273 = vmatprep.subr.mxu0 0.0
          %1274 = vmatpush2.msra.mxu0 0.0
          %1275 = vmatprep.subr.mxu0 0.0
          %1276 = vmatpush2.msra.mxu0 0.0
          %1277 = vmatprep.subr.mxu0 0.0
          %1278 = vmatpush2.msra.mxu0 0.0
          %1279 = vmatprep.subr.mxu0 0.0
          %1280 = vmatpush2.msra.mxu0 0.0
          %1281 = vmatprep.subr.mxu0 0.0
          %1282 = vmatpush2.msra.mxu0 0.0
          %1283 = vmatprep.subr.mxu0 0.0
          %1284 = vmatpush2.msra.mxu0 0.0
          %1285 = vmatprep.subr.mxu0 0.0
          %1286 = vmatpush2.msra.mxu0 0.0
          %1287 = vmatprep.subr.mxu0 0.0
          %1288 = vmatpush2.msra.mxu0 0.0
          %1289 = vmatprep.mubr.f32.mxu0 0.0
          %1290 = vmatmul.mubr.f32.gmra.mxu0 %v1223
          %v1291 = vpop.f32.mrf.mxu0
          %v1292 = vadd.f32 %v1181, %v1291
          %v1293 = vpop.f32.mrf.mxu0
          %1294 = vdwg.mxu0
          %v1295 = vadd.f32 %v1213, %v1292
          %v1296 = vxor.u32 %v1295, 2147483648
          %v1297 = vmul.f32 %v1296, 1.442695
          %v1298 = vpow.pop %v1297
          %v1299 = vadd.f32 %v1298, 1.0
          %v1300 = vrcp.pop %v1299
          %v1301 = vmul.f32 1.0, %v1300
          %1303 = vrot.lane.b32.xlu0 %v1292, 64
          %v1304 = vpop.permute.xlu0 %1303
          %v1306 = vmul.f32 %v1301, %v1304
          %1308 = vrot.lane.b32.xlu0 %v1306, 64
          %v1309 = vpop.permute.xlu0 %1308
          %v1311 = vadd.f32 %v1213, %v1309
          %v1312 = vtanh.pop %v1311
          %v1313 = vsub.f32 1.0, %v1301
          %1315 = vrot.lane.b32.xlu0 %v1312, 96
          %v1316 = vpop.permute.xlu0 %1315
          %v1318 = vmul.f32 %v1313, %v1316
          %1319 = vrot.lane.b32.xlu0 %v1208, 32
          %v1320 = vpop.permute.xlu0 %1319
          %v1322 = vmul.f32 %v1301, %v1320
          %v1323 = vadd.f32 %v1318, %v1322
          %1325 = vrot.lane.b32.xlu0 %v1323, 96
          %v1326 = vpop.permute.xlu0 %1325
          %v1327 = vsel %vm1221, %v1326, 0
          %1329 = vmatprep.subr.mxu0 0.0
          %1330 = vmatpush1.msra.mxu0 0.0
          %1331 = vmatprep.subr.mxu0 0.0
          %1332 = vmatpush1.msra.mxu0 0.0
          %1333 = vmatprep.subr.mxu0 0.0
          %1334 = vmatpush1.msra.mxu0 0.0
          %1335 = vmatprep.subr.mxu0 0.0
          %1336 = vmatpush1.msra.mxu0 0.0
          %1337 = vmatprep.subr.mxu0 0.0
          %1338 = vmatpush1.msra.mxu0 0.0
          %1339 = vmatprep.subr.mxu0 0.0
          %1340 = vmatpush1.msra.mxu0 0.0
          %1341 = vmatprep.subr.mxu0 0.0
          %1342 = vmatpush1.msra.mxu0 0.0
          %1343 = vmatprep.subr.mxu0 0.0
          %1344 = vmatpush1.msra.mxu0 0.0
          %1345 = vmatprep.subr.mxu0 0.0
          %1346 = vmatpush1.msra.mxu0 0.0
          %1347 = vmatprep.subr.mxu0 0.0
          %1348 = vmatpush1.msra.mxu0 0.0
          %1349 = vmatprep.subr.mxu0 0.0
          %1350 = vmatpush1.msra.mxu0 0.0
          %1351 = vmatprep.subr.mxu0 0.0
          %1352 = vmatpush1.msra.mxu0 0.0
          %1353 = vmatprep.subr.mxu0 0.0
          %1354 = vmatpush1.msra.mxu0 %v1175
          %1355 = vmatprep.subr.mxu0 0.0
          %1356 = vmatpush1.msra.mxu0 %v1174
          %1357 = vmatprep.subr.mxu0 0.0
          %1358 = vmatpush1.msra.mxu0 %v1173
          %1359 = vmatprep.subr.mxu0 0.0
          %1360 = vmatpush1.msra.mxu0 %v1172
          %1361 = vmatprep.subr.mxu0 0.0
          %1362 = vmatpush2.msra.mxu0 0.0
          %1363 = vmatprep.subr.mxu0 0.0
          %1364 = vmatpush2.msra.mxu0 0.0
          %1365 = vmatprep.subr.mxu0 0.0
          %1366 = vmatpush2.msra.mxu0 0.0
          %1367 = vmatprep.subr.mxu0 0.0
          %1368 = vmatpush2.msra.mxu0 0.0
          %1369 = vmatprep.subr.mxu0 0.0
          %1370 = vmatpush2.msra.mxu0 0.0
          %1371 = vmatprep.subr.mxu0 0.0
          %1372 = vmatpush2.msra.mxu0 0.0
          %1373 = vmatprep.subr.mxu0 0.0
          %1374 = vmatpush2.msra.mxu0 0.0
          %1375 = vmatprep.subr.mxu0 0.0
          %1376 = vmatpush2.msra.mxu0 0.0
          %1377 = vmatprep.subr.mxu0 0.0
          %1378 = vmatpush2.msra.mxu0 0.0
          %1379 = vmatprep.subr.mxu0 0.0
          %1380 = vmatpush2.msra.mxu0 0.0
          %1381 = vmatprep.subr.mxu0 0.0
          %1382 = vmatpush2.msra.mxu0 0.0
          %1383 = vmatprep.subr.mxu0 0.0
          %1384 = vmatpush2.msra.mxu0 0.0
          %1385 = vmatprep.subr.mxu0 0.0
          %1386 = vmatpush2.msra.mxu0 0.0
          %1387 = vmatprep.subr.mxu0 0.0
          %1388 = vmatpush2.msra.mxu0 0.0
          %1389 = vmatprep.subr.mxu0 0.0
          %1390 = vmatpush2.msra.mxu0 0.0
          %1391 = vmatprep.subr.mxu0 0.0
          %1392 = vmatpush2.msra.mxu0 0.0
          %1393 = vmatprep.mubr.f32.mxu0 0.0
          %1394 = vmatmul.mubr.f32.gmra.mxu0 %v1327
          %v1395 = vpop.f32.mrf.mxu0
          %v1396 = vadd.f32 %v1197, %v1395
          %v1397 = vpop.f32.mrf.mxu0
          %1398 = vdwg.mxu0
          %v1400 = vsel %vm1221, %v1209, 0
          %1402 = vmatprep.subr.mxu0 0.0
          %1403 = vmatpush1.msra.mxu0 0.0
          %1404 = vmatprep.subr.mxu0 0.0
          %1405 = vmatpush1.msra.mxu0 0.0
          %1406 = vmatprep.subr.mxu0 0.0
          %1407 = vmatpush1.msra.mxu0 0.0
          %1408 = vmatprep.subr.mxu0 0.0
          %1409 = vmatpush1.msra.mxu0 0.0
          %1410 = vmatprep.subr.mxu0 0.0
          %1411 = vmatpush1.msra.mxu0 0.0
          %1412 = vmatprep.subr.mxu0 0.0
          %1413 = vmatpush1.msra.mxu0 0.0
          %1414 = vmatprep.subr.mxu0 0.0
          %1415 = vmatpush1.msra.mxu0 0.0
          %1416 = vmatprep.subr.mxu0 0.0
          %1417 = vmatpush1.msra.mxu0 0.0
          %1418 = vmatprep.subr.mxu0 0.0
          %1419 = vmatpush1.msra.mxu0 0.0
          %1420 = vmatprep.subr.mxu0 0.0
          %1421 = vmatpush1.msra.mxu0 0.0
          %1422 = vmatprep.subr.mxu0 0.0
          %1423 = vmatpush1.msra.mxu0 0.0
          %1424 = vmatprep.subr.mxu0 0.0
          %1425 = vmatpush1.msra.mxu0 0.0
          %1426 = vmatprep.subr.mxu0 0.0
          %1427 = vmatpush1.msra.mxu0 %v1171
          %1428 = vmatprep.subr.mxu0 0.0
          %1429 = vmatpush1.msra.mxu0 %v1170
          %1430 = vmatprep.subr.mxu0 0.0
          %1431 = vmatpush1.msra.mxu0 %v1169
          %1432 = vmatprep.subr.mxu0 0.0
          %1433 = vmatpush1.msra.mxu0 %v1168
          %1434 = vmatprep.subr.mxu0 0.0
          %1435 = vmatpush2.msra.mxu0 0.0
          %1436 = vmatprep.subr.mxu0 0.0
          %1437 = vmatpush2.msra.mxu0 0.0
          %1438 = vmatprep.subr.mxu0 0.0
          %1439 = vmatpush2.msra.mxu0 0.0
          %1440 = vmatprep.subr.mxu0 0.0
          %1441 = vmatpush2.msra.mxu0 0.0
          %1442 = vmatprep.subr.mxu0 0.0
          %1443 = vmatpush2.msra.mxu0 0.0
          %1444 = vmatprep.subr.mxu0 0.0
          %1445 = vmatpush2.msra.mxu0 0.0
          %1446 = vmatprep.subr.mxu0 0.0
          %1447 = vmatpush2.msra.mxu0 0.0
          %1448 = vmatprep.subr.mxu0 0.0
          %1449 = vmatpush2.msra.mxu0 0.0
          %1450 = vmatprep.subr.mxu0 0.0
          %1451 = vmatpush2.msra.mxu0 0.0
          %1452 = vmatprep.subr.mxu0 0.0
          %1453 = vmatpush2.msra.mxu0 0.0
          %1454 = vmatprep.subr.mxu0 0.0
          %1455 = vmatpush2.msra.mxu0 0.0
          %1456 = vmatprep.subr.mxu0 0.0
          %1457 = vmatpush2.msra.mxu0 0.0
          %1458 = vmatprep.subr.mxu0 0.0
          %1459 = vmatpush2.msra.mxu0 0.0
          %1460 = vmatprep.subr.mxu0 0.0
          %1461 = vmatpush2.msra.mxu0 0.0
          %1462 = vmatprep.subr.mxu0 0.0
          %1463 = vmatpush2.msra.mxu0 0.0
          %1464 = vmatprep.subr.mxu0 0.0
          %1465 = vmatpush2.msra.mxu0 0.0
          %1466 = vmatprep.mubr.f32.mxu0 0.0
          %1467 = vmatmul.mubr.f32.gmra.mxu0 %v1400
          %v1468 = vpop.f32.mrf.mxu0
          %v1469 = vadd.f32 %v1189, %v1468
          %v1470 = vpop.f32.mrf.mxu0
          %1471 = vdwg.mxu0
          %v1472 = vadd.f32 %v1396, %v1469
          %v1473 = vxor.u32 %v1472, 2147483648
          %v1474 = vmul.f32 %v1473, 1.442695
          %v1475 = vpow.pop %v1474
          %v1476 = vadd.f32 %v1475, 1.0
          %v1477 = vrcp.pop %v1476
          %v1478 = vmul.f32 1.0, %v1477
          %1480 = vrot.lane.b32.xlu0 %v1469, 64
          %v1481 = vpop.permute.xlu0 %1480
          %v1483 = vmul.f32 %v1478, %v1481
          %1485 = vrot.lane.b32.xlu0 %v1483, 64
          %v1486 = vpop.permute.xlu0 %1485
          %v1488 = vadd.f32 %v1396, %v1486
          %v1489 = vtanh.pop %v1488
          %v1490 = vsub.f32 1.0, %v1478
          %1492 = vrot.lane.b32.xlu0 %v1489, 96
          %v1493 = vpop.permute.xlu0 %1492
          %v1495 = vmul.f32 %v1490, %v1493
          %1496 = vrot.lane.b32.xlu0 %v1209, 32
          %v1497 = vpop.permute.xlu0 %1496
          %v1499 = vmul.f32 %v1478, %v1497
          %v1500 = vadd.f32 %v1495, %v1499
          %1501 = vmatprep.subr.mxu0 0.0
          %1502 = vmatpush1.msra.mxu0 0.0
          %1503 = vmatprep.subr.mxu0 0.0
          %1504 = vmatpush1.msra.mxu0 0.0
          %1505 = vmatprep.subr.mxu0 0.0
          %1506 = vmatpush1.msra.mxu0 0.0
          %1507 = vmatprep.subr.mxu0 0.0
          %1508 = vmatpush1.msra.mxu0 0.0
          %1509 = vmatprep.subr.mxu0 0.0
          %1510 = vmatpush1.msra.mxu0 0.0
          %1511 = vmatprep.subr.mxu0 0.0
          %1512 = vmatpush1.msra.mxu0 0.0
          %1513 = vmatprep.subr.mxu0 0.0
          %1514 = vmatpush1.msra.mxu0 0.0
          %1515 = vmatprep.subr.mxu0 0.0
          %1516 = vmatpush1.msra.mxu0 0.0
          %1517 = vmatprep.subr.mxu0 0.0
          %1518 = vmatpush1.msra.mxu0 0.0
          %1519 = vmatprep.subr.mxu0 0.0
          %1520 = vmatpush1.msra.mxu0 0.0
          %1521 = vmatprep.subr.mxu0 0.0
          %1522 = vmatpush1.msra.mxu0 0.0
          %1523 = vmatprep.subr.mxu0 0.0
          %1524 = vmatpush1.msra.mxu0 0.0
          %1525 = vmatprep.subr.mxu0 0.0
          %1526 = vmatpush1.msra.mxu0 %v1166
          %1527 = vmatprep.subr.mxu0 0.0
          %1528 = vmatpush1.msra.mxu0 %v1165
          %1529 = vmatprep.subr.mxu0 0.0
          %1530 = vmatpush1.msra.mxu0 %v1164
          %1531 = vmatprep.subr.mxu0 0.0
          %1532 = vmatpush1.msra.mxu0 %v1163
          %1533 = vmatprep.subr.mxu0 0.0
          %1534 = vmatpush2.msra.mxu0 0.0
          %1535 = vmatprep.subr.mxu0 0.0
          %1536 = vmatpush2.msra.mxu0 0.0
          %1537 = vmatprep.subr.mxu0 0.0
          %1538 = vmatpush2.msra.mxu0 0.0
          %1539 = vmatprep.subr.mxu0 0.0
          %1540 = vmatpush2.msra.mxu0 0.0
          %1541 = vmatprep.subr.mxu0 0.0
          %1542 = vmatpush2.msra.mxu0 0.0
          %1543 = vmatprep.subr.mxu0 0.0
          %1544 = vmatpush2.msra.mxu0 0.0
          %1545 = vmatprep.subr.mxu0 0.0
          %1546 = vmatpush2.msra.mxu0 0.0
          %1547 = vmatprep.subr.mxu0 0.0
          %1548 = vmatpush2.msra.mxu0 0.0
          %1549 = vmatprep.subr.mxu0 0.0
          %1550 = vmatpush2.msra.mxu0 0.0
          %1551 = vmatprep.subr.mxu0 0.0
          %1552 = vmatpush2.msra.mxu0 0.0
          %1553 = vmatprep.subr.mxu0 0.0
          %1554 = vmatpush2.msra.mxu0 0.0
          %1555 = vmatprep.subr.mxu0 0.0
          %1556 = vmatpush2.msra.mxu0 0.0
          %1557 = vmatprep.subr.mxu0 0.0
          %1558 = vmatpush2.msra.mxu0 0.0
          %1559 = vmatprep.subr.mxu0 0.0
          %1560 = vmatpush2.msra.mxu0 0.0
          %1561 = vmatprep.subr.mxu0 0.0
          %1562 = vmatpush2.msra.mxu0 0.0
          %1563 = vmatprep.subr.mxu0 0.0
          %1564 = vmatpush2.msra.mxu0 0.0
          %1565 = vmatprep.mubr.f32.mxu0 0.0
          %1566 = vmatmul.mubr.f32.gmra.mxu0 %v1327
          %v1567 = vpop.f32.mrf.mxu0
          %v1568 = vadd.f32 %v1181, %v1567
          %v1569 = vpop.f32.mrf.mxu0
          %1570 = vdwg.mxu0
          %v1571 = vadd.f32 %v1214, %v1568
          %v1572 = vxor.u32 %v1571, 2147483648
          %v1573 = vmul.f32 %v1572, 1.442695
          %v1574 = vpow.pop %v1573
          %v1575 = vadd.f32 %v1574, 1.0
          %v1576 = vrcp.pop %v1575
          %v1577 = vmul.f32 1.0, %v1576
          %1579 = vrot.lane.b32.xlu0 %v1568, 64
          %v1580 = vpop.permute.xlu0 %1579
          %v1582 = vmul.f32 %v1577, %v1580
          %1584 = vrot.lane.b32.xlu0 %v1582, 64
          %v1585 = vpop.permute.xlu0 %1584
          %v1587 = vadd.f32 %v1214, %v1585
          %v1588 = vtanh.pop %v1587
          %v1589 = vsub.f32 1.0, %v1577
          %1591 = vrot.lane.b32.xlu0 %v1588, 96
          %v1592 = vpop.permute.xlu0 %1591
          %v1594 = vmul.f32 %v1589, %v1592
          %v1595 = vmul.f32 %v1577, %v1323
          %v1596 = vadd.f32 %v1594, %v1595
          %1598 = vrot.lane.b32.xlu0 %v1596, 96
          %v1599 = vpop.permute.xlu0 %1598
          %v1600 = vsel %vm1221, %v1599, 0
          %1602 = vmatprep.subr.mxu0 0.0
          %1603 = vmatpush1.msra.mxu0 0.0
          %1604 = vmatprep.subr.mxu0 0.0
          %1605 = vmatpush1.msra.mxu0 0.0
          %1606 = vmatprep.subr.mxu0 0.0
          %1607 = vmatpush1.msra.mxu0 0.0
          %1608 = vmatprep.subr.mxu0 0.0
          %1609 = vmatpush1.msra.mxu0 0.0
          %1610 = vmatprep.subr.mxu0 0.0
          %1611 = vmatpush1.msra.mxu0 0.0
          %1612 = vmatprep.subr.mxu0 0.0
          %1613 = vmatpush1.msra.mxu0 0.0
          %1614 = vmatprep.subr.mxu0 0.0
          %1615 = vmatpush1.msra.mxu0 0.0
          %1616 = vmatprep.subr.mxu0 0.0
          %1617 = vmatpush1.msra.mxu0 0.0
          %1618 = vmatprep.subr.mxu0 0.0
          %1619 = vmatpush1.msra.mxu0 0.0
          %1620 = vmatprep.subr.mxu0 0.0
          %1621 = vmatpush1.msra.mxu0 0.0
          %1622 = vmatprep.subr.mxu0 0.0
          %1623 = vmatpush1.msra.mxu0 0.0
          %1624 = vmatprep.subr.mxu0 0.0
          %1625 = vmatpush1.msra.mxu0 0.0
          %1626 = vmatprep.subr.mxu0 0.0
          %1627 = vmatpush1.msra.mxu0 %v1175
          %1628 = vmatprep.subr.mxu0 0.0
          %1629 = vmatpush1.msra.mxu0 %v1174
          %1630 = vmatprep.subr.mxu0 0.0
          %1631 = vmatpush1.msra.mxu0 %v1173
          %1632 = vmatprep.subr.mxu0 0.0
          %1633 = vmatpush1.msra.mxu0 %v1172
          %1634 = vmatprep.subr.mxu0 0.0
          %1635 = vmatpush2.msra.mxu0 0.0
          %1636 = vmatprep.subr.mxu0 0.0
          %1637 = vmatpush2.msra.mxu0 0.0
          %1638 = vmatprep.subr.mxu0 0.0
          %1639 = vmatpush2.msra.mxu0 0.0
          %1640 = vmatprep.subr.mxu0 0.0
          %1641 = vmatpush2.msra.mxu0 0.0
          %1642 = vmatprep.subr.mxu0 0.0
          %1643 = vmatpush2.msra.mxu0 0.0
          %1644 = vmatprep.subr.mxu0 0.0
          %1645 = vmatpush2.msra.mxu0 0.0
          %1646 = vmatprep.subr.mxu0 0.0
          %1647 = vmatpush2.msra.mxu0 0.0
          %1648 = vmatprep.subr.mxu0 0.0
          %1649 = vmatpush2.msra.mxu0 0.0
          %1650 = vmatprep.subr.mxu0 0.0
          %1651 = vmatpush2.msra.mxu0 0.0
          %1652 = vmatprep.subr.mxu0 0.0
          %1653 = vmatpush2.msra.mxu0 0.0
          %1654 = vmatprep.subr.mxu0 0.0
          %1655 = vmatpush2.msra.mxu0 0.0
          %1656 = vmatprep.subr.mxu0 0.0
          %1657 = vmatpush2.msra.mxu0 0.0
          %1658 = vmatprep.subr.mxu0 0.0
          %1659 = vmatpush2.msra.mxu0 0.0
          %1660 = vmatprep.subr.mxu0 0.0
          %1661 = vmatpush2.msra.mxu0 0.0
          %1662 = vmatprep.subr.mxu0 0.0
          %1663 = vmatpush2.msra.mxu0 0.0
          %1664 = vmatprep.subr.mxu0 0.0
          %1665 = vmatpush2.msra.mxu0 0.0
          %1666 = vmatprep.mubr.f32.mxu0 0.0
          %1667 = vmatmul.mubr.f32.gmra.mxu0 %v1600
          %v1668 = vpop.f32.mrf.mxu0
          %v1669 = vadd.f32 %v1197, %v1668
          %v1670 = vpop.f32.mrf.mxu0
          %1671 = vdwg.mxu0
          %1673 = vrot.lane.b32.xlu0 %v1500, 96
          %v1674 = vpop.permute.xlu0 %1673
          %v1675 = vsel %vm1221, %v1674, 0
          %1677 = vmatprep.subr.mxu0 0.0
          %1678 = vmatpush1.msra.mxu0 0.0
          %1679 = vmatprep.subr.mxu0 0.0
          %1680 = vmatpush1.msra.mxu0 0.0
          %1681 = vmatprep.subr.mxu0 0.0
          %1682 = vmatpush1.msra.mxu0 0.0
          %1683 = vmatprep.subr.mxu0 0.0
          %1684 = vmatpush1.msra.mxu0 0.0
          %1685 = vmatprep.subr.mxu0 0.0
          %1686 = vmatpush1.msra.mxu0 0.0
          %1687 = vmatprep.subr.mxu0 0.0
          %1688 = vmatpush1.msra.mxu0 0.0
          %1689 = vmatprep.subr.mxu0 0.0
          %1690 = vmatpush1.msra.mxu0 0.0
          %1691 = vmatprep.subr.mxu0 0.0
          %1692 = vmatpush1.msra.mxu0 0.0
          %1693 = vmatprep.subr.mxu0 0.0
          %1694 = vmatpush1.msra.mxu0 0.0
          %1695 = vmatprep.subr.mxu0 0.0
          %1696 = vmatpush1.msra.mxu0 0.0
          %1697 = vmatprep.subr.mxu0 0.0
          %1698 = vmatpush1.msra.mxu0 0.0
          %1699 = vmatprep.subr.mxu0 0.0
          %1700 = vmatpush1.msra.mxu0 0.0
          %1701 = vmatprep.subr.mxu0 0.0
          %1702 = vmatpush1.msra.mxu0 %v1171
          %1703 = vmatprep.subr.mxu0 0.0
          %1704 = vmatpush1.msra.mxu0 %v1170
          %1705 = vmatprep.subr.mxu0 0.0
          %1706 = vmatpush1.msra.mxu0 %v1169
          %1707 = vmatprep.subr.mxu0 0.0
          %1708 = vmatpush1.msra.mxu0 %v1168
          %1709 = vmatprep.subr.mxu0 0.0
          %1710 = vmatpush2.msra.mxu0 0.0
          %1711 = vmatprep.subr.mxu0 0.0
          %1712 = vmatpush2.msra.mxu0 0.0
          %1713 = vmatprep.subr.mxu0 0.0
          %1714 = vmatpush2.msra.mxu0 0.0
          %1715 = vmatprep.subr.mxu0 0.0
          %1716 = vmatpush2.msra.mxu0 0.0
          %1717 = vmatprep.subr.mxu0 0.0
          %1718 = vmatpush2.msra.mxu0 0.0
          %1719 = vmatprep.subr.mxu0 0.0
          %1720 = vmatpush2.msra.mxu0 0.0
          %1721 = vmatprep.subr.mxu0 0.0
          %1722 = vmatpush2.msra.mxu0 0.0
          %1723 = vmatprep.subr.mxu0 0.0
          %1724 = vmatpush2.msra.mxu0 0.0
          %1725 = vmatprep.subr.mxu0 0.0
          %1726 = vmatpush2.msra.mxu0 0.0
          %1727 = vmatprep.subr.mxu0 0.0
          %1728 = vmatpush2.msra.mxu0 0.0
          %1729 = vmatprep.subr.mxu0 0.0
          %1730 = vmatpush2.msra.mxu0 0.0
          %1731 = vmatprep.subr.mxu0 0.0
          %1732 = vmatpush2.msra.mxu0 0.0
          %1733 = vmatprep.subr.mxu0 0.0
          %1734 = vmatpush2.msra.mxu0 0.0
          %1735 = vmatprep.subr.mxu0 0.0
          %1736 = vmatpush2.msra.mxu0 0.0
          %1737 = vmatprep.subr.mxu0 0.0
          %1738 = vmatpush2.msra.mxu0 0.0
          %1739 = vmatprep.subr.mxu0 0.0
          %1740 = vmatpush2.msra.mxu0 0.0
          %1741 = vmatprep.mubr.f32.mxu0 0.0
          %1742 = vmatmul.mubr.f32.gmra.mxu0 %v1675
          %v1743 = vpop.f32.mrf.mxu0
          %v1744 = vadd.f32 %v1189, %v1743
          %v1745 = vpop.f32.mrf.mxu0
          %1746 = vdwg.mxu0
          %v1747 = vadd.f32 %v1669, %v1744
          %v1748 = vxor.u32 %v1747, 2147483648
          %v1749 = vmul.f32 %v1748, 1.442695
          %v1750 = vpow.pop %v1749
          %v1751 = vadd.f32 %v1750, 1.0
          %v1752 = vrcp.pop %v1751
          %v1753 = vmul.f32 1.0, %v1752
          %1755 = vrot.lane.b32.xlu0 %v1744, 64
          %v1756 = vpop.permute.xlu0 %1755
          %v1758 = vmul.f32 %v1753, %v1756
          %1760 = vrot.lane.b32.xlu0 %v1758, 64
          %v1761 = vpop.permute.xlu0 %1760
          %v1763 = vadd.f32 %v1669, %v1761
          %v1764 = vtanh.pop %v1763
          %v1765 = vsub.f32 1.0, %v1753
          %1767 = vrot.lane.b32.xlu0 %v1764, 96
          %v1768 = vpop.permute.xlu0 %1767
          %v1770 = vmul.f32 %v1765, %v1768
          %v1771 = vmul.f32 %v1753, %v1500
          %v1772 = vadd.f32 %v1770, %v1771
          %1773 = vmatprep.subr.mxu0 0.0
          %1774 = vmatpush1.msra.mxu0 0.0
          %1775 = vmatprep.subr.mxu0 0.0
          %1776 = vmatpush1.msra.mxu0 0.0
          %1777 = vmatprep.subr.mxu0 0.0
          %1778 = vmatpush1.msra.mxu0 0.0
          %1779 = vmatprep.subr.mxu0 0.0
          %1780 = vmatpush1.msra.mxu0 0.0
          %1781 = vmatprep.subr.mxu0 0.0
          %1782 = vmatpush1.msra.mxu0 0.0
          %1783 = vmatprep.subr.mxu0 0.0
          %1784 = vmatpush1.msra.mxu0 0.0
          %1785 = vmatprep.subr.mxu0 0.0
          %1786 = vmatpush1.msra.mxu0 0.0
          %1787 = vmatprep.subr.mxu0 0.0
          %1788 = vmatpush1.msra.mxu0 0.0
          %1789 = vmatprep.subr.mxu0 0.0
          %1790 = vmatpush1.msra.mxu0 0.0
          %1791 = vmatprep.subr.mxu0 0.0
          %1792 = vmatpush1.msra.mxu0 0.0
          %1793 = vmatprep.subr.mxu0 0.0
          %1794 = vmatpush1.msra.mxu0 0.0
          %1795 = vmatprep.subr.mxu0 0.0
          %1796 = vmatpush1.msra.mxu0 0.0
          %1797 = vmatprep.subr.mxu0 0.0
          %1798 = vmatpush1.msra.mxu0 %v1166
          %1799 = vmatprep.subr.mxu0 0.0
          %1800 = vmatpush1.msra.mxu0 %v1165
          %1801 = vmatprep.subr.mxu0 0.0
          %1802 = vmatpush1.msra.mxu0 %v1164
          %1803 = vmatprep.subr.mxu0 0.0
          %1804 = vmatpush1.msra.mxu0 %v1163
          %1805 = vmatprep.subr.mxu0 0.0
          %1806 = vmatpush2.msra.mxu0 0.0
          %1807 = vmatprep.subr.mxu0 0.0
          %1808 = vmatpush2.msra.mxu0 0.0
          %1809 = vmatprep.subr.mxu0 0.0
          %1810 = vmatpush2.msra.mxu0 0.0
          %1811 = vmatprep.subr.mxu0 0.0
          %1812 = vmatpush2.msra.mxu0 0.0
          %1813 = vmatprep.subr.mxu0 0.0
          %1814 = vmatpush2.msra.mxu0 0.0
          %1815 = vmatprep.subr.mxu0 0.0
          %1816 = vmatpush2.msra.mxu0 0.0
          %1817 = vmatprep.subr.mxu0 0.0
          %1818 = vmatpush2.msra.mxu0 0.0
          %1819 = vmatprep.subr.mxu0 0.0
          %1820 = vmatpush2.msra.mxu0 0.0
          %1821 = vmatprep.subr.mxu0 0.0
          %1822 = vmatpush2.msra.mxu0 0.0
          %1823 = vmatprep.subr.mxu0 0.0
          %1824 = vmatpush2.msra.mxu0 0.0
          %1825 = vmatprep.subr.mxu0 0.0
          %1826 = vmatpush2.msra.mxu0 0.0
          %1827 = vmatprep.subr.mxu0 0.0
          %1828 = vmatpush2.msra.mxu0 0.0
          %1829 = vmatprep.subr.mxu0 0.0
          %1830 = vmatpush2.msra.mxu0 0.0
          %1831 = vmatprep.subr.mxu0 0.0
          %1832 = vmatpush2.msra.mxu0 0.0
          %1833 = vmatprep.subr.mxu0 0.0
          %1834 = vmatpush2.msra.mxu0 0.0
          %1835 = vmatprep.subr.mxu0 0.0
          %1836 = vmatpush2.msra.mxu0 0.0
          %1837 = vmatprep.mubr.f32.mxu0 0.0
          %1838 = vmatmul.mubr.f32.gmra.mxu0 %v1600
          %v1839 = vpop.f32.mrf.mxu0
          %v1840 = vadd.f32 %v1181, %v1839
          %v1841 = vpop.f32.mrf.mxu0
          %1842 = vdwg.mxu0
          %v1843 = vadd.f32 %v1215, %v1840
          %v1844 = vxor.u32 %v1843, 2147483648
          %v1845 = vmul.f32 %v1844, 1.442695
          %v1846 = vpow.pop %v1845
          %v1847 = vadd.f32 %v1846, 1.0
          %v1848 = vrcp.pop %v1847
          %v1849 = vmul.f32 1.0, %v1848
          %1851 = vrot.lane.b32.xlu0 %v1840, 64
          %v1852 = vpop.permute.xlu0 %1851
          %v1854 = vmul.f32 %v1849, %v1852
          %1856 = vrot.lane.b32.xlu0 %v1854, 64
          %v1857 = vpop.permute.xlu0 %1856
          %v1859 = vadd.f32 %v1215, %v1857
          %v1860 = vtanh.pop %v1859
          %v1861 = vsub.f32 1.0, %v1849
          %1863 = vrot.lane.b32.xlu0 %v1860, 96
          %v1864 = vpop.permute.xlu0 %1863
          %v1866 = vmul.f32 %v1861, %v1864
          %v1867 = vmul.f32 %v1849, %v1596
          %v1868 = vadd.f32 %v1866, %v1867
          %1870 = vrot.lane.b32.xlu0 %v1868, 96
          %v1871 = vpop.permute.xlu0 %1870
          %v1872 = vsel %vm1221, %v1871, 0
          %1874 = vmatprep.subr.mxu0 0.0
          %1875 = vmatpush1.msra.mxu0 0.0
          %1876 = vmatprep.subr.mxu0 0.0
          %1877 = vmatpush1.msra.mxu0 0.0
          %1878 = vmatprep.subr.mxu0 0.0
          %1879 = vmatpush1.msra.mxu0 0.0
          %1880 = vmatprep.subr.mxu0 0.0
          %1881 = vmatpush1.msra.mxu0 0.0
          %1882 = vmatprep.subr.mxu0 0.0
          %1883 = vmatpush1.msra.mxu0 0.0
          %1884 = vmatprep.subr.mxu0 0.0
          %1885 = vmatpush1.msra.mxu0 0.0
          %1886 = vmatprep.subr.mxu0 0.0
          %1887 = vmatpush1.msra.mxu0 0.0
          %1888 = vmatprep.subr.mxu0 0.0
          %1889 = vmatpush1.msra.mxu0 0.0
          %1890 = vmatprep.subr.mxu0 0.0
          %1891 = vmatpush1.msra.mxu0 0.0
          %1892 = vmatprep.subr.mxu0 0.0
          %1893 = vmatpush1.msra.mxu0 0.0
          %1894 = vmatprep.subr.mxu0 0.0
          %1895 = vmatpush1.msra.mxu0 0.0
          %1896 = vmatprep.subr.mxu0 0.0
          %1897 = vmatpush1.msra.mxu0 0.0
          %1898 = vmatprep.subr.mxu0 0.0
          %1899 = vmatpush1.msra.mxu0 %v1175
          %1900 = vmatprep.subr.mxu0 0.0
          %1901 = vmatpush1.msra.mxu0 %v1174
          %1902 = vmatprep.subr.mxu0 0.0
          %1903 = vmatpush1.msra.mxu0 %v1173
          %1904 = vmatprep.subr.mxu0 0.0
          %1905 = vmatpush1.msra.mxu0 %v1172
          %1906 = vmatprep.subr.mxu0 0.0
          %1907 = vmatpush2.msra.mxu0 0.0
          %1908 = vmatprep.subr.mxu0 0.0
          %1909 = vmatpush2.msra.mxu0 0.0
          %1910 = vmatprep.subr.mxu0 0.0
          %1911 = vmatpush2.msra.mxu0 0.0
          %1912 = vmatprep.subr.mxu0 0.0
          %1913 = vmatpush2.msra.mxu0 0.0
          %1914 = vmatprep.subr.mxu0 0.0
          %1915 = vmatpush2.msra.mxu0 0.0
          %1916 = vmatprep.subr.mxu0 0.0
          %1917 = vmatpush2.msra.mxu0 0.0
          %1918 = vmatprep.subr.mxu0 0.0
          %1919 = vmatpush2.msra.mxu0 0.0
          %1920 = vmatprep.subr.mxu0 0.0
          %1921 = vmatpush2.msra.mxu0 0.0
          %1922 = vmatprep.subr.mxu0 0.0
          %1923 = vmatpush2.msra.mxu0 0.0
          %1924 = vmatprep.subr.mxu0 0.0
          %1925 = vmatpush2.msra.mxu0 0.0
          %1926 = vmatprep.subr.mxu0 0.0
          %1927 = vmatpush2.msra.mxu0 0.0
          %1928 = vmatprep.subr.mxu0 0.0
          %1929 = vmatpush2.msra.mxu0 0.0
          %1930 = vmatprep.subr.mxu0 0.0
          %1931 = vmatpush2.msra.mxu0 0.0
          %1932 = vmatprep.subr.mxu0 0.0
          %1933 = vmatpush2.msra.mxu0 0.0
          %1934 = vmatprep.subr.mxu0 0.0
          %1935 = vmatpush2.msra.mxu0 0.0
          %1936 = vmatprep.subr.mxu0 0.0
          %1937 = vmatpush2.msra.mxu0 0.0
          %1938 = vmatprep.mubr.f32.mxu0 0.0
          %1939 = vmatmul.mubr.f32.gmra.mxu0 %v1872
          %v1940 = vpop.f32.mrf.mxu0
          %v1941 = vadd.f32 %v1197, %v1940
          %v1942 = vpop.f32.mrf.mxu0
          %1943 = vdwg.mxu0
          %1945 = vrot.lane.b32.xlu0 %v1772, 96
          %v1946 = vpop.permute.xlu0 %1945
          %v1947 = vsel %vm1221, %v1946, 0
          %1949 = vmatprep.subr.mxu0 0.0
          %1950 = vmatpush1.msra.mxu0 0.0
          %1951 = vmatprep.subr.mxu0 0.0
          %1952 = vmatpush1.msra.mxu0 0.0
          %1953 = vmatprep.subr.mxu0 0.0
          %1954 = vmatpush1.msra.mxu0 0.0
          %1955 = vmatprep.subr.mxu0 0.0
          %1956 = vmatpush1.msra.mxu0 0.0
          %1957 = vmatprep.subr.mxu0 0.0
          %1958 = vmatpush1.msra.mxu0 0.0
          %1959 = vmatprep.subr.mxu0 0.0
          %1960 = vmatpush1.msra.mxu0 0.0
          %1961 = vmatprep.subr.mxu0 0.0
          %1962 = vmatpush1.msra.mxu0 0.0
          %1963 = vmatprep.subr.mxu0 0.0
          %1964 = vmatpush1.msra.mxu0 0.0
          %1965 = vmatprep.subr.mxu0 0.0
          %1966 = vmatpush1.msra.mxu0 0.0
          %1967 = vmatprep.subr.mxu0 0.0
          %1968 = vmatpush1.msra.mxu0 0.0
          %1969 = vmatprep.subr.mxu0 0.0
          %1970 = vmatpush1.msra.mxu0 0.0
          %1971 = vmatprep.subr.mxu0 0.0
          %1972 = vmatpush1.msra.mxu0 0.0
          %1973 = vmatprep.subr.mxu0 0.0
          %1974 = vmatpush1.msra.mxu0 %v1171
          %1975 = vmatprep.subr.mxu0 0.0
          %1976 = vmatpush1.msra.mxu0 %v1170
          %1977 = vmatprep.subr.mxu0 0.0
          %1978 = vmatpush1.msra.mxu0 %v1169
          %1979 = vmatprep.subr.mxu0 0.0
          %1980 = vmatpush1.msra.mxu0 %v1168
          %1981 = vmatprep.subr.mxu0 0.0
          %1982 = vmatpush2.msra.mxu0 0.0
          %1983 = vmatprep.subr.mxu0 0.0
          %1984 = vmatpush2.msra.mxu0 0.0
          %1985 = vmatprep.subr.mxu0 0.0
          %1986 = vmatpush2.msra.mxu0 0.0
          %1987 = vmatprep.subr.mxu0 0.0
          %1988 = vmatpush2.msra.mxu0 0.0
          %1989 = vmatprep.subr.mxu0 0.0
          %1990 = vmatpush2.msra.mxu0 0.0
          %1991 = vmatprep.subr.mxu0 0.0
          %1992 = vmatpush2.msra.mxu0 0.0
          %1993 = vmatprep.subr.mxu0 0.0
          %1994 = vmatpush2.msra.mxu0 0.0
          %1995 = vmatprep.subr.mxu0 0.0
          %1996 = vmatpush2.msra.mxu0 0.0
          %1997 = vmatprep.subr.mxu0 0.0
          %1998 = vmatpush2.msra.mxu0 0.0
          %1999 = vmatprep.subr.mxu0 0.0
          %2000 = vmatpush2.msra.mxu0 0.0
          %2001 = vmatprep.subr.mxu0 0.0
          %2002 = vmatpush2.msra.mxu0 0.0
          %2003 = vmatprep.subr.mxu0 0.0
          %2004 = vmatpush2.msra.mxu0 0.0
          %2005 = vmatprep.subr.mxu0 0.0
          %2006 = vmatpush2.msra.mxu0 0.0
          %2007 = vmatprep.subr.mxu0 0.0
          %2008 = vmatpush2.msra.mxu0 0.0
          %2009 = vmatprep.subr.mxu0 0.0
          %2010 = vmatpush2.msra.mxu0 0.0
          %2011 = vmatprep.subr.mxu0 0.0
          %2012 = vmatpush2.msra.mxu0 0.0
          %2013 = vmatprep.mubr.f32.mxu0 0.0
          %2014 = vmatmul.mubr.f32.gmra.mxu0 %v1947
          %v2015 = vpop.f32.mrf.mxu0
          %v2016 = vadd.f32 %v1189, %v2015
          %v2017 = vpop.f32.mrf.mxu0
          %2018 = vdwg.mxu0
          %v2019 = vadd.f32 %v1941, %v2016
          %v2020 = vxor.u32 %v2019, 2147483648
          %v2021 = vmul.f32 %v2020, 1.442695
          %v2022 = vpow.pop %v2021
          %v2023 = vadd.f32 %v2022, 1.0
          %v2024 = vrcp.pop %v2023
          %v2025 = vmul.f32 1.0, %v2024
          %2027 = vrot.lane.b32.xlu0 %v2016, 64
          %v2028 = vpop.permute.xlu0 %2027
          %v2030 = vmul.f32 %v2025, %v2028
          %2032 = vrot.lane.b32.xlu0 %v2030, 64
          %v2033 = vpop.permute.xlu0 %2032
          %v2035 = vadd.f32 %v1941, %v2033
          %v2036 = vtanh.pop %v2035
          %v2037 = vsub.f32 1.0, %v2025
          %2039 = vrot.lane.b32.xlu0 %v2036, 96
          %v2040 = vpop.permute.xlu0 %2039
          %v2042 = vmul.f32 %v2037, %v2040
          %v2043 = vmul.f32 %v2025, %v1772
          %v2044 = vadd.f32 %v2042, %v2043
          %2045 = vmatprep.subr.mxu0 0.0
          %2046 = vmatpush1.msra.mxu0 0.0
          %2047 = vmatprep.subr.mxu0 0.0
          %2048 = vmatpush1.msra.mxu0 0.0
          %2049 = vmatprep.subr.mxu0 0.0
          %2050 = vmatpush1.msra.mxu0 0.0
          %2051 = vmatprep.subr.mxu0 0.0
          %2052 = vmatpush1.msra.mxu0 0.0
          %2053 = vmatprep.subr.mxu0 0.0
          %2054 = vmatpush1.msra.mxu0 0.0
          %2055 = vmatprep.subr.mxu0 0.0
          %2056 = vmatpush1.msra.mxu0 0.0
          %2057 = vmatprep.subr.mxu0 0.0
          %2058 = vmatpush1.msra.mxu0 0.0
          %2059 = vmatprep.subr.mxu0 0.0
          %2060 = vmatpush1.msra.mxu0 0.0
          %2061 = vmatprep.subr.mxu0 0.0
          %2062 = vmatpush1.msra.mxu0 0.0
          %2063 = vmatprep.subr.mxu0 0.0
          %2064 = vmatpush1.msra.mxu0 0.0
          %2065 = vmatprep.subr.mxu0 0.0
          %2066 = vmatpush1.msra.mxu0 0.0
          %2067 = vmatprep.subr.mxu0 0.0
          %2068 = vmatpush1.msra.mxu0 0.0
          %2069 = vmatprep.subr.mxu0 0.0
          %2070 = vmatpush1.msra.mxu0 %v1166
          %2071 = vmatprep.subr.mxu0 0.0
          %2072 = vmatpush1.msra.mxu0 %v1165
          %2073 = vmatprep.subr.mxu0 0.0
          %2074 = vmatpush1.msra.mxu0 %v1164
          %2075 = vmatprep.subr.mxu0 0.0
          %2076 = vmatpush1.msra.mxu0 %v1163
          %2077 = vmatprep.subr.mxu0 0.0
          %2078 = vmatpush2.msra.mxu0 0.0
          %2079 = vmatprep.subr.mxu0 0.0
          %2080 = vmatpush2.msra.mxu0 0.0
          %2081 = vmatprep.subr.mxu0 0.0
          %2082 = vmatpush2.msra.mxu0 0.0
          %2083 = vmatprep.subr.mxu0 0.0
          %2084 = vmatpush2.msra.mxu0 0.0
          %2085 = vmatprep.subr.mxu0 0.0
          %2086 = vmatpush2.msra.mxu0 0.0
          %2087 = vmatprep.subr.mxu0 0.0
          %2088 = vmatpush2.msra.mxu0 0.0
          %2089 = vmatprep.subr.mxu0 0.0
          %2090 = vmatpush2.msra.mxu0 0.0
          %2091 = vmatprep.subr.mxu0 0.0
          %2092 = vmatpush2.msra.mxu0 0.0
          %2093 = vmatprep.subr.mxu0 0.0
          %2094 = vmatpush2.msra.mxu0 0.0
          %2095 = vmatprep.subr.mxu0 0.0
          %2096 = vmatpush2.msra.mxu0 0.0
          %2097 = vmatprep.subr.mxu0 0.0
          %2098 = vmatpush2.msra.mxu0 0.0
          %2099 = vmatprep.subr.mxu0 0.0
          %2100 = vmatpush2.msra.mxu0 0.0
          %2101 = vmatprep.subr.mxu0 0.0
          %2102 = vmatpush2.msra.mxu0 0.0
          %2103 = vmatprep.subr.mxu0 0.0
          %2104 = vmatpush2.msra.mxu0 0.0
          %2105 = vmatprep.subr.mxu0 0.0
          %2106 = vmatpush2.msra.mxu0 0.0
          %2107 = vmatprep.subr.mxu0 0.0
          %2108 = vmatpush2.msra.mxu0 0.0
          %2109 = vmatprep.mubr.f32.mxu0 0.0
          %2110 = vmatmul.mubr.f32.gmra.mxu0 %v1872
          %v2111 = vpop.f32.mrf.mxu0
          %v2112 = vadd.f32 %v1181, %v2111
          %v2113 = vpop.f32.mrf.mxu0
          %2114 = vdwg.mxu0
          %v2115 = vadd.f32 %v1216, %v2112
          %v2116 = vxor.u32 %v2115, 2147483648
          %v2117 = vmul.f32 %v2116, 1.442695
          %v2118 = vpow.pop %v2117
          %v2119 = vadd.f32 %v2118, 1.0
          %v2120 = vrcp.pop %v2119
          %v2121 = vmul.f32 1.0, %v2120
          %2123 = vrot.lane.b32.xlu0 %v2112, 64
          %v2124 = vpop.permute.xlu0 %2123
          %v2126 = vmul.f32 %v2121, %v2124
          %2128 = vrot.lane.b32.xlu0 %v2126, 64
          %v2129 = vpop.permute.xlu0 %2128
          %v2131 = vadd.f32 %v1216, %v2129
          %v2132 = vtanh.pop %v2131
          %v2133 = vsub.f32 1.0, %v2121
          %2135 = vrot.lane.b32.xlu0 %v2132, 96
          %v2136 = vpop.permute.xlu0 %2135
          %v2138 = vmul.f32 %v2133, %v2136
          %v2139 = vmul.f32 %v2121, %v1868
          %v2140 = vadd.f32 %v2138, %v2139
          %2142 = vrot.lane.b32.xlu0 %v2140, 96
          %v2143 = vpop.permute.xlu0 %2142
          %v2144 = vsel %vm1221, %v2143, 0
          %2146 = vmatprep.subr.mxu0 0.0
          %2147 = vmatpush1.msra.mxu0 0.0
          %2148 = vmatprep.subr.mxu0 0.0
          %2149 = vmatpush1.msra.mxu0 0.0
          %2150 = vmatprep.subr.mxu0 0.0
          %2151 = vmatpush1.msra.mxu0 0.0
          %2152 = vmatprep.subr.mxu0 0.0
          %2153 = vmatpush1.msra.mxu0 0.0
          %2154 = vmatprep.subr.mxu0 0.0
          %2155 = vmatpush1.msra.mxu0 0.0
          %2156 = vmatprep.subr.mxu0 0.0
          %2157 = vmatpush1.msra.mxu0 0.0
          %2158 = vmatprep.subr.mxu0 0.0
          %2159 = vmatpush1.msra.mxu0 0.0
          %2160 = vmatprep.subr.mxu0 0.0
          %2161 = vmatpush1.msra.mxu0 0.0
          %2162 = vmatprep.subr.mxu0 0.0
          %2163 = vmatpush1.msra.mxu0 0.0
          %2164 = vmatprep.subr.mxu0 0.0
          %2165 = vmatpush1.msra.mxu0 0.0
          %2166 = vmatprep.subr.mxu0 0.0
          %2167 = vmatpush1.msra.mxu0 0.0
          %2168 = vmatprep.subr.mxu0 0.0
          %2169 = vmatpush1.msra.mxu0 0.0
          %2170 = vmatprep.subr.mxu0 0.0
          %2171 = vmatpush1.msra.mxu0 %v1175
          %2172 = vmatprep.subr.mxu0 0.0
          %2173 = vmatpush1.msra.mxu0 %v1174
          %2174 = vmatprep.subr.mxu0 0.0
          %2175 = vmatpush1.msra.mxu0 %v1173
          %2176 = vmatprep.subr.mxu0 0.0
          %2177 = vmatpush1.msra.mxu0 %v1172
          %2178 = vmatprep.subr.mxu0 0.0
          %2179 = vmatpush2.msra.mxu0 0.0
          %2180 = vmatprep.subr.mxu0 0.0
          %2181 = vmatpush2.msra.mxu0 0.0
          %2182 = vmatprep.subr.mxu0 0.0
          %2183 = vmatpush2.msra.mxu0 0.0
          %2184 = vmatprep.subr.mxu0 0.0
          %2185 = vmatpush2.msra.mxu0 0.0
          %2186 = vmatprep.subr.mxu0 0.0
          %2187 = vmatpush2.msra.mxu0 0.0
          %2188 = vmatprep.subr.mxu0 0.0
          %2189 = vmatpush2.msra.mxu0 0.0
          %2190 = vmatprep.subr.mxu0 0.0
          %2191 = vmatpush2.msra.mxu0 0.0
          %2192 = vmatprep.subr.mxu0 0.0
          %2193 = vmatpush2.msra.mxu0 0.0
          %2194 = vmatprep.subr.mxu0 0.0
          %2195 = vmatpush2.msra.mxu0 0.0
          %2196 = vmatprep.subr.mxu0 0.0
          %2197 = vmatpush2.msra.mxu0 0.0
          %2198 = vmatprep.subr.mxu0 0.0
          %2199 = vmatpush2.msra.mxu0 0.0
          %2200 = vmatprep.subr.mxu0 0.0
          %2201 = vmatpush2.msra.mxu0 0.0
          %2202 = vmatprep.subr.mxu0 0.0
          %2203 = vmatpush2.msra.mxu0 0.0
          %2204 = vmatprep.subr.mxu0 0.0
          %2205 = vmatpush2.msra.mxu0 0.0
          %2206 = vmatprep.subr.mxu0 0.0
          %2207 = vmatpush2.msra.mxu0 0.0
          %2208 = vmatprep.subr.mxu0 0.0
          %2209 = vmatpush2.msra.mxu0 0.0
          %2210 = vmatprep.mubr.f32.mxu0 0.0
          %2211 = vmatmul.mubr.f32.gmra.mxu0 %v2144
          %v2212 = vpop.f32.mrf.mxu0
          %v2213 = vadd.f32 %v1197, %v2212
          %v2214 = vpop.f32.mrf.mxu0
          %2215 = vdwg.mxu0
          %2217 = vrot.lane.b32.xlu0 %v2044, 96
          %v2218 = vpop.permute.xlu0 %2217
          %v2219 = vsel %vm1221, %v2218, 0
          %2221 = vmatprep.subr.mxu0 0.0
          %2222 = vmatpush1.msra.mxu0 0.0
          %2223 = vmatprep.subr.mxu0 0.0
          %2224 = vmatpush1.msra.mxu0 0.0
          %2225 = vmatprep.subr.mxu0 0.0
          %2226 = vmatpush1.msra.mxu0 0.0
          %2227 = vmatprep.subr.mxu0 0.0
          %2228 = vmatpush1.msra.mxu0 0.0
          %2229 = vmatprep.subr.mxu0 0.0
          %2230 = vmatpush1.msra.mxu0 0.0
          %2231 = vmatprep.subr.mxu0 0.0
          %2232 = vmatpush1.msra.mxu0 0.0
          %2233 = vmatprep.subr.mxu0 0.0
          %2234 = vmatpush1.msra.mxu0 0.0
          %2235 = vmatprep.subr.mxu0 0.0
          %2236 = vmatpush1.msra.mxu0 0.0
          %2237 = vmatprep.subr.mxu0 0.0
          %2238 = vmatpush1.msra.mxu0 0.0
          %2239 = vmatprep.subr.mxu0 0.0
          %2240 = vmatpush1.msra.mxu0 0.0
          %2241 = vmatprep.subr.mxu0 0.0
          %2242 = vmatpush1.msra.mxu0 0.0
          %2243 = vmatprep.subr.mxu0 0.0
          %2244 = vmatpush1.msra.mxu0 0.0
          %2245 = vmatprep.subr.mxu0 0.0
          %2246 = vmatpush1.msra.mxu0 %v1171
          %2247 = vmatprep.subr.mxu0 0.0
          %2248 = vmatpush1.msra.mxu0 %v1170
          %2249 = vmatprep.subr.mxu0 0.0
          %2250 = vmatpush1.msra.mxu0 %v1169
          %2251 = vmatprep.subr.mxu0 0.0
          %2252 = vmatpush1.msra.mxu0 %v1168
          %2253 = vmatprep.subr.mxu0 0.0
          %2254 = vmatpush2.msra.mxu0 0.0
          %2255 = vmatprep.subr.mxu0 0.0
          %2256 = vmatpush2.msra.mxu0 0.0
          %2257 = vmatprep.subr.mxu0 0.0
          %2258 = vmatpush2.msra.mxu0 0.0
          %2259 = vmatprep.subr.mxu0 0.0
          %2260 = vmatpush2.msra.mxu0 0.0
          %2261 = vmatprep.subr.mxu0 0.0
          %2262 = vmatpush2.msra.mxu0 0.0
          %2263 = vmatprep.subr.mxu0 0.0
          %2264 = vmatpush2.msra.mxu0 0.0
          %2265 = vmatprep.subr.mxu0 0.0
          %2266 = vmatpush2.msra.mxu0 0.0
          %2267 = vmatprep.subr.mxu0 0.0
          %2268 = vmatpush2.msra.mxu0 0.0
          %2269 = vmatprep.subr.mxu0 0.0
          %2270 = vmatpush2.msra.mxu0 0.0
          %2271 = vmatprep.subr.mxu0 0.0
          %2272 = vmatpush2.msra.mxu0 0.0
          %2273 = vmatprep.subr.mxu0 0.0
          %2274 = vmatpush2.msra.mxu0 0.0
          %2275 = vmatprep.subr.mxu0 0.0
          %2276 = vmatpush2.msra.mxu0 0.0
          %2277 = vmatprep.subr.mxu0 0.0
          %2278 = vmatpush2.msra.mxu0 0.0
          %2279 = vmatprep.subr.mxu0 0.0
          %2280 = vmatpush2.msra.mxu0 0.0
          %2281 = vmatprep.subr.mxu0 0.0
          %2282 = vmatpush2.msra.mxu0 0.0
          %2283 = vmatprep.subr.mxu0 0.0
          %2284 = vmatpush2.msra.mxu0 0.0
          %2285 = vmatprep.mubr.f32.mxu0 0.0
          %2286 = vmatmul.mubr.f32.gmra.mxu0 %v2219
          %v2287 = vpop.f32.mrf.mxu0
          %v2288 = vadd.f32 %v1189, %v2287
          %v2289 = vpop.f32.mrf.mxu0
          %2290 = vdwg.mxu0
          %v2291 = vadd.f32 %v2213, %v2288
          %v2292 = vxor.u32 %v2291, 2147483648
          %v2293 = vmul.f32 %v2292, 1.442695
          %v2294 = vpow.pop %v2293
          %v2295 = vadd.f32 %v2294, 1.0
          %v2296 = vrcp.pop %v2295
          %v2297 = vmul.f32 1.0, %v2296
          %2299 = vrot.lane.b32.xlu0 %v2288, 64
          %v2300 = vpop.permute.xlu0 %2299
          %v2302 = vmul.f32 %v2297, %v2300
          %2304 = vrot.lane.b32.xlu0 %v2302, 64
          %v2305 = vpop.permute.xlu0 %2304
          %v2307 = vadd.f32 %v2213, %v2305
          %v2308 = vtanh.pop %v2307
          %v2309 = vsub.f32 1.0, %v2297
          %2311 = vrot.lane.b32.xlu0 %v2308, 96
          %v2312 = vpop.permute.xlu0 %2311
          %v2314 = vmul.f32 %v2309, %v2312
          %v2315 = vmul.f32 %v2297, %v2044
          %v2316 = vadd.f32 %v2314, %v2315
          %2317 = vmatprep.subr.mxu0 0.0
          %2318 = vmatpush1.msra.mxu0 0.0
          %2319 = vmatprep.subr.mxu0 0.0
          %2320 = vmatpush1.msra.mxu0 0.0
          %2321 = vmatprep.subr.mxu0 0.0
          %2322 = vmatpush1.msra.mxu0 0.0
          %2323 = vmatprep.subr.mxu0 0.0
          %2324 = vmatpush1.msra.mxu0 0.0
          %2325 = vmatprep.subr.mxu0 0.0
          %2326 = vmatpush1.msra.mxu0 0.0
          %2327 = vmatprep.subr.mxu0 0.0
          %2328 = vmatpush1.msra.mxu0 0.0
          %2329 = vmatprep.subr.mxu0 0.0
          %2330 = vmatpush1.msra.mxu0 0.0
          %2331 = vmatprep.subr.mxu0 0.0
          %2332 = vmatpush1.msra.mxu0 0.0
          %2333 = vmatprep.subr.mxu0 0.0
          %2334 = vmatpush1.msra.mxu0 0.0
          %2335 = vmatprep.subr.mxu0 0.0
          %2336 = vmatpush1.msra.mxu0 0.0
          %2337 = vmatprep.subr.mxu0 0.0
          %2338 = vmatpush1.msra.mxu0 0.0
          %2339 = vmatprep.subr.mxu0 0.0
          %2340 = vmatpush1.msra.mxu0 0.0
          %2341 = vmatprep.subr.mxu0 0.0
          %2342 = vmatpush1.msra.mxu0 %v1166
          %2343 = vmatprep.subr.mxu0 0.0
          %2344 = vmatpush1.msra.mxu0 %v1165
          %2345 = vmatprep.subr.mxu0 0.0
          %2346 = vmatpush1.msra.mxu0 %v1164
          %2347 = vmatprep.subr.mxu0 0.0
          %2348 = vmatpush1.msra.mxu0 %v1163
          %2349 = vmatprep.subr.mxu0 0.0
          %2350 = vmatpush2.msra.mxu0 0.0
          %2351 = vmatprep.subr.mxu0 0.0
          %2352 = vmatpush2.msra.mxu0 0.0
          %2353 = vmatprep.subr.mxu0 0.0
          %2354 = vmatpush2.msra.mxu0 0.0
          %2355 = vmatprep.subr.mxu0 0.0
          %2356 = vmatpush2.msra.mxu0 0.0
          %2357 = vmatprep.subr.mxu0 0.0
          %2358 = vmatpush2.msra.mxu0 0.0
          %2359 = vmatprep.subr.mxu0 0.0
          %2360 = vmatpush2.msra.mxu0 0.0
          %2361 = vmatprep.subr.mxu0 0.0
          %2362 = vmatpush2.msra.mxu0 0.0
          %2363 = vmatprep.subr.mxu0 0.0
          %2364 = vmatpush2.msra.mxu0 0.0
          %2365 = vmatprep.subr.mxu0 0.0
          %2366 = vmatpush2.msra.mxu0 0.0
          %2367 = vmatprep.subr.mxu0 0.0
          %2368 = vmatpush2.msra.mxu0 0.0
          %2369 = vmatprep.subr.mxu0 0.0
          %2370 = vmatpush2.msra.mxu0 0.0
          %2371 = vmatprep.subr.mxu0 0.0
          %2372 = vmatpush2.msra.mxu0 0.0
          %2373 = vmatprep.subr.mxu0 0.0
          %2374 = vmatpush2.msra.mxu0 0.0
          %2375 = vmatprep.subr.mxu0 0.0
          %2376 = vmatpush2.msra.mxu0 0.0
          %2377 = vmatprep.subr.mxu0 0.0
          %2378 = vmatpush2.msra.mxu0 0.0
          %2379 = vmatprep.subr.mxu0 0.0
          %2380 = vmatpush2.msra.mxu0 0.0
          %2381 = vmatprep.mubr.f32.mxu0 0.0
          %2382 = vmatmul.mubr.f32.gmra.mxu0 %v2144
          %v2383 = vpop.f32.mrf.mxu0
          %v2384 = vadd.f32 %v1181, %v2383
          %v2385 = vpop.f32.mrf.mxu0
          %2386 = vdwg.mxu0
          %v2387 = vadd.f32 %v1217, %v2384
          %v2388 = vxor.u32 %v2387, 2147483648
          %v2389 = vmul.f32 %v2388, 1.442695
          %v2390 = vpow.pop %v2389
          %v2391 = vadd.f32 %v2390, 1.0
          %v2392 = vrcp.pop %v2391
          %v2393 = vmul.f32 1.0, %v2392
          %2395 = vrot.lane.b32.xlu0 %v2384, 64
          %v2396 = vpop.permute.xlu0 %2395
          %v2398 = vmul.f32 %v2393, %v2396
          %2400 = vrot.lane.b32.xlu0 %v2398, 64
          %v2401 = vpop.permute.xlu0 %2400
          %v2403 = vadd.f32 %v1217, %v2401
          %v2404 = vtanh.pop %v2403
          %v2405 = vsub.f32 1.0, %v2393
          %2407 = vrot.lane.b32.xlu0 %v2404, 96
          %v2408 = vpop.permute.xlu0 %2407
          %v2410 = vmul.f32 %v2405, %v2408
          %v2411 = vmul.f32 %v2393, %v2140
          %v2412 = vadd.f32 %v2410, %v2411
          %2414 = vrot.lane.b32.xlu0 %v2412, 96
          %v2415 = vpop.permute.xlu0 %2414
          %v2416 = vsel %vm1221, %v2415, 0
          %2418 = vmatprep.subr.mxu0 0.0
          %2419 = vmatpush1.msra.mxu0 0.0
          %2420 = vmatprep.subr.mxu0 0.0
          %2421 = vmatpush1.msra.mxu0 0.0
          %2422 = vmatprep.subr.mxu0 0.0
          %2423 = vmatpush1.msra.mxu0 0.0
          %2424 = vmatprep.subr.mxu0 0.0
          %2425 = vmatpush1.msra.mxu0 0.0
          %2426 = vmatprep.subr.mxu0 0.0
          %2427 = vmatpush1.msra.mxu0 0.0
          %2428 = vmatprep.subr.mxu0 0.0
          %2429 = vmatpush1.msra.mxu0 0.0
          %2430 = vmatprep.subr.mxu0 0.0
          %2431 = vmatpush1.msra.mxu0 0.0
          %2432 = vmatprep.subr.mxu0 0.0
          %2433 = vmatpush1.msra.mxu0 0.0
          %2434 = vmatprep.subr.mxu0 0.0
          %2435 = vmatpush1.msra.mxu0 0.0
          %2436 = vmatprep.subr.mxu0 0.0
          %2437 = vmatpush1.msra.mxu0 0.0
          %2438 = vmatprep.subr.mxu0 0.0
          %2439 = vmatpush1.msra.mxu0 0.0
          %2440 = vmatprep.subr.mxu0 0.0
          %2441 = vmatpush1.msra.mxu0 0.0
          %2442 = vmatprep.subr.mxu0 0.0
          %2443 = vmatpush1.msra.mxu0 %v1175
          %2444 = vmatprep.subr.mxu0 0.0
          %2445 = vmatpush1.msra.mxu0 %v1174
          %2446 = vmatprep.subr.mxu0 0.0
          %2447 = vmatpush1.msra.mxu0 %v1173
          %2448 = vmatprep.subr.mxu0 0.0
          %2449 = vmatpush1.msra.mxu0 %v1172
          %2450 = vmatprep.subr.mxu0 0.0
          %2451 = vmatpush2.msra.mxu0 0.0
          %2452 = vmatprep.subr.mxu0 0.0
          %2453 = vmatpush2.msra.mxu0 0.0
          %2454 = vmatprep.subr.mxu0 0.0
          %2455 = vmatpush2.msra.mxu0 0.0
          %2456 = vmatprep.subr.mxu0 0.0
          %2457 = vmatpush2.msra.mxu0 0.0
          %2458 = vmatprep.subr.mxu0 0.0
          %2459 = vmatpush2.msra.mxu0 0.0
          %2460 = vmatprep.subr.mxu0 0.0
          %2461 = vmatpush2.msra.mxu0 0.0
          %2462 = vmatprep.subr.mxu0 0.0
          %2463 = vmatpush2.msra.mxu0 0.0
          %2464 = vmatprep.subr.mxu0 0.0
          %2465 = vmatpush2.msra.mxu0 0.0
          %2466 = vmatprep.subr.mxu0 0.0
          %2467 = vmatpush2.msra.mxu0 0.0
          %2468 = vmatprep.subr.mxu0 0.0
          %2469 = vmatpush2.msra.mxu0 0.0
          %2470 = vmatprep.subr.mxu0 0.0
          %2471 = vmatpush2.msra.mxu0 0.0
          %2472 = vmatprep.subr.mxu0 0.0
          %2473 = vmatpush2.msra.mxu0 0.0
          %2474 = vmatprep.subr.mxu0 0.0
          %2475 = vmatpush2.msra.mxu0 0.0
          %2476 = vmatprep.subr.mxu0 0.0
          %2477 = vmatpush2.msra.mxu0 0.0
          %2478 = vmatprep.subr.mxu0 0.0
          %2479 = vmatpush2.msra.mxu0 0.0
          %2480 = vmatprep.subr.mxu0 0.0
          %2481 = vmatpush2.msra.mxu0 0.0
          %2482 = vmatprep.mubr.f32.mxu0 0.0
          %2483 = vmatmul.mubr.f32.gmra.mxu0 %v2416
          %v2484 = vpop.f32.mrf.mxu0
          %v2485 = vadd.f32 %v1197, %v2484
          %v2486 = vpop.f32.mrf.mxu0
          %2487 = vdwg.mxu0
          %2489 = vrot.lane.b32.xlu0 %v2316, 96
          %v2490 = vpop.permute.xlu0 %2489
          %v2491 = vsel %vm1221, %v2490, 0
          %2493 = vmatprep.subr.mxu0 0.0
          %2494 = vmatpush1.msra.mxu0 0.0
          %2495 = vmatprep.subr.mxu0 0.0
          %2496 = vmatpush1.msra.mxu0 0.0
          %2497 = vmatprep.subr.mxu0 0.0
          %2498 = vmatpush1.msra.mxu0 0.0
          %2499 = vmatprep.subr.mxu0 0.0
          %2500 = vmatpush1.msra.mxu0 0.0
          %2501 = vmatprep.subr.mxu0 0.0
          %2502 = vmatpush1.msra.mxu0 0.0
          %2503 = vmatprep.subr.mxu0 0.0
          %2504 = vmatpush1.msra.mxu0 0.0
          %2505 = vmatprep.subr.mxu0 0.0
          %2506 = vmatpush1.msra.mxu0 0.0
          %2507 = vmatprep.subr.mxu0 0.0
          %2508 = vmatpush1.msra.mxu0 0.0
          %2509 = vmatprep.subr.mxu0 0.0
          %2510 = vmatpush1.msra.mxu0 0.0
          %2511 = vmatprep.subr.mxu0 0.0
          %2512 = vmatpush1.msra.mxu0 0.0
          %2513 = vmatprep.subr.mxu0 0.0
          %2514 = vmatpush1.msra.mxu0 0.0
          %2515 = vmatprep.subr.mxu0 0.0
          %2516 = vmatpush1.msra.mxu0 0.0
          %2517 = vmatprep.subr.mxu0 0.0
          %2518 = vmatpush1.msra.mxu0 %v1171
          %2519 = vmatprep.subr.mxu0 0.0
          %2520 = vmatpush1.msra.mxu0 %v1170
          %2521 = vmatprep.subr.mxu0 0.0
          %2522 = vmatpush1.msra.mxu0 %v1169
          %2523 = vmatprep.subr.mxu0 0.0
          %2524 = vmatpush1.msra.mxu0 %v1168
          %2525 = vmatprep.subr.mxu0 0.0
          %2526 = vmatpush2.msra.mxu0 0.0
          %2527 = vmatprep.subr.mxu0 0.0
          %2528 = vmatpush2.msra.mxu0 0.0
          %2529 = vmatprep.subr.mxu0 0.0
          %2530 = vmatpush2.msra.mxu0 0.0
          %2531 = vmatprep.subr.mxu0 0.0
          %2532 = vmatpush2.msra.mxu0 0.0
          %2533 = vmatprep.subr.mxu0 0.0
          %2534 = vmatpush2.msra.mxu0 0.0
          %2535 = vmatprep.subr.mxu0 0.0
          %2536 = vmatpush2.msra.mxu0 0.0
          %2537 = vmatprep.subr.mxu0 0.0
          %2538 = vmatpush2.msra.mxu0 0.0
          %2539 = vmatprep.subr.mxu0 0.0
          %2540 = vmatpush2.msra.mxu0 0.0
          %2541 = vmatprep.subr.mxu0 0.0
          %2542 = vmatpush2.msra.mxu0 0.0
          %2543 = vmatprep.subr.mxu0 0.0
          %2544 = vmatpush2.msra.mxu0 0.0
          %2545 = vmatprep.subr.mxu0 0.0
          %2546 = vmatpush2.msra.mxu0 0.0
          %2547 = vmatprep.subr.mxu0 0.0
          %2548 = vmatpush2.msra.mxu0 0.0
          %2549 = vmatprep.subr.mxu0 0.0
          %2550 = vmatpush2.msra.mxu0 0.0
          %2551 = vmatprep.subr.mxu0 0.0
          %2552 = vmatpush2.msra.mxu0 0.0
          %2553 = vmatprep.subr.mxu0 0.0
          %2554 = vmatpush2.msra.mxu0 0.0
          %2555 = vmatprep.subr.mxu0 0.0
          %2556 = vmatpush2.msra.mxu0 0.0
          %2557 = vmatprep.mubr.f32.mxu0 0.0
          %2558 = vmatmul.mubr.f32.gmra.mxu0 %v2491
          %v2559 = vpop.f32.mrf.mxu0
          %v2560 = vadd.f32 %v1189, %v2559
          %v2561 = vpop.f32.mrf.mxu0
          %2562 = vdwg.mxu0
          %v2563 = vadd.f32 %v2485, %v2560
          %v2564 = vxor.u32 %v2563, 2147483648
          %v2565 = vmul.f32 %v2564, 1.442695
          %v2566 = vpow.pop %v2565
          %v2567 = vadd.f32 %v2566, 1.0
          %v2568 = vrcp.pop %v2567
          %v2569 = vmul.f32 1.0, %v2568
          %2571 = vrot.lane.b32.xlu0 %v2560, 64
          %v2572 = vpop.permute.xlu0 %2571
          %v2574 = vmul.f32 %v2569, %v2572
          %2576 = vrot.lane.b32.xlu0 %v2574, 64
          %v2577 = vpop.permute.xlu0 %2576
          %v2579 = vadd.f32 %v2485, %v2577
          %v2580 = vtanh.pop %v2579
          %v2581 = vsub.f32 1.0, %v2569
          %2583 = vrot.lane.b32.xlu0 %v2580, 96
          %v2584 = vpop.permute.xlu0 %2583
          %v2586 = vmul.f32 %v2581, %v2584
          %v2587 = vmul.f32 %v2569, %v2316
          %v2588 = vadd.f32 %v2586, %v2587
          %2589 = vmatprep.subr.mxu0 0.0
          %2590 = vmatpush1.msra.mxu0 0.0
          %2591 = vmatprep.subr.mxu0 0.0
          %2592 = vmatpush1.msra.mxu0 0.0
          %2593 = vmatprep.subr.mxu0 0.0
          %2594 = vmatpush1.msra.mxu0 0.0
          %2595 = vmatprep.subr.mxu0 0.0
          %2596 = vmatpush1.msra.mxu0 0.0
          %2597 = vmatprep.subr.mxu0 0.0
          %2598 = vmatpush1.msra.mxu0 0.0
          %2599 = vmatprep.subr.mxu0 0.0
          %2600 = vmatpush1.msra.mxu0 0.0
          %2601 = vmatprep.subr.mxu0 0.0
          %2602 = vmatpush1.msra.mxu0 0.0
          %2603 = vmatprep.subr.mxu0 0.0
          %2604 = vmatpush1.msra.mxu0 0.0
          %2605 = vmatprep.subr.mxu0 0.0
          %2606 = vmatpush1.msra.mxu0 0.0
          %2607 = vmatprep.subr.mxu0 0.0
          %2608 = vmatpush1.msra.mxu0 0.0
          %2609 = vmatprep.subr.mxu0 0.0
          %2610 = vmatpush1.msra.mxu0 0.0
          %2611 = vmatprep.subr.mxu0 0.0
          %2612 = vmatpush1.msra.mxu0 0.0
          %2613 = vmatprep.subr.mxu0 0.0
          %2614 = vmatpush1.msra.mxu0 %v1166
          %2615 = vmatprep.subr.mxu0 0.0
          %2616 = vmatpush1.msra.mxu0 %v1165
          %2617 = vmatprep.subr.mxu0 0.0
          %2618 = vmatpush1.msra.mxu0 %v1164
          %2619 = vmatprep.subr.mxu0 0.0
          %2620 = vmatpush1.msra.mxu0 %v1163
          %2621 = vmatprep.subr.mxu0 0.0
          %2622 = vmatpush2.msra.mxu0 0.0
          %2623 = vmatprep.subr.mxu0 0.0
          %2624 = vmatpush2.msra.mxu0 0.0
          %2625 = vmatprep.subr.mxu0 0.0
          %2626 = vmatpush2.msra.mxu0 0.0
          %2627 = vmatprep.subr.mxu0 0.0
          %2628 = vmatpush2.msra.mxu0 0.0
          %2629 = vmatprep.subr.mxu0 0.0
          %2630 = vmatpush2.msra.mxu0 0.0
          %2631 = vmatprep.subr.mxu0 0.0
          %2632 = vmatpush2.msra.mxu0 0.0
          %2633 = vmatprep.subr.mxu0 0.0
          %2634 = vmatpush2.msra.mxu0 0.0
          %2635 = vmatprep.subr.mxu0 0.0
          %2636 = vmatpush2.msra.mxu0 0.0
          %2637 = vmatprep.subr.mxu0 0.0
          %2638 = vmatpush2.msra.mxu0 0.0
          %2639 = vmatprep.subr.mxu0 0.0
          %2640 = vmatpush2.msra.mxu0 0.0
          %2641 = vmatprep.subr.mxu0 0.0
          %2642 = vmatpush2.msra.mxu0 0.0
          %2643 = vmatprep.subr.mxu0 0.0
          %2644 = vmatpush2.msra.mxu0 0.0
          %2645 = vmatprep.subr.mxu0 0.0
          %2646 = vmatpush2.msra.mxu0 0.0
          %2647 = vmatprep.subr.mxu0 0.0
          %2648 = vmatpush2.msra.mxu0 0.0
          %2649 = vmatprep.subr.mxu0 0.0
          %2650 = vmatpush2.msra.mxu0 0.0
          %2651 = vmatprep.subr.mxu0 0.0
          %2652 = vmatpush2.msra.mxu0 0.0
          %2653 = vmatprep.mubr.f32.mxu0 0.0
          %2654 = vmatmul.mubr.f32.gmra.mxu0 %v2416
          %v2655 = vpop.f32.mrf.mxu0
          %v2656 = vadd.f32 %v1181, %v2655
          %v2657 = vpop.f32.mrf.mxu0
          %2658 = vdwg.mxu0
          %v2659 = vadd.f32 %v1218, %v2656
          %v2660 = vxor.u32 %v2659, 2147483648
          %v2661 = vmul.f32 %v2660, 1.442695
          %v2662 = vpow.pop %v2661
          %v2663 = vadd.f32 %v2662, 1.0
          %v2664 = vrcp.pop %v2663
          %v2665 = vmul.f32 1.0, %v2664
          %2667 = vrot.lane.b32.xlu0 %v2656, 64
          %v2668 = vpop.permute.xlu0 %2667
          %v2670 = vmul.f32 %v2665, %v2668
          %2672 = vrot.lane.b32.xlu0 %v2670, 64
          %v2673 = vpop.permute.xlu0 %2672
          %v2675 = vadd.f32 %v1218, %v2673
          %v2676 = vtanh.pop %v2675
          %v2677 = vsub.f32 1.0, %v2665
          %2679 = vrot.lane.b32.xlu0 %v2676, 96
          %v2680 = vpop.permute.xlu0 %2679
          %v2682 = vmul.f32 %v2677, %v2680
          %v2683 = vmul.f32 %v2665, %v2412
          %v2684 = vadd.f32 %v2682, %v2683
          %2686 = vrot.lane.b32.xlu0 %v2684, 96
          %v2687 = vpop.permute.xlu0 %2686
          %v2688 = vsel %vm1221, %v2687, 0
          %2690 = vmatprep.subr.mxu0 0.0
          %2691 = vmatpush1.msra.mxu0 0.0
          %2692 = vmatprep.subr.mxu0 0.0
          %2693 = vmatpush1.msra.mxu0 0.0
          %2694 = vmatprep.subr.mxu0 0.0
          %2695 = vmatpush1.msra.mxu0 0.0
          %2696 = vmatprep.subr.mxu0 0.0
          %2697 = vmatpush1.msra.mxu0 0.0
          %2698 = vmatprep.subr.mxu0 0.0
          %2699 = vmatpush1.msra.mxu0 0.0
          %2700 = vmatprep.subr.mxu0 0.0
          %2701 = vmatpush1.msra.mxu0 0.0
          %2702 = vmatprep.subr.mxu0 0.0
          %2703 = vmatpush1.msra.mxu0 0.0
          %2704 = vmatprep.subr.mxu0 0.0
          %2705 = vmatpush1.msra.mxu0 0.0
          %2706 = vmatprep.subr.mxu0 0.0
          %2707 = vmatpush1.msra.mxu0 0.0
          %2708 = vmatprep.subr.mxu0 0.0
          %2709 = vmatpush1.msra.mxu0 0.0
          %2710 = vmatprep.subr.mxu0 0.0
          %2711 = vmatpush1.msra.mxu0 0.0
          %2712 = vmatprep.subr.mxu0 0.0
          %2713 = vmatpush1.msra.mxu0 0.0
          %2714 = vmatprep.subr.mxu0 0.0
          %2715 = vmatpush1.msra.mxu0 %v1175
          %2716 = vmatprep.subr.mxu0 0.0
          %2717 = vmatpush1.msra.mxu0 %v1174
          %2718 = vmatprep.subr.mxu0 0.0
          %2719 = vmatpush1.msra.mxu0 %v1173
          %2720 = vmatprep.subr.mxu0 0.0
          %2721 = vmatpush1.msra.mxu0 %v1172
          %2722 = vmatprep.subr.mxu0 0.0
          %2723 = vmatpush2.msra.mxu0 0.0
          %2724 = vmatprep.subr.mxu0 0.0
          %2725 = vmatpush2.msra.mxu0 0.0
          %2726 = vmatprep.subr.mxu0 0.0
          %2727 = vmatpush2.msra.mxu0 0.0
          %2728 = vmatprep.subr.mxu0 0.0
          %2729 = vmatpush2.msra.mxu0 0.0
          %2730 = vmatprep.subr.mxu0 0.0
          %2731 = vmatpush2.msra.mxu0 0.0
          %2732 = vmatprep.subr.mxu0 0.0
          %2733 = vmatpush2.msra.mxu0 0.0
          %2734 = vmatprep.subr.mxu0 0.0
          %2735 = vmatpush2.msra.mxu0 0.0
          %2736 = vmatprep.subr.mxu0 0.0
          %2737 = vmatpush2.msra.mxu0 0.0
          %2738 = vmatprep.subr.mxu0 0.0
          %2739 = vmatpush2.msra.mxu0 0.0
          %2740 = vmatprep.subr.mxu0 0.0
          %2741 = vmatpush2.msra.mxu0 0.0
          %2742 = vmatprep.subr.mxu0 0.0
          %2743 = vmatpush2.msra.mxu0 0.0
          %2744 = vmatprep.subr.mxu0 0.0
          %2745 = vmatpush2.msra.mxu0 0.0
          %2746 = vmatprep.subr.mxu0 0.0
          %2747 = vmatpush2.msra.mxu0 0.0
          %2748 = vmatprep.subr.mxu0 0.0
          %2749 = vmatpush2.msra.mxu0 0.0
          %2750 = vmatprep.subr.mxu0 0.0
          %2751 = vmatpush2.msra.mxu0 0.0
          %2752 = vmatprep.subr.mxu0 0.0
          %2753 = vmatpush2.msra.mxu0 0.0
          %2754 = vmatprep.mubr.f32.mxu0 0.0
          %2755 = vmatmul.mubr.f32.gmra.mxu0 %v2688
          %v2756 = vpop.f32.mrf.mxu0
          %v2757 = vadd.f32 %v1197, %v2756
          %v2758 = vpop.f32.mrf.mxu0
          %2759 = vdwg.mxu0
          %2761 = vrot.lane.b32.xlu0 %v2588, 96
          %v2762 = vpop.permute.xlu0 %2761
          %v2763 = vsel %vm1221, %v2762, 0
          %2765 = vmatprep.subr.mxu0 0.0
          %2766 = vmatpush1.msra.mxu0 0.0
          %2767 = vmatprep.subr.mxu0 0.0
          %2768 = vmatpush1.msra.mxu0 0.0
          %2769 = vmatprep.subr.mxu0 0.0
          %2770 = vmatpush1.msra.mxu0 0.0
          %2771 = vmatprep.subr.mxu0 0.0
          %2772 = vmatpush1.msra.mxu0 0.0
          %2773 = vmatprep.subr.mxu0 0.0
          %2774 = vmatpush1.msra.mxu0 0.0
          %2775 = vmatprep.subr.mxu0 0.0
          %2776 = vmatpush1.msra.mxu0 0.0
          %2777 = vmatprep.subr.mxu0 0.0
          %2778 = vmatpush1.msra.mxu0 0.0
          %2779 = vmatprep.subr.mxu0 0.0
          %2780 = vmatpush1.msra.mxu0 0.0
          %2781 = vmatprep.subr.mxu0 0.0
          %2782 = vmatpush1.msra.mxu0 0.0
          %2783 = vmatprep.subr.mxu0 0.0
          %2784 = vmatpush1.msra.mxu0 0.0
          %2785 = vmatprep.subr.mxu0 0.0
          %2786 = vmatpush1.msra.mxu0 0.0
          %2787 = vmatprep.subr.mxu0 0.0
          %2788 = vmatpush1.msra.mxu0 0.0
          %2789 = vmatprep.subr.mxu0 0.0
          %2790 = vmatpush1.msra.mxu0 %v1171
          %2791 = vmatprep.subr.mxu0 0.0
          %2792 = vmatpush1.msra.mxu0 %v1170
          %2793 = vmatprep.subr.mxu0 0.0
          %2794 = vmatpush1.msra.mxu0 %v1169
          %2795 = vmatprep.subr.mxu0 0.0
          %2796 = vmatpush1.msra.mxu0 %v1168
          %2797 = vmatprep.subr.mxu0 0.0
          %2798 = vmatpush2.msra.mxu0 0.0
          %2799 = vmatprep.subr.mxu0 0.0
          %2800 = vmatpush2.msra.mxu0 0.0
          %2801 = vmatprep.subr.mxu0 0.0
          %2802 = vmatpush2.msra.mxu0 0.0
          %2803 = vmatprep.subr.mxu0 0.0
          %2804 = vmatpush2.msra.mxu0 0.0
          %2805 = vmatprep.subr.mxu0 0.0
          %2806 = vmatpush2.msra.mxu0 0.0
          %2807 = vmatprep.subr.mxu0 0.0
          %2808 = vmatpush2.msra.mxu0 0.0
          %2809 = vmatprep.subr.mxu0 0.0
          %2810 = vmatpush2.msra.mxu0 0.0
          %2811 = vmatprep.subr.mxu0 0.0
          %2812 = vmatpush2.msra.mxu0 0.0
          %2813 = vmatprep.subr.mxu0 0.0
          %2814 = vmatpush2.msra.mxu0 0.0
          %2815 = vmatprep.subr.mxu0 0.0
          %2816 = vmatpush2.msra.mxu0 0.0
          %2817 = vmatprep.subr.mxu0 0.0
          %2818 = vmatpush2.msra.mxu0 0.0
          %2819 = vmatprep.subr.mxu0 0.0
          %2820 = vmatpush2.msra.mxu0 0.0
          %2821 = vmatprep.subr.mxu0 0.0
          %2822 = vmatpush2.msra.mxu0 0.0
          %2823 = vmatprep.subr.mxu0 0.0
          %2824 = vmatpush2.msra.mxu0 0.0
          %2825 = vmatprep.subr.mxu0 0.0
          %2826 = vmatpush2.msra.mxu0 0.0
          %2827 = vmatprep.subr.mxu0 0.0
          %2828 = vmatpush2.msra.mxu0 0.0
          %2829 = vmatprep.mubr.f32.mxu0 0.0
          %2830 = vmatmul.mubr.f32.gmra.mxu0 %v2763
          %v2831 = vpop.f32.mrf.mxu0
          %v2832 = vadd.f32 %v1189, %v2831
          %v2833 = vpop.f32.mrf.mxu0
          %2834 = vdwg.mxu0
          %v2835 = vadd.f32 %v2757, %v2832
          %v2836 = vxor.u32 %v2835, 2147483648
          %v2837 = vmul.f32 %v2836, 1.442695
          %v2838 = vpow.pop %v2837
          %v2839 = vadd.f32 %v2838, 1.0
          %v2840 = vrcp.pop %v2839
          %v2841 = vmul.f32 1.0, %v2840
          %2843 = vrot.lane.b32.xlu0 %v2832, 64
          %v2844 = vpop.permute.xlu0 %2843
          %v2846 = vmul.f32 %v2841, %v2844
          %2848 = vrot.lane.b32.xlu0 %v2846, 64
          %v2849 = vpop.permute.xlu0 %2848
          %v2851 = vadd.f32 %v2757, %v2849
          %v2852 = vtanh.pop %v2851
          %v2853 = vsub.f32 1.0, %v2841
          %2855 = vrot.lane.b32.xlu0 %v2852, 96
          %v2856 = vpop.permute.xlu0 %2855
          %v2858 = vmul.f32 %v2853, %v2856
          %v2859 = vmul.f32 %v2841, %v2588
          %v2860 = vadd.f32 %v2858, %v2859
          %2861 = vmatprep.subr.mxu0 0.0
          %2862 = vmatpush1.msra.mxu0 0.0
          %2863 = vmatprep.subr.mxu0 0.0
          %2864 = vmatpush1.msra.mxu0 0.0
          %2865 = vmatprep.subr.mxu0 0.0
          %2866 = vmatpush1.msra.mxu0 0.0
          %2867 = vmatprep.subr.mxu0 0.0
          %2868 = vmatpush1.msra.mxu0 0.0
          %2869 = vmatprep.subr.mxu0 0.0
          %2870 = vmatpush1.msra.mxu0 0.0
          %2871 = vmatprep.subr.mxu0 0.0
          %2872 = vmatpush1.msra.mxu0 0.0
          %2873 = vmatprep.subr.mxu0 0.0
          %2874 = vmatpush1.msra.mxu0 0.0
          %2875 = vmatprep.subr.mxu0 0.0
          %2876 = vmatpush1.msra.mxu0 0.0
          %2877 = vmatprep.subr.mxu0 0.0
          %2878 = vmatpush1.msra.mxu0 0.0
          %2879 = vmatprep.subr.mxu0 0.0
          %2880 = vmatpush1.msra.mxu0 0.0
          %2881 = vmatprep.subr.mxu0 0.0
          %2882 = vmatpush1.msra.mxu0 0.0
          %2883 = vmatprep.subr.mxu0 0.0
          %2884 = vmatpush1.msra.mxu0 0.0
          %2885 = vmatprep.subr.mxu0 0.0
          %2886 = vmatpush1.msra.mxu0 %v1166
          %2887 = vmatprep.subr.mxu0 0.0
          %2888 = vmatpush1.msra.mxu0 %v1165
          %2889 = vmatprep.subr.mxu0 0.0
          %2890 = vmatpush1.msra.mxu0 %v1164
          %2891 = vmatprep.subr.mxu0 0.0
          %2892 = vmatpush1.msra.mxu0 %v1163
          %2893 = vmatprep.subr.mxu0 0.0
          %2894 = vmatpush2.msra.mxu0 0.0
          %2895 = vmatprep.subr.mxu0 0.0
          %2896 = vmatpush2.msra.mxu0 0.0
          %2897 = vmatprep.subr.mxu0 0.0
          %2898 = vmatpush2.msra.mxu0 0.0
          %2899 = vmatprep.subr.mxu0 0.0
          %2900 = vmatpush2.msra.mxu0 0.0
          %2901 = vmatprep.subr.mxu0 0.0
          %2902 = vmatpush2.msra.mxu0 0.0
          %2903 = vmatprep.subr.mxu0 0.0
          %2904 = vmatpush2.msra.mxu0 0.0
          %2905 = vmatprep.subr.mxu0 0.0
          %2906 = vmatpush2.msra.mxu0 0.0
          %2907 = vmatprep.subr.mxu0 0.0
          %2908 = vmatpush2.msra.mxu0 0.0
          %2909 = vmatprep.subr.mxu0 0.0
          %2910 = vmatpush2.msra.mxu0 0.0
          %2911 = vmatprep.subr.mxu0 0.0
          %2912 = vmatpush2.msra.mxu0 0.0
          %2913 = vmatprep.subr.mxu0 0.0
          %2914 = vmatpush2.msra.mxu0 0.0
          %2915 = vmatprep.subr.mxu0 0.0
          %2916 = vmatpush2.msra.mxu0 0.0
          %2917 = vmatprep.subr.mxu0 0.0
          %2918 = vmatpush2.msra.mxu0 0.0
          %2919 = vmatprep.subr.mxu0 0.0
          %2920 = vmatpush2.msra.mxu0 0.0
          %2921 = vmatprep.subr.mxu0 0.0
          %2922 = vmatpush2.msra.mxu0 0.0
          %2923 = vmatprep.subr.mxu0 0.0
          %2924 = vmatpush2.msra.mxu0 0.0
          %2925 = vmatprep.mubr.f32.mxu0 0.0
          %2926 = vmatmul.mubr.f32.gmra.mxu0 %v2688
          %v2927 = vpop.f32.mrf.mxu0
          %v2928 = vadd.f32 %v1181, %v2927
          %v2929 = vpop.f32.mrf.mxu0
          %2930 = vdwg.mxu0
          %v2931 = vadd.f32 %v1219, %v2928
          %v2932 = vxor.u32 %v2931, 2147483648
          %v2933 = vmul.f32 %v2932, 1.442695
          %v2934 = vpow.pop %v2933
          %v2935 = vadd.f32 %v2934, 1.0
          %v2936 = vrcp.pop %v2935
          %v2937 = vmul.f32 1.0, %v2936
          %2939 = vrot.lane.b32.xlu0 %v2928, 64
          %v2940 = vpop.permute.xlu0 %2939
          %v2942 = vmul.f32 %v2937, %v2940
          %2944 = vrot.lane.b32.xlu0 %v2942, 64
          %v2945 = vpop.permute.xlu0 %2944
          %v2947 = vadd.f32 %v1219, %v2945
          %v2948 = vtanh.pop %v2947
          %v2949 = vsub.f32 1.0, %v2937
          %2951 = vrot.lane.b32.xlu0 %v2948, 96
          %v2952 = vpop.permute.xlu0 %2951
          %v2954 = vmul.f32 %v2949, %v2952
          %v2955 = vmul.f32 %v2937, %v2684
          %v2956 = vadd.f32 %v2954, %v2955
          %2958 = vrot.lane.b32.xlu0 %v2956, 96
          %v2959 = vpop.permute.xlu0 %2958
          %v2960 = vsel %vm1221, %v2959, 0
          %2962 = vmatprep.subr.mxu0 0.0
          %2963 = vmatpush1.msra.mxu0 0.0
          %2964 = vmatprep.subr.mxu0 0.0
          %2965 = vmatpush1.msra.mxu0 0.0
          %2966 = vmatprep.subr.mxu0 0.0
          %2967 = vmatpush1.msra.mxu0 0.0
          %2968 = vmatprep.subr.mxu0 0.0
          %2969 = vmatpush1.msra.mxu0 0.0
          %2970 = vmatprep.subr.mxu0 0.0
          %2971 = vmatpush1.msra.mxu0 0.0
          %2972 = vmatprep.subr.mxu0 0.0
          %2973 = vmatpush1.msra.mxu0 0.0
          %2974 = vmatprep.subr.mxu0 0.0
          %2975 = vmatpush1.msra.mxu0 0.0
          %2976 = vmatprep.subr.mxu0 0.0
          %2977 = vmatpush1.msra.mxu0 0.0
          %2978 = vmatprep.subr.mxu0 0.0
          %2979 = vmatpush1.msra.mxu0 0.0
          %2980 = vmatprep.subr.mxu0 0.0
          %2981 = vmatpush1.msra.mxu0 0.0
          %2982 = vmatprep.subr.mxu0 0.0
          %2983 = vmatpush1.msra.mxu0 0.0
          %2984 = vmatprep.subr.mxu0 0.0
          %2985 = vmatpush1.msra.mxu0 0.0
          %2986 = vmatprep.subr.mxu0 0.0
          %2987 = vmatpush1.msra.mxu0 %v1175
          %2988 = vmatprep.subr.mxu0 0.0
          %2989 = vmatpush1.msra.mxu0 %v1174
          %2990 = vmatprep.subr.mxu0 0.0
          %2991 = vmatpush1.msra.mxu0 %v1173
          %2992 = vmatprep.subr.mxu0 0.0
          %2993 = vmatpush1.msra.mxu0 %v1172
          %2994 = vmatprep.subr.mxu0 0.0
          %2995 = vmatpush2.msra.mxu0 0.0
          %2996 = vmatprep.subr.mxu0 0.0
          %2997 = vmatpush2.msra.mxu0 0.0
          %2998 = vmatprep.subr.mxu0 0.0
          %2999 = vmatpush2.msra.mxu0 0.0
          %3000 = vmatprep.subr.mxu0 0.0
          %3001 = vmatpush2.msra.mxu0 0.0
          %3002 = vmatprep.subr.mxu0 0.0
          %3003 = vmatpush2.msra.mxu0 0.0
          %3004 = vmatprep.subr.mxu0 0.0
          %3005 = vmatpush2.msra.mxu0 0.0
          %3006 = vmatprep.subr.mxu0 0.0
          %3007 = vmatpush2.msra.mxu0 0.0
          %3008 = vmatprep.subr.mxu0 0.0
          %3009 = vmatpush2.msra.mxu0 0.0
          %3010 = vmatprep.subr.mxu0 0.0
          %3011 = vmatpush2.msra.mxu0 0.0
          %3012 = vmatprep.subr.mxu0 0.0
          %3013 = vmatpush2.msra.mxu0 0.0
          %3014 = vmatprep.subr.mxu0 0.0
          %3015 = vmatpush2.msra.mxu0 0.0
          %3016 = vmatprep.subr.mxu0 0.0
          %3017 = vmatpush2.msra.mxu0 0.0
          %3018 = vmatprep.subr.mxu0 0.0
          %3019 = vmatpush2.msra.mxu0 0.0
          %3020 = vmatprep.subr.mxu0 0.0
          %3021 = vmatpush2.msra.mxu0 0.0
          %3022 = vmatprep.subr.mxu0 0.0
          %3023 = vmatpush2.msra.mxu0 0.0
          %3024 = vmatprep.subr.mxu0 0.0
          %3025 = vmatpush2.msra.mxu0 0.0
          %3026 = vmatprep.mubr.f32.mxu0 0.0
          %3027 = vmatmul.mubr.f32.gmra.mxu0 %v2960
          %v3028 = vpop.f32.mrf.mxu0
          %v3029 = vadd.f32 %v1197, %v3028
          %v3030 = vpop.f32.mrf.mxu0
          %3031 = vdwg.mxu0
          %3033 = vrot.lane.b32.xlu0 %v2860, 96
          %v3034 = vpop.permute.xlu0 %3033
          %v3035 = vsel %vm1221, %v3034, 0
          %3037 = vmatprep.subr.mxu0 0.0
          %3038 = vmatpush1.msra.mxu0 0.0
          %3039 = vmatprep.subr.mxu0 0.0
          %3040 = vmatpush1.msra.mxu0 0.0
          %3041 = vmatprep.subr.mxu0 0.0
          %3042 = vmatpush1.msra.mxu0 0.0
          %3043 = vmatprep.subr.mxu0 0.0
          %3044 = vmatpush1.msra.mxu0 0.0
          %3045 = vmatprep.subr.mxu0 0.0
          %3046 = vmatpush1.msra.mxu0 0.0
          %3047 = vmatprep.subr.mxu0 0.0
          %3048 = vmatpush1.msra.mxu0 0.0
          %3049 = vmatprep.subr.mxu0 0.0
          %3050 = vmatpush1.msra.mxu0 0.0
          %3051 = vmatprep.subr.mxu0 0.0
          %3052 = vmatpush1.msra.mxu0 0.0
          %3053 = vmatprep.subr.mxu0 0.0
          %3054 = vmatpush1.msra.mxu0 0.0
          %3055 = vmatprep.subr.mxu0 0.0
          %3056 = vmatpush1.msra.mxu0 0.0
          %3057 = vmatprep.subr.mxu0 0.0
          %3058 = vmatpush1.msra.mxu0 0.0
          %3059 = vmatprep.subr.mxu0 0.0
          %3060 = vmatpush1.msra.mxu0 0.0
          %3061 = vmatprep.subr.mxu0 0.0
          %3062 = vmatpush1.msra.mxu0 %v1171
          %3063 = vmatprep.subr.mxu0 0.0
          %3064 = vmatpush1.msra.mxu0 %v1170
          %3065 = vmatprep.subr.mxu0 0.0
          %3066 = vmatpush1.msra.mxu0 %v1169
          %3067 = vmatprep.subr.mxu0 0.0
          %3068 = vmatpush1.msra.mxu0 %v1168
          %3069 = vmatprep.subr.mxu0 0.0
          %3070 = vmatpush2.msra.mxu0 0.0
          %3071 = vmatprep.subr.mxu0 0.0
          %3072 = vmatpush2.msra.mxu0 0.0
          %3073 = vmatprep.subr.mxu0 0.0
          %3074 = vmatpush2.msra.mxu0 0.0
          %3075 = vmatprep.subr.mxu0 0.0
          %3076 = vmatpush2.msra.mxu0 0.0
          %3077 = vmatprep.subr.mxu0 0.0
          %3078 = vmatpush2.msra.mxu0 0.0
          %3079 = vmatprep.subr.mxu0 0.0
          %3080 = vmatpush2.msra.mxu0 0.0
          %3081 = vmatprep.subr.mxu0 0.0
          %3082 = vmatpush2.msra.mxu0 0.0
          %3083 = vmatprep.subr.mxu0 0.0
          %3084 = vmatpush2.msra.mxu0 0.0
          %3085 = vmatprep.subr.mxu0 0.0
          %3086 = vmatpush2.msra.mxu0 0.0
          %3087 = vmatprep.subr.mxu0 0.0
          %3088 = vmatpush2.msra.mxu0 0.0
          %3089 = vmatprep.subr.mxu0 0.0
          %3090 = vmatpush2.msra.mxu0 0.0
          %3091 = vmatprep.subr.mxu0 0.0
          %3092 = vmatpush2.msra.mxu0 0.0
          %3093 = vmatprep.subr.mxu0 0.0
          %3094 = vmatpush2.msra.mxu0 0.0
          %3095 = vmatprep.subr.mxu0 0.0
          %3096 = vmatpush2.msra.mxu0 0.0
          %3097 = vmatprep.subr.mxu0 0.0
          %3098 = vmatpush2.msra.mxu0 0.0
          %3099 = vmatprep.subr.mxu0 0.0
          %3100 = vmatpush2.msra.mxu0 0.0
          %3101 = vmatprep.mubr.f32.mxu0 0.0
          %3102 = vmatmul.mubr.f32.gmra.mxu0 %v3035
          %v3103 = vpop.f32.mrf.mxu0
          %v3104 = vadd.f32 %v1189, %v3103
          %v3105 = vpop.f32.mrf.mxu0
          %3106 = vdwg.mxu0
          %v3107 = vadd.f32 %v3029, %v3104
          %v3108 = vxor.u32 %v3107, 2147483648
          %v3109 = vmul.f32 %v3108, 1.442695
          %v3110 = vpow.pop %v3109
          %v3111 = vadd.f32 %v3110, 1.0
          %v3112 = vrcp.pop %v3111
          %v3113 = vmul.f32 1.0, %v3112
          %3115 = vrot.lane.b32.xlu0 %v3104, 64
          %v3116 = vpop.permute.xlu0 %3115
          %v3118 = vmul.f32 %v3113, %v3116
          %3120 = vrot.lane.b32.xlu0 %v3118, 64
          %v3121 = vpop.permute.xlu0 %3120
          %v3123 = vadd.f32 %v3029, %v3121
          %v3124 = vtanh.pop %v3123
          %v3125 = vsub.f32 1.0, %v3113
          %3127 = vrot.lane.b32.xlu0 %v3124, 96
          %v3128 = vpop.permute.xlu0 %3127
          %v3130 = vmul.f32 %v3125, %v3128
          %v3131 = vmul.f32 %v3113, %v2860
          %v3132 = vadd.f32 %v3130, %v3131
          %3133 = vmatprep.subr.mxu0 0.0
          %3134 = vmatpush1.msra.mxu0 0.0
          %3135 = vmatprep.subr.mxu0 0.0
          %3136 = vmatpush1.msra.mxu0 0.0
          %3137 = vmatprep.subr.mxu0 0.0
          %3138 = vmatpush1.msra.mxu0 0.0
          %3139 = vmatprep.subr.mxu0 0.0
          %3140 = vmatpush1.msra.mxu0 0.0
          %3141 = vmatprep.subr.mxu0 0.0
          %3142 = vmatpush1.msra.mxu0 0.0
          %3143 = vmatprep.subr.mxu0 0.0
          %3144 = vmatpush1.msra.mxu0 0.0
          %3145 = vmatprep.subr.mxu0 0.0
          %3146 = vmatpush1.msra.mxu0 0.0
          %3147 = vmatprep.subr.mxu0 0.0
          %3148 = vmatpush1.msra.mxu0 0.0
          %3149 = vmatprep.subr.mxu0 0.0
          %3150 = vmatpush1.msra.mxu0 0.0
          %3151 = vmatprep.subr.mxu0 0.0
          %3152 = vmatpush1.msra.mxu0 0.0
          %3153 = vmatprep.subr.mxu0 0.0
          %3154 = vmatpush1.msra.mxu0 0.0
          %3155 = vmatprep.subr.mxu0 0.0
          %3156 = vmatpush1.msra.mxu0 0.0
          %3157 = vmatprep.subr.mxu0 0.0
          %3158 = vmatpush1.msra.mxu0 %v1166
          %3159 = vmatprep.subr.mxu0 0.0
          %3160 = vmatpush1.msra.mxu0 %v1165
          %3161 = vmatprep.subr.mxu0 0.0
          %3162 = vmatpush1.msra.mxu0 %v1164
          %3163 = vmatprep.subr.mxu0 0.0
          %3164 = vmatpush1.msra.mxu0 %v1163
          %3165 = vmatprep.subr.mxu0 0.0
          %3166 = vmatpush2.msra.mxu0 0.0
          %3167 = vmatprep.subr.mxu0 0.0
          %3168 = vmatpush2.msra.mxu0 0.0
          %3169 = vmatprep.subr.mxu0 0.0
          %3170 = vmatpush2.msra.mxu0 0.0
          %3171 = vmatprep.subr.mxu0 0.0
          %3172 = vmatpush2.msra.mxu0 0.0
          %3173 = vmatprep.subr.mxu0 0.0
          %3174 = vmatpush2.msra.mxu0 0.0
          %3175 = vmatprep.subr.mxu0 0.0
          %3176 = vmatpush2.msra.mxu0 0.0
          %3177 = vmatprep.subr.mxu0 0.0
          %3178 = vmatpush2.msra.mxu0 0.0
          %3179 = vmatprep.subr.mxu0 0.0
          %3180 = vmatpush2.msra.mxu0 0.0
          %3181 = vmatprep.subr.mxu0 0.0
          %3182 = vmatpush2.msra.mxu0 0.0
          %3183 = vmatprep.subr.mxu0 0.0
          %3184 = vmatpush2.msra.mxu0 0.0
          %3185 = vmatprep.subr.mxu0 0.0
          %3186 = vmatpush2.msra.mxu0 0.0
          %3187 = vmatprep.subr.mxu0 0.0
          %3188 = vmatpush2.msra.mxu0 0.0
          %3189 = vmatprep.subr.mxu0 0.0
          %3190 = vmatpush2.msra.mxu0 0.0
          %3191 = vmatprep.subr.mxu0 0.0
          %3192 = vmatpush2.msra.mxu0 0.0
          %3193 = vmatprep.subr.mxu0 0.0
          %3194 = vmatpush2.msra.mxu0 0.0
          %3195 = vmatprep.subr.mxu0 0.0
          %3196 = vmatpush2.msra.mxu0 0.0
          %3197 = vmatprep.mubr.f32.mxu0 0.0
          %3198 = vmatmul.mubr.f32.gmra.mxu0 %v2960
          %v3199 = vpop.f32.mrf.mxu0
          %v3200 = vadd.f32 %v1181, %v3199
          %v3201 = vpop.f32.mrf.mxu0
          %3202 = vdwg.mxu0
          %v3203 = vadd.f32 %v1220, %v3200
          %v3204 = vxor.u32 %v3203, 2147483648
          %v3205 = vmul.f32 %v3204, 1.442695
          %v3206 = vpow.pop %v3205
          %v3207 = vadd.f32 %v3206, 1.0
          %v3208 = vrcp.pop %v3207
          %v3209 = vmul.f32 1.0, %v3208
          %3211 = vrot.lane.b32.xlu0 %v3200, 64
          %v3212 = vpop.permute.xlu0 %3211
          %v3214 = vmul.f32 %v3209, %v3212
          %3216 = vrot.lane.b32.xlu0 %v3214, 64
          %v3217 = vpop.permute.xlu0 %3216
          %v3219 = vadd.f32 %v1220, %v3217
          %v3220 = vtanh.pop %v3219
          %v3221 = vsub.f32 1.0, %v3209
          %3223 = vrot.lane.b32.xlu0 %v3220, 96
          %v3224 = vpop.permute.xlu0 %3223
          %v3226 = vmul.f32 %v3221, %v3224
          %v3227 = vmul.f32 %v3209, %v2956
          %v3228 = vadd.f32 %v3226, %v3227
          %3230 = vrot.lane.b32.xlu0 %v3228, 96
          %v3231 = vpop.permute.xlu0 %3230
          %v3232 = vsel %vm1221, %v3231, 0
          %3234 = vmatprep.subr.mxu0 0.0
          %3235 = vmatpush1.msra.mxu0 0.0
          %3236 = vmatprep.subr.mxu0 0.0
          %3237 = vmatpush1.msra.mxu0 0.0
          %3238 = vmatprep.subr.mxu0 0.0
          %3239 = vmatpush1.msra.mxu0 0.0
          %3240 = vmatprep.subr.mxu0 0.0
          %3241 = vmatpush1.msra.mxu0 0.0
          %3242 = vmatprep.subr.mxu0 0.0
          %3243 = vmatpush1.msra.mxu0 0.0
          %3244 = vmatprep.subr.mxu0 0.0
          %3245 = vmatpush1.msra.mxu0 0.0
          %3246 = vmatprep.subr.mxu0 0.0
          %3247 = vmatpush1.msra.mxu0 0.0
          %3248 = vmatprep.subr.mxu0 0.0
          %3249 = vmatpush1.msra.mxu0 0.0
          %3250 = vmatprep.subr.mxu0 0.0
          %3251 = vmatpush1.msra.mxu0 0.0
          %3252 = vmatprep.subr.mxu0 0.0
          %3253 = vmatpush1.msra.mxu0 0.0
          %3254 = vmatprep.subr.mxu0 0.0
          %3255 = vmatpush1.msra.mxu0 0.0
          %3256 = vmatprep.subr.mxu0 0.0
          %3257 = vmatpush1.msra.mxu0 0.0
          %3258 = vmatprep.subr.mxu0 0.0
          %3259 = vmatpush1.msra.mxu0 %v1175
          %3260 = vmatprep.subr.mxu0 0.0
          %3261 = vmatpush1.msra.mxu0 %v1174
          %3262 = vmatprep.subr.mxu0 0.0
          %3263 = vmatpush1.msra.mxu0 %v1173
          %3264 = vmatprep.subr.mxu0 0.0
          %3265 = vmatpush1.msra.mxu0 %v1172
          %3266 = vmatprep.subr.mxu0 0.0
          %3267 = vmatpush2.msra.mxu0 0.0
          %3268 = vmatprep.subr.mxu0 0.0
          %3269 = vmatpush2.msra.mxu0 0.0
          %3270 = vmatprep.subr.mxu0 0.0
          %3271 = vmatpush2.msra.mxu0 0.0
          %3272 = vmatprep.subr.mxu0 0.0
          %3273 = vmatpush2.msra.mxu0 0.0
          %3274 = vmatprep.subr.mxu0 0.0
          %3275 = vmatpush2.msra.mxu0 0.0
          %3276 = vmatprep.subr.mxu0 0.0
          %3277 = vmatpush2.msra.mxu0 0.0
          %3278 = vmatprep.subr.mxu0 0.0
          %3279 = vmatpush2.msra.mxu0 0.0
          %3280 = vmatprep.subr.mxu0 0.0
          %3281 = vmatpush2.msra.mxu0 0.0
          %3282 = vmatprep.subr.mxu0 0.0
          %3283 = vmatpush2.msra.mxu0 0.0
          %3284 = vmatprep.subr.mxu0 0.0
          %3285 = vmatpush2.msra.mxu0 0.0
          %3286 = vmatprep.subr.mxu0 0.0
          %3287 = vmatpush2.msra.mxu0 0.0
          %3288 = vmatprep.subr.mxu0 0.0
          %3289 = vmatpush2.msra.mxu0 0.0
          %3290 = vmatprep.subr.mxu0 0.0
          %3291 = vmatpush2.msra.mxu0 0.0
          %3292 = vmatprep.subr.mxu0 0.0
          %3293 = vmatpush2.msra.mxu0 0.0
          %3294 = vmatprep.subr.mxu0 0.0
          %3295 = vmatpush2.msra.mxu0 0.0
          %3296 = vmatprep.subr.mxu0 0.0
          %3297 = vmatpush2.msra.mxu0 0.0
          %3298 = vmatprep.mubr.f32.mxu0 0.0
          %3299 = vmatmul.mubr.f32.gmra.mxu0 %v3232
          %v3300 = vpop.f32.mrf.mxu0
          %v3301 = vadd.f32 %v1197, %v3300
          %v3302 = vpop.f32.mrf.mxu0
          %3303 = vdwg.mxu0
          %3305 = vrot.lane.b32.xlu0 %v3132, 96
          %v3306 = vpop.permute.xlu0 %3305
          %v3307 = vsel %vm1221, %v3306, 0
          %3309 = vmatprep.subr.mxu0 0.0
          %3310 = vmatpush1.msra.mxu0 0.0
          %3311 = vmatprep.subr.mxu0 0.0
          %3312 = vmatpush1.msra.mxu0 0.0
          %3313 = vmatprep.subr.mxu0 0.0
          %3314 = vmatpush1.msra.mxu0 0.0
          %3315 = vmatprep.subr.mxu0 0.0
          %3316 = vmatpush1.msra.mxu0 0.0
          %3317 = vmatprep.subr.mxu0 0.0
          %3318 = vmatpush1.msra.mxu0 0.0
          %3319 = vmatprep.subr.mxu0 0.0
          %3320 = vmatpush1.msra.mxu0 0.0
          %3321 = vmatprep.subr.mxu0 0.0
          %3322 = vmatpush1.msra.mxu0 0.0
          %3323 = vmatprep.subr.mxu0 0.0
          %3324 = vmatpush1.msra.mxu0 0.0
          %3325 = vmatprep.subr.mxu0 0.0
          %3326 = vmatpush1.msra.mxu0 0.0
          %3327 = vmatprep.subr.mxu0 0.0
          %3328 = vmatpush1.msra.mxu0 0.0
          %3329 = vmatprep.subr.mxu0 0.0
          %3330 = vmatpush1.msra.mxu0 0.0
          %3331 = vmatprep.subr.mxu0 0.0
          %3332 = vmatpush1.msra.mxu0 0.0
          %3333 = vmatprep.subr.mxu0 0.0
          %3334 = vmatpush1.msra.mxu0 %v1171
          %3335 = vmatprep.subr.mxu0 0.0
          %3336 = vmatpush1.msra.mxu0 %v1170
          %3337 = vmatprep.subr.mxu0 0.0
          %3338 = vmatpush1.msra.mxu0 %v1169
          %3339 = vmatprep.subr.mxu0 0.0
          %3340 = vmatpush1.msra.mxu0 %v1168
          %3341 = vmatprep.subr.mxu0 0.0
          %3342 = vmatpush2.msra.mxu0 0.0
          %3343 = vmatprep.subr.mxu0 0.0
          %3344 = vmatpush2.msra.mxu0 0.0
          %3345 = vmatprep.subr.mxu0 0.0
          %3346 = vmatpush2.msra.mxu0 0.0
          %3347 = vmatprep.subr.mxu0 0.0
          %3348 = vmatpush2.msra.mxu0 0.0
          %3349 = vmatprep.subr.mxu0 0.0
          %3350 = vmatpush2.msra.mxu0 0.0
          %3351 = vmatprep.subr.mxu0 0.0
          %3352 = vmatpush2.msra.mxu0 0.0
          %3353 = vmatprep.subr.mxu0 0.0
          %3354 = vmatpush2.msra.mxu0 0.0
          %3355 = vmatprep.subr.mxu0 0.0
          %3356 = vmatpush2.msra.mxu0 0.0
          %3357 = vmatprep.subr.mxu0 0.0
          %3358 = vmatpush2.msra.mxu0 0.0
          %3359 = vmatprep.subr.mxu0 0.0
          %3360 = vmatpush2.msra.mxu0 0.0
          %3361 = vmatprep.subr.mxu0 0.0
          %3362 = vmatpush2.msra.mxu0 0.0
          %3363 = vmatprep.subr.mxu0 0.0
          %3364 = vmatpush2.msra.mxu0 0.0
          %3365 = vmatprep.subr.mxu0 0.0
          %3366 = vmatpush2.msra.mxu0 0.0
          %3367 = vmatprep.subr.mxu0 0.0
          %3368 = vmatpush2.msra.mxu0 0.0
          %3369 = vmatprep.subr.mxu0 0.0
          %3370 = vmatpush2.msra.mxu0 0.0
          %3371 = vmatprep.subr.mxu0 0.0
          %3372 = vmatpush2.msra.mxu0 0.0
          %3373 = vmatprep.mubr.f32.mxu0 0.0
          %3374 = vmatmul.mubr.f32.gmra.mxu0 %v3307
          %v3375 = vpop.f32.mrf.mxu0
          %v3376 = vadd.f32 %v1189, %v3375
          %v3377 = vpop.f32.mrf.mxu0
          %3378 = vdwg.mxu0
          %v3379 = vadd.f32 %v3301, %v3376
          %v3380 = vxor.u32 %v3379, 2147483648
          %v3381 = vmul.f32 %v3380, 1.442695
          %v3382 = vpow.pop %v3381
          %v3383 = vadd.f32 %v3382, 1.0
          %v3384 = vrcp.pop %v3383
          %v3385 = vmul.f32 1.0, %v3384
          %3387 = vrot.lane.b32.xlu0 %v3376, 64
          %v3388 = vpop.permute.xlu0 %3387
          %v3390 = vmul.f32 %v3385, %v3388
          %3392 = vrot.lane.b32.xlu0 %v3390, 64
          %v3393 = vpop.permute.xlu0 %3392
          %v3395 = vadd.f32 %v3301, %v3393
          %v3396 = vtanh.pop %v3395
          %v3397 = vsub.f32 1.0, %v3385
          %3399 = vrot.lane.b32.xlu0 %v3396, 96
          %v3400 = vpop.permute.xlu0 %3399
          %v3402 = vmul.f32 %v3397, %v3400
          %v3403 = vmul.f32 %v3385, %v3132
          %v3404 = vadd.f32 %v3402, %v3403
          %3406 = vrot.lane.b32.xlu0 %v3404, 96
          %v3407 = vpop.permute.xlu0 %3406
          %s3416 = scalar_lea.vmem [#allocation4], %s1211
          %vm3417 = vcmask 254976
          %3418 = vst.msk [vmem:[%s3416] sm:$0x3] %vm3417, %v1674
          %3419 = vst.msk [vmem:[%s3416 + $0x2] sm:$0x3] %vm3417, %v1946
          %3420 = vst.msk [vmem:[%s3416 + $0x4] sm:$0x3] %vm3417, %v2218
          %3421 = vst.msk [vmem:[%s3416 + $0x6] sm:$0x3] %vm3417, %v2490
          %3422 = vst.msk [vmem:[%s3416 + $0x8] sm:$0x3] %vm3417, %v2762
          %3423 = vst.msk [vmem:[%s3416 + $0xa] sm:$0x3] %vm3417, %v3034
          %3424 = vst.msk [vmem:[%s3416 + $0xc] sm:$0x3] %vm3417, %v3306
          %3425 = vst.msk [vmem:[%s3416 + $0xe] sm:$0x3] %vm3417, %v3407
        $region93: #{tpu_custom_call.1} parent=63 // loop_footer
          %s1207 = sadd.s32 1, %s1203
        $region94: #{tpu_custom_call.1} parent=63 // loop_footer_branch
          %1202 = sbr.rel target = $region90
        $region95: #{tpu_custom_call.1} parent=63 // loop_exit
          _
        %vm3427 = vcmask 254976
        %3428 = vst.msk [vmem:[#allocation2] sm:$0x3] %vm3427, %v1208
        %3429 = vst.msk [vmem:[%s1200] sm:$0x3] %vm3427, %v1209
        %p3430 = scmp.eq.s32.totalorder %s38, 1
        // Predicated region
        $region96: #{tpu_custom_call.1} parent=63 // pred_check
          %p3431 = pneg %p3430
        $region97: #{tpu_custom_call.1} parent=63 // pred_check_branch
          %3433 = sbr.rel (%p3431) target = $region99
        $region98: #{tpu_custom_call.1} parent=63 // pred_region
          %v3434 = vld [vmem:[#allocation2] sm:$0x3]
          %v3435 = vld [vmem:[#allocation2 + $0x2] sm:$0x3]
          %3436 = vst.msk [vmem:[#allocation15] sm:$0x3] %vm3427, %v3434
          %3437 = vst.msk [vmem:[#allocation15 + $0x2] sm:$0x3] %vm3427, %v3435
        $region99: #{tpu_custom_call.1} parent=63 // pred_fallthru
          _
        %v3438 = vld [vmem:[#allocation4] sm:$0x3]
        %v3439 = vld [vmem:[#allocation4 + $0x2] sm:$0x3]
        %v3440 = vld [vmem:[#allocation4 + $0x4] sm:$0x3]
        %v3441 = vld [vmem:[#allocation4 + $0x6] sm:$0x3]
        %v3442 = vld [vmem:[#allocation4 + $0x8] sm:$0x3]
        %v3443 = vld [vmem:[#allocation4 + $0xa] sm:$0x3]
        %v3444 = vld [vmem:[#allocation4 + $0xc] sm:$0x3]
        %v3445 = vld [vmem:[#allocation4 + $0xe] sm:$0x3]
        %v3446 = vld [vmem:[#allocation4 + $0x10] sm:$0x3]
        %v3447 = vld [vmem:[#allocation4 + $0x12] sm:$0x3]
        %v3448 = vld [vmem:[#allocation4 + $0x14] sm:$0x3]
        %v3449 = vld [vmem:[#allocation4 + $0x16] sm:$0x3]
        %v3450 = vld [vmem:[#allocation4 + $0x18] sm:$0x3]
        %v3451 = vld [vmem:[#allocation4 + $0x1a] sm:$0x3]
        %v3452 = vld [vmem:[#allocation4 + $0x1c] sm:$0x3]
        %v3453 = vld [vmem:[#allocation4 + $0x1e] sm:$0x3]
        %v3454 = vld [vmem:[%s9] sm:$0xff]
        %v3455 = vld [vmem:[%s9 + $0x8] sm:$0xff]
        %v3456 = vld [vmem:[%s9 + $0x10] sm:$0xff]
        %v3457 = vld [vmem:[%s9 + $0x18] sm:$0xff]
        %v3458 = vld [vmem:[%s10] sm:$0x1]
        %v3460 = vlaneseq
        %v3461 = vshrl.u32 %v3460, 7
        %v3462 = vsub.s32 0, %v3461
        %v3463 = vrot.slane %v3458, %v3462
        %v3481 = vcombine.low %v3438, %v3439
        %v3482 = vcombine.low %v3440, %v3441
        %v3484 = vunpack.c.l.s4 1983009808
        %v3485 = vunpack.c.0.s8 %v3484
        %v3486 = vlaneseq
        %v3487 = vshrl.u32 %v3486, 7
        %v3488 = vsub.s32 %v3485, %v3487
        %v3489 = vrot.slane %v3481, %v3488
        %v3491 = vunpack.c.l.s4 1983009808
        %v3492 = vunpack.c.0.s8 %v3491
        %v3493 = vlaneseq
        %v3494 = vshrl.u32 %v3493, 7
        %v3495 = vsub.s32 %v3492, %v3494
        %v3496 = vrot.slane %v3482, %v3495
        %v3497 = vcombine.low %v3489, %v3496
        %v3498 = vcombine.low %v3442, %v3443
        %v3499 = vcombine.low %v3444, %v3445
        %v3501 = vunpack.c.l.s4 1983009808
        %v3502 = vunpack.c.0.s8 %v3501
        %v3503 = vlaneseq
        %v3504 = vshrl.u32 %v3503, 7
        %v3505 = vsub.s32 %v3502, %v3504
        %v3506 = vrot.slane %v3498, %v3505
        %v3508 = vunpack.c.l.s4 1983009808
        %v3509 = vunpack.c.0.s8 %v3508
        %v3510 = vlaneseq
        %v3511 = vshrl.u32 %v3510, 7
        %v3512 = vsub.s32 %v3509, %v3511
        %v3513 = vrot.slane %v3499, %v3512
        %v3514 = vcombine.low %v3506, %v3513
        %v3515 = vcombine.low %v3446, %v3447
        %v3516 = vcombine.low %v3448, %v3449
        %v3518 = vunpack.c.l.s4 1983009808
        %v3519 = vunpack.c.0.s8 %v3518
        %v3520 = vlaneseq
        %v3521 = vshrl.u32 %v3520, 7
        %v3522 = vsub.s32 %v3519, %v3521
        %v3523 = vrot.slane %v3515, %v3522
        %v3525 = vunpack.c.l.s4 1983009808
        %v3526 = vunpack.c.0.s8 %v3525
        %v3527 = vlaneseq
        %v3528 = vshrl.u32 %v3527, 7
        %v3529 = vsub.s32 %v3526, %v3528
        %v3530 = vrot.slane %v3516, %v3529
        %v3531 = vcombine.low %v3523, %v3530
        %v3532 = vcombine.low %v3450, %v3451
        %v3533 = vcombine.low %v3452, %v3453
        %v3535 = vunpack.c.l.s4 1983009808
        %v3536 = vunpack.c.0.s8 %v3535
        %v3537 = vlaneseq
        %v3538 = vshrl.u32 %v3537, 7
        %v3539 = vsub.s32 %v3536, %v3538
        %v3540 = vrot.slane %v3532, %v3539
        %v3542 = vunpack.c.l.s4 1983009808
        %v3543 = vunpack.c.0.s8 %v3542
        %v3544 = vlaneseq
        %v3545 = vshrl.u32 %v3544, 7
        %v3546 = vsub.s32 %v3543, %v3545
        %v3547 = vrot.slane %v3533, %v3546
        %v3548 = vcombine.low %v3540, %v3547
        %vm3549 = vcmask 261120
        %v3550 = vsel %vm3549, %v3497, 0
        %v3552 = vsel %vm3549, %v3514, 0
        %v3554 = vsel %vm3549, %v3531, 0
        %v3556 = vsel %vm3549, %v3548, 0
        %3558 = vmatprep.subr.mxu0 0.0
        %3559 = vmatpush1.msra.mxu0 0.0
        %3560 = vmatprep.subr.mxu0 0.0
        %3561 = vmatpush1.msra.mxu0 0.0
        %3562 = vmatprep.subr.mxu0 0.0
        %3563 = vmatpush1.msra.mxu0 0.0
        %3564 = vmatprep.subr.mxu0 0.0
        %3565 = vmatpush1.msra.mxu0 0.0
        %3566 = vmatprep.subr.mxu0 0.0
        %3567 = vmatpush1.msra.mxu0 0.0
        %3568 = vmatprep.subr.mxu0 0.0
        %3569 = vmatpush1.msra.mxu0 0.0
        %3570 = vmatprep.subr.mxu0 0.0
        %3571 = vmatpush1.msra.mxu0 0.0
        %3572 = vmatprep.subr.mxu0 0.0
        %3573 = vmatpush1.msra.mxu0 0.0
        %3574 = vmatprep.subr.mxu0 0.0
        %3575 = vmatpush1.msra.mxu0 0.0
        %3576 = vmatprep.subr.mxu0 0.0
        %3577 = vmatpush1.msra.mxu0 0.0
        %3578 = vmatprep.subr.mxu0 0.0
        %3579 = vmatpush1.msra.mxu0 0.0
        %3580 = vmatprep.subr.mxu0 0.0
        %3581 = vmatpush1.msra.mxu0 0.0
        %3582 = vmatprep.subr.mxu0 0.0
        %3583 = vmatpush1.msra.mxu0 %v3457
        %3584 = vmatprep.subr.mxu0 0.0
        %3585 = vmatpush1.msra.mxu0 %v3456
        %3586 = vmatprep.subr.mxu0 0.0
        %3587 = vmatpush1.msra.mxu0 %v3455
        %3588 = vmatprep.subr.mxu0 0.0
        %3589 = vmatpush1.msra.mxu0 %v3454
        %3590 = vmatprep.subr.mxu0 0.0
        %3591 = vmatpush2.msra.mxu0 0.0
        %3592 = vmatprep.subr.mxu0 0.0
        %3593 = vmatpush2.msra.mxu0 0.0
        %3594 = vmatprep.subr.mxu0 0.0
        %3595 = vmatpush2.msra.mxu0 0.0
        %3596 = vmatprep.subr.mxu0 0.0
        %3597 = vmatpush2.msra.mxu0 0.0
        %3598 = vmatprep.subr.mxu0 0.0
        %3599 = vmatpush2.msra.mxu0 0.0
        %3600 = vmatprep.subr.mxu0 0.0
        %3601 = vmatpush2.msra.mxu0 0.0
        %3602 = vmatprep.subr.mxu0 0.0
        %3603 = vmatpush2.msra.mxu0 0.0
        %3604 = vmatprep.subr.mxu0 0.0
        %3605 = vmatpush2.msra.mxu0 0.0
        %3606 = vmatprep.subr.mxu0 0.0
        %3607 = vmatpush2.msra.mxu0 0.0
        %3608 = vmatprep.subr.mxu0 0.0
        %3609 = vmatpush2.msra.mxu0 0.0
        %3610 = vmatprep.subr.mxu0 0.0
        %3611 = vmatpush2.msra.mxu0 0.0
        %3612 = vmatprep.subr.mxu0 0.0
        %3613 = vmatpush2.msra.mxu0 0.0
        %3614 = vmatprep.subr.mxu0 0.0
        %3615 = vmatpush2.msra.mxu0 0.0
        %3616 = vmatprep.subr.mxu0 0.0
        %3617 = vmatpush2.msra.mxu0 0.0
        %3618 = vmatprep.subr.mxu0 0.0
        %3619 = vmatpush2.msra.mxu0 0.0
        %3620 = vmatprep.subr.mxu0 0.0
        %3621 = vmatpush2.msra.mxu0 0.0
        %3622 = vmatprep.mubr.f32.mxu0 0.0
        %3623 = vmatmul.mubr.f32.gmra.mxu0 %v3550
        %v3624 = vpop.f32.mrf.mxu0
        %v3625 = vadd.f32 %v3463, %v3624
        %v3626 = vpop.f32.mrf.mxu0
        %3627 = vmatprep.mubr.f32.mxu0 0.0
        %3628 = vmatmul.mubr.f32.gmra.mxu0 %v3552
        %v3629 = vpop.f32.mrf.mxu0
        %v3630 = vadd.f32 %v3463, %v3629
        %v3631 = vpop.f32.mrf.mxu0
        %3632 = vmatprep.mubr.f32.mxu0 0.0
        %3633 = vmatmul.mubr.f32.gmra.mxu0 %v3554
        %v3634 = vpop.f32.mrf.mxu0
        %v3635 = vadd.f32 %v3463, %v3634
        %v3636 = vpop.f32.mrf.mxu0
        %3637 = vmatprep.mubr.f32.mxu0 0.0
        %3638 = vmatmul.mubr.f32.gmra.mxu0 %v3556
        %v3639 = vpop.f32.mrf.mxu0
        %v3640 = vadd.f32 %v3463, %v3639
        %v3641 = vpop.f32.mrf.mxu0
        %3642 = vdwg.mxu0
        %v3643 = vxor.u32 %v3625, 2147483648
        %v3644 = vxor.u32 %v3630, 2147483648
        %v3645 = vxor.u32 %v3635, 2147483648
        %v3646 = vxor.u32 %v3640, 2147483648
        %v3647 = vmul.f32 %v3643, 1.442695
        %v3648 = vpow.pop %v3647
        %v3649 = vmul.f32 %v3644, 1.442695
        %v3650 = vpow.pop %v3649
        %v3651 = vmul.f32 %v3645, 1.442695
        %v3652 = vpow.pop %v3651
        %v3653 = vmul.f32 %v3646, 1.442695
        %v3654 = vpow.pop %v3653
        %v3655 = vadd.f32 %v3648, 1.0
        %v3656 = vadd.f32 %v3650, 1.0
        %v3657 = vadd.f32 %v3652, 1.0
        %v3658 = vadd.f32 %v3654, 1.0
        %v3659 = vrcp.pop %v3655
        %v3660 = vmul.f32 1.0, %v3659
        %v3661 = vrcp.pop %v3656
        %v3662 = vmul.f32 1.0, %v3661
        %v3663 = vrcp.pop %v3657
        %v3664 = vmul.f32 1.0, %v3663
        %v3665 = vrcp.pop %v3658
        %v3666 = vmul.f32 1.0, %v3665
        %v3671 = vcombine.high %v3660, %v3660
        %v3673 = vunpack.c.l.s4 1983009808
        %v3674 = vunpack.c.0.s8 %v3673
        %v3675 = vlaneseq
        %v3676 = vshrl.u32 %v3675, 7
        %v3677 = vsub.s32 %v3674, %v3676
        %v3678 = vrot.slane %v3660, %v3677
        %v3680 = vunpack.c.l.s4 1983009808
        %v3681 = vunpack.c.0.s8 %v3680
        %v3682 = vlaneseq
        %v3683 = vshrl.u32 %v3682, 7
        %v3684 = vsub.s32 %v3681, %v3683
        %v3685 = vrot.slane %v3671, %v3684
        %v3686 = vcombine.high %v3678, %v3678
        %v3687 = vcombine.high %v3685, %v3685
        %v3688 = vcombine.high %v3662, %v3662
        %v3690 = vunpack.c.l.s4 1983009808
        %v3691 = vunpack.c.0.s8 %v3690
        %v3692 = vlaneseq
        %v3693 = vshrl.u32 %v3692, 7
        %v3694 = vsub.s32 %v3691, %v3693
        %v3695 = vrot.slane %v3662, %v3694
        %v3697 = vunpack.c.l.s4 1983009808
        %v3698 = vunpack.c.0.s8 %v3697
        %v3699 = vlaneseq
        %v3700 = vshrl.u32 %v3699, 7
        %v3701 = vsub.s32 %v3698, %v3700
        %v3702 = vrot.slane %v3688, %v3701
        %v3703 = vcombine.high %v3695, %v3695
        %v3704 = vcombine.high %v3702, %v3702
        %v3705 = vcombine.high %v3664, %v3664
        %v3707 = vunpack.c.l.s4 1983009808
        %v3708 = vunpack.c.0.s8 %v3707
        %v3709 = vlaneseq
        %v3710 = vshrl.u32 %v3709, 7
        %v3711 = vsub.s32 %v3708, %v3710
        %v3712 = vrot.slane %v3664, %v3711
        %v3714 = vunpack.c.l.s4 1983009808
        %v3715 = vunpack.c.0.s8 %v3714
        %v3716 = vlaneseq
        %v3717 = vshrl.u32 %v3716, 7
        %v3718 = vsub.s32 %v3715, %v3717
        %v3719 = vrot.slane %v3705, %v3718
        %v3720 = vcombine.high %v3712, %v3712
        %v3721 = vcombine.high %v3719, %v3719
        %v3722 = vcombine.high %v3666, %v3666
        %v3724 = vunpack.c.l.s4 1983009808
        %v3725 = vunpack.c.0.s8 %v3724
        %v3726 = vlaneseq
        %v3727 = vshrl.u32 %v3726, 7
        %v3728 = vsub.s32 %v3725, %v3727
        %v3729 = vrot.slane %v3666, %v3728
        %v3731 = vunpack.c.l.s4 1983009808
        %v3732 = vunpack.c.0.s8 %v3731
        %v3733 = vlaneseq
        %v3734 = vshrl.u32 %v3733, 7
        %v3735 = vsub.s32 %v3732, %v3734
        %v3736 = vrot.slane %v3722, %v3735
        %v3737 = vcombine.high %v3729, %v3729
        %v3738 = vcombine.high %v3736, %v3736
        %v3755 = vcombine.low %v3678, %v3686
        %v3757 = vunpack.c.l.s4 1934713408
        %v3758 = vunpack.c.0.s8 %v3757
        %v3759 = vlaneseq
        %v3760 = vshrl.u32 %v3759, 7
        %v3761 = vsub.s32 %v3758, %v3760
        %v3762 = vrot.slane %v3755, %v3761
        %v3763 = vcombine.high %v3762, 0.0
        %v3764 = vcombine.low %v3685, %v3687
        %v3766 = vunpack.c.l.s4 1934713408
        %v3767 = vunpack.c.0.s8 %v3766
        %v3768 = vlaneseq
        %v3769 = vshrl.u32 %v3768, 7
        %v3770 = vsub.s32 %v3767, %v3769
        %v3771 = vrot.slane %v3764, %v3770
        %v3772 = vcombine.high %v3771, 0.0
        %v3773 = vcombine.low %v3695, %v3703
        %v3775 = vunpack.c.l.s4 1934713408
        %v3776 = vunpack.c.0.s8 %v3775
        %v3777 = vlaneseq
        %v3778 = vshrl.u32 %v3777, 7
        %v3779 = vsub.s32 %v3776, %v3778
        %v3780 = vrot.slane %v3773, %v3779
        %v3781 = vcombine.high %v3780, 0.0
        %v3782 = vcombine.low %v3702, %v3704
        %v3784 = vunpack.c.l.s4 1934713408
        %v3785 = vunpack.c.0.s8 %v3784
        %v3786 = vlaneseq
        %v3787 = vshrl.u32 %v3786, 7
        %v3788 = vsub.s32 %v3785, %v3787
        %v3789 = vrot.slane %v3782, %v3788
        %v3790 = vcombine.high %v3789, 0.0
        %v3791 = vcombine.low %v3712, %v3720
        %v3793 = vunpack.c.l.s4 1934713408
        %v3794 = vunpack.c.0.s8 %v3793
        %v3795 = vlaneseq
        %v3796 = vshrl.u32 %v3795, 7
        %v3797 = vsub.s32 %v3794, %v3796
        %v3798 = vrot.slane %v3791, %v3797
        %v3799 = vcombine.high %v3798, 0.0
        %v3800 = vcombine.low %v3719, %v3721
        %v3802 = vunpack.c.l.s4 1934713408
        %v3803 = vunpack.c.0.s8 %v3802
        %v3804 = vlaneseq
        %v3805 = vshrl.u32 %v3804, 7
        %v3806 = vsub.s32 %v3803, %v3805
        %v3807 = vrot.slane %v3800, %v3806
        %v3808 = vcombine.high %v3807, 0.0
        %v3809 = vcombine.low %v3729, %v3737
        %v3811 = vunpack.c.l.s4 1934713408
        %v3812 = vunpack.c.0.s8 %v3811
        %v3813 = vlaneseq
        %v3814 = vshrl.u32 %v3813, 7
        %v3815 = vsub.s32 %v3812, %v3814
        %v3816 = vrot.slane %v3809, %v3815
        %v3817 = vcombine.high %v3816, 0.0
        %v3818 = vcombine.low %v3736, %v3738
        %v3820 = vunpack.c.l.s4 1934713408
        %v3821 = vunpack.c.0.s8 %v3820
        %v3822 = vlaneseq
        %v3823 = vshrl.u32 %v3822, 7
        %v3824 = vsub.s32 %v3821, %v3823
        %v3825 = vrot.slane %v3818, %v3824
        %v3826 = vcombine.high %v3825, 0.0
        %v3827 = vcombine.low %v3762, %v3763
        %v3829 = vunpack.c.l.s4 1934713408
        %v3830 = vunpack.c.0.s8 %v3829
        %v3831 = vlaneseq
        %v3832 = vshrl.u32 %v3831, 7
        %v3833 = vsub.s32 %v3830, %v3832
        %v3834 = vrot.slane %v3827, %v3833
        %v3835 = vcombine.high %v3834, 0.0
        %v3836 = vcombine.low %v3771, %v3772
        %v3838 = vunpack.c.l.s4 1934713408
        %v3839 = vunpack.c.0.s8 %v3838
        %v3840 = vlaneseq
        %v3841 = vshrl.u32 %v3840, 7
        %v3842 = vsub.s32 %v3839, %v3841
        %v3843 = vrot.slane %v3836, %v3842
        %v3844 = vcombine.high %v3843, 0.0
        %v3845 = vcombine.low %v3780, %v3781
        %v3847 = vunpack.c.l.s4 1934713408
        %v3848 = vunpack.c.0.s8 %v3847
        %v3849 = vlaneseq
        %v3850 = vshrl.u32 %v3849, 7
        %v3851 = vsub.s32 %v3848, %v3850
        %v3852 = vrot.slane %v3845, %v3851
        %v3853 = vcombine.high %v3852, 0.0
        %v3854 = vcombine.low %v3789, %v3790
        %v3856 = vunpack.c.l.s4 1934713408
        %v3857 = vunpack.c.0.s8 %v3856
        %v3858 = vlaneseq
        %v3859 = vshrl.u32 %v3858, 7
        %v3860 = vsub.s32 %v3857, %v3859
        %v3861 = vrot.slane %v3854, %v3860
        %v3862 = vcombine.high %v3861, 0.0
        %v3863 = vcombine.low %v3798, %v3799
        %v3865 = vunpack.c.l.s4 1934713408
        %v3866 = vunpack.c.0.s8 %v3865
        %v3867 = vlaneseq
        %v3868 = vshrl.u32 %v3867, 7
        %v3869 = vsub.s32 %v3866, %v3868
        %v3870 = vrot.slane %v3863, %v3869
        %v3871 = vcombine.high %v3870, 0.0
        %v3872 = vcombine.low %v3807, %v3808
        %v3874 = vunpack.c.l.s4 1934713408
        %v3875 = vunpack.c.0.s8 %v3874
        %v3876 = vlaneseq
        %v3877 = vshrl.u32 %v3876, 7
        %v3878 = vsub.s32 %v3875, %v3877
        %v3879 = vrot.slane %v3872, %v3878
        %v3880 = vcombine.high %v3879, 0.0
        %v3881 = vcombine.low %v3816, %v3817
        %v3883 = vunpack.c.l.s4 1934713408
        %v3884 = vunpack.c.0.s8 %v3883
        %v3885 = vlaneseq
        %v3886 = vshrl.u32 %v3885, 7
        %v3887 = vsub.s32 %v3884, %v3886
        %v3888 = vrot.slane %v3881, %v3887
        %v3889 = vcombine.high %v3888, 0.0
        %v3890 = vcombine.low %v3825, %v3826
        %v3892 = vunpack.c.l.s4 1934713408
        %v3893 = vunpack.c.0.s8 %v3892
        %v3894 = vlaneseq
        %v3895 = vshrl.u32 %v3894, 7
        %v3896 = vsub.s32 %v3893, %v3895
        %v3897 = vrot.slane %v3890, %v3896
        %v3898 = vcombine.high %v3897, 0.0
        %v3901 = vunpack.c.l.s4 1983009808
        %v3902 = vunpack.c.0.s8 %v3901
        %v3903 = vlaneseq
        %v3904 = vshrl.u32 %v3903, 7
        %v3905 = vsub.s32 %v3902, %v3904
        %v3906 = vrot.slane %v3835, %v3905
        %3907 = vrot.lane.b32.xlu0 %v3906, 8
        %v3908 = vpop.permute.xlu0 %3907
        %v3912 = vunpack.c.l.s4 1983009808
        %v3913 = vunpack.c.0.s8 %v3912
        %v3914 = vlaneseq
        %v3915 = vshrl.u32 %v3914, 7
        %v3916 = vsub.s32 %v3913, %v3915
        %v3917 = vrot.slane %v3843, %v3916
        %3918 = vrot.lane.b32.xlu0 %v3917, 16
        %v3919 = vpop.permute.xlu0 %3918
        %v3923 = vunpack.c.l.s4 1983009808
        %v3924 = vunpack.c.0.s8 %v3923
        %v3925 = vlaneseq
        %v3926 = vshrl.u32 %v3925, 7
        %v3927 = vsub.s32 %v3924, %v3926
        %v3928 = vrot.slane %v3844, %v3927
        %3929 = vrot.lane.b32.xlu0 %v3928, 24
        %v3930 = vpop.permute.xlu0 %3929
        %v3934 = vunpack.c.l.s4 1983009808
        %v3935 = vunpack.c.0.s8 %v3934
        %v3936 = vlaneseq
        %v3937 = vshrl.u32 %v3936, 7
        %v3938 = vsub.s32 %v3935, %v3937
        %v3939 = vrot.slane %v3852, %v3938
        %3940 = vrot.lane.b32.xlu0 %v3939, 32
        %v3941 = vpop.permute.xlu0 %3940
        %v3945 = vunpack.c.l.s4 1983009808
        %v3946 = vunpack.c.0.s8 %v3945
        %v3947 = vlaneseq
        %v3948 = vshrl.u32 %v3947, 7
        %v3949 = vsub.s32 %v3946, %v3948
        %v3950 = vrot.slane %v3853, %v3949
        %3951 = vrot.lane.b32.xlu0 %v3950, 40
        %v3952 = vpop.permute.xlu0 %3951
        %v3956 = vunpack.c.l.s4 1983009808
        %v3957 = vunpack.c.0.s8 %v3956
        %v3958 = vlaneseq
        %v3959 = vshrl.u32 %v3958, 7
        %v3960 = vsub.s32 %v3957, %v3959
        %v3961 = vrot.slane %v3861, %v3960
        %3962 = vrot.lane.b32.xlu0 %v3961, 48
        %v3963 = vpop.permute.xlu0 %3962
        %v3967 = vunpack.c.l.s4 1983009808
        %v3968 = vunpack.c.0.s8 %v3967
        %v3969 = vlaneseq
        %v3970 = vshrl.u32 %v3969, 7
        %v3971 = vsub.s32 %v3968, %v3970
        %v3972 = vrot.slane %v3862, %v3971
        %3973 = vrot.lane.b32.xlu0 %v3972, 56
        %v3974 = vpop.permute.xlu0 %3973
        %v3978 = vunpack.c.l.s4 1983009808
        %v3979 = vunpack.c.0.s8 %v3978
        %v3980 = vlaneseq
        %v3981 = vshrl.u32 %v3980, 7
        %v3982 = vsub.s32 %v3979, %v3981
        %v3983 = vrot.slane %v3870, %v3982
        %3984 = vrot.lane.b32.xlu0 %v3983, 64
        %v3985 = vpop.permute.xlu0 %3984
        %v3989 = vunpack.c.l.s4 1983009808
        %v3990 = vunpack.c.0.s8 %v3989
        %v3991 = vlaneseq
        %v3992 = vshrl.u32 %v3991, 7
        %v3993 = vsub.s32 %v3990, %v3992
        %v3994 = vrot.slane %v3871, %v3993
        %3995 = vrot.lane.b32.xlu0 %v3994, 72
        %v3996 = vpop.permute.xlu0 %3995
        %v4000 = vunpack.c.l.s4 1983009808
        %v4001 = vunpack.c.0.s8 %v4000
        %v4002 = vlaneseq
        %v4003 = vshrl.u32 %v4002, 7
        %v4004 = vsub.s32 %v4001, %v4003
        %v4005 = vrot.slane %v3879, %v4004
        %4006 = vrot.lane.b32.xlu0 %v4005, 80
        %v4007 = vpop.permute.xlu0 %4006
        %v4011 = vunpack.c.l.s4 1983009808
        %v4012 = vunpack.c.0.s8 %v4011
        %v4013 = vlaneseq
        %v4014 = vshrl.u32 %v4013, 7
        %v4015 = vsub.s32 %v4012, %v4014
        %v4016 = vrot.slane %v3880, %v4015
        %4017 = vrot.lane.b32.xlu0 %v4016, 88
        %v4018 = vpop.permute.xlu0 %4017
        %v4022 = vunpack.c.l.s4 1983009808
        %v4023 = vunpack.c.0.s8 %v4022
        %v4024 = vlaneseq
        %v4025 = vshrl.u32 %v4024, 7
        %v4026 = vsub.s32 %v4023, %v4025
        %v4027 = vrot.slane %v3888, %v4026
        %4028 = vrot.lane.b32.xlu0 %v4027, 96
        %v4029 = vpop.permute.xlu0 %4028
        %v4033 = vunpack.c.l.s4 1983009808
        %v4034 = vunpack.c.0.s8 %v4033
        %v4035 = vlaneseq
        %v4036 = vshrl.u32 %v4035, 7
        %v4037 = vsub.s32 %v4034, %v4036
        %v4038 = vrot.slane %v3889, %v4037
        %4039 = vrot.lane.b32.xlu0 %v4038, 104
        %v4040 = vpop.permute.xlu0 %4039
        %v4044 = vunpack.c.l.s4 1983009808
        %v4045 = vunpack.c.0.s8 %v4044
        %v4046 = vlaneseq
        %v4047 = vshrl.u32 %v4046, 7
        %v4048 = vsub.s32 %v4045, %v4047
        %v4049 = vrot.slane %v3897, %v4048
        %4050 = vrot.lane.b32.xlu0 %v4049, 112
        %v4051 = vpop.permute.xlu0 %4050
        %v4055 = vunpack.c.l.s4 1983009808
        %v4056 = vunpack.c.0.s8 %v4055
        %v4057 = vlaneseq
        %v4058 = vshrl.u32 %v4057, 7
        %v4059 = vsub.s32 %v4056, %v4058
        %v4060 = vrot.slane %v3898, %v4059
        %4061 = vrot.lane.b32.xlu0 %v4060, 120
        %v4062 = vpop.permute.xlu0 %4061
        %v4064 = vsel %vm964, %v3834, %v3908
        %vm4065 = vcmask 130048
        %v4066 = vsel %vm4065, %v4064, %v3919
        %vm4067 = vcmask 195584
        %v4068 = vsel %vm4067, %v4066, %v3930
        %v4069 = vsel %vm3549, %v4068, %v3941
        %vm4070 = vcmask 326656
        %v4071 = vsel %vm4070, %v4069, %v3952
        %vm4072 = vcmask 392192
        %v4073 = vsel %vm4072, %v4071, %v3963
        %vm4074 = vcmask 457728
        %v4075 = vsel %vm4074, %v4073, %v3974
        %vm4076 = vcmask 523264
        %v4077 = vsel %vm4076, %v4075, %v3985
        %vm4078 = vcmask 588800
        %v4079 = vsel %vm4078, %v4077, %v3996
        %vm4080 = vcmask 654336
        %v4081 = vsel %vm4080, %v4079, %v4007
        %vm4082 = vcmask 719872
        %v4083 = vsel %vm4082, %v4081, %v4018
        %vm4084 = vcmask 785408
        %v4085 = vsel %vm4084, %v4083, %v4029
        %vm4086 = vcmask 850944
        %v4087 = vsel %vm4086, %v4085, %v4040
        %vm4088 = vcmask 916480
        %v4089 = vsel %vm4088, %v4087, %v4051
        %vm4090 = vcmask 982016
        %v4091 = vsel %vm4090, %v4089, %v4062
        %v4092 = vld [vmem:[%s569] sm:$0x3]
        %v4093 = vld [vmem:[%s577] sm:$0x3]
        %v4094 = vmul.f32 %v4093, %v4092
        %v4095 = vsub.f32 1.0, %v4093
        %v4096 = vmul.f32 %v4095, %v4091
        %v4097 = vadd.f32 %v4094, %v4096
        %4098 = vst [vmem:[%s559] sm:$0x3] %v4097
        %s4099 = sand.u32 %s312, 1
        %s4100 = scalar_lea.sflag [#allocation7], %s4099
        %s4101 = sand.u32 %s312, 1
        %s4102 = smul.addr %s4101, 2
        %s4103 = scalar_lea.vmem [#allocation14], %s4102
        // Predicated region
        $region100: #{tpu_custom_call.1} parent=63 // pred_check
          %p4104 = pneg %p322
        $region101: #{tpu_custom_call.1} parent=63 // pred_check_branch
          %4106 = sbr.rel (%p4104) target = $region103
        $region102: #{tpu_custom_call.1} parent=63 // pred_region
          %s4108 = ssub.s32 32, 32
          %4109 = vsyncadd %s4100, %s4108
          %s4110 = smul.addr %s37, 2
          %s4111 = sadd.s32 %s38, %s4110
          %s4112 = smul.addr %s4111, 32
          %s4113 = scalar_lea.hbm %s11, %s4112
          %s4115 = sshll.u32 %s4103, 4
          %s4116 = int_to_ptr.vmem [resolvable:$true] %s4115
          %4118 = dma.vmem_to_hbm [thread:$0]  %s4116, 32, %s4113, %s4100
        $region103: #{tpu_custom_call.1} parent=63 // pred_fallthru
          _
        // Predicated region
        $region104: #{tpu_custom_call.1} parent=63 // pred_check
          %p4119 = pneg %p348
        $region105: #{tpu_custom_call.1} parent=63 // pred_check_branch
          %4121 = sbr.rel (%p4119) target = $region107
        $region106: #{tpu_custom_call.1} parent=63 // pred_region
          %s4123 = ssub.s32 64, 64
          %4124 = vsyncadd [#allocation16], %s4123
          %s4125 = smul.addr %s37, 32
          %s4126 = scalar_lea.hbm %s12, %s4125
          %s4127 = sshll.u32 [#allocation15], 4
          %s4128 = int_to_ptr.vmem [resolvable:$true] %s4127
          %4133 = dma.vmem_to_hbm [thread:$0]  %s4128, 64, %s4126, [#allocation16], 32, 32, 2
        $region107: #{tpu_custom_call.1} parent=63 // pred_fallthru
          _
        // Predicated region
        $region108: #{tpu_custom_call.1} parent=63 // pred_check
          %p4134 = pneg %p348
        $region109: #{tpu_custom_call.1} parent=63 // pred_check_branch
          %4136 = sbr.rel (%p4134) target = $region111
        $region110: #{tpu_custom_call.1} parent=63 // pred_region
          %4137 = dma.done [#allocation16], 64
        $region111: #{tpu_custom_call.1} parent=63 // pred_fallthru
          _
      $region64: #{tpu_custom_call.1} parent=5 // pred_fallthru
        _
      %p4138 = scmp.le.s32.totalorder 2, %s28
      // Predicated region
      $region112: #{tpu_custom_call.1} parent=5 // pred_check
        %p4139 = pneg %p4138
      $region113: #{tpu_custom_call.1} parent=5 // pred_check_branch
        %4141 = sbr.rel (%p4139) target = $region115
      $region114: #{tpu_custom_call.1} parent=5 // pred_region
        %s4142 = ssub.s32 %s28, 2
        // Predicated region
        $region116: #{tpu_custom_call.1} parent=114 // pred_check
          %p4143 = pneg %p328
        $region117: #{tpu_custom_call.1} parent=114 // pred_check_branch
          %4145 = sbr.rel (%p4143) target = $region119
        $region118: #{tpu_custom_call.1} parent=114 // pred_region
          %s4146 = sand.u32 %s313, 1
          %s4147 = scalar_lea.sflag [#allocation7], %s4146
          %s4148 = sand.u32 %s313, 1
          %s4149 = smul.addr %s4148, 2
          %s4150 = scalar_lea.vmem [#allocation14], %s4149
          %4151 = dma.done %s4147, 32
        $region119: #{tpu_custom_call.1} parent=114 // pred_fallthru
          _
      $region115: #{tpu_custom_call.1} parent=5 // pred_fallthru
        _
    $region6: #{tpu_custom_call.1} parent=1 // loop_footer
      %s32 = sadd.s32 1, %s28
    $region7: #{tpu_custom_call.1} parent=1 // loop_footer_branch
      %27 = sbr.rel target = $region3
    $region8: #{tpu_custom_call.1} parent=1 // loop_exit
      _
    %4152 = vsyncpa [#allocation6], 1
    %s4153 = scalar_lea.sflag [#allocation6], 1
    %4154 = vsyncpa %s4153, 1
    %4155 = vsyncpa [#allocation9], 1
    %4156 = vsyncpa [#allocation12], 1
    %4157 = vsyncpa [#allocation7], 1
    %s4158 = scalar_lea.sflag [#allocation7], 1
    %4159 = vsyncpa %s4158, 1
    %4160 = vsyncpa [#allocation16], 1

</llo_original>
